<compile_context>
chip_gen: v5e
topology: v5e:2x2
jax: 0.10.0
libtpu: 0.0.40
codegen_flags: <defaults>
</compile_context>

<pallas_src>
import functools

import jax
import jax.numpy as jnp
from jax import lax
from jax.experimental import pallas as pl
from jax.experimental.pallas import tpu as pltpu


# ---------------------------------------------------------------------------
# Pallas kernel: one bidirectional LSTM layer.  grid=(2,): 0 = fwd, 1 = bwd.
# ---------------------------------------------------------------------------
def _bilstm_layer_kernel(x_ref, h0_ref, c0_ref, wih_ref, whh_ref, b_ref,
                         y_ref, hn_ref, cn_ref, gx_ref,
                         *, seq_len, batch_pad, hidden_size):
    """Shapes seen by the kernel (direction dim squeezed by BlockSpec):
      x_ref   : (S, T*Bp, F)  stacked input sections (S=1 layer 0; S=2 after:
                              section 0 = fwd half, section 1 = bwd half)
      h0/c0   : (Bp, H)
      wih_ref : (S, F, 4H)    pre-transposed input weights per section
      whh_ref : (H, 4H)       pre-transposed recurrent weights
      b_ref   : (1, 4H)       b_ih + b_hh
      y_ref   : (T*Bp, H)     this direction's output, time-major rows
      gx_ref  : (T*Bp, 4H)    VMEM scratch: hoisted input projection
    """
    T, Bp, H = seq_len, batch_pad, hidden_size
    S = x_ref.shape[0]
    d = pl.program_id(0)                      # 0 = forward, 1 = backward

    # ---- Hoisted input projection: one large MXU matmul per section, plus a
    # single bias add, all outside the sequential recurrence. ----------------
    gx = jnp.dot(x_ref[0], wih_ref[0], preferred_element_type=jnp.float32)
    for s in range(1, S):                      # static tiny loop (S in {1, 2})
        gx = gx + jnp.dot(x_ref[s], wih_ref[s],
                          preferred_element_type=jnp.float32)
    gx_ref[...] = gx + b_ref[...]

    w_hh = whh_ref[...]                        # (H, 4H), loaded once

    def step(t, carry):
        h, c = carry
        t_idx = jnp.where(d == 0, t, T - 1 - t)        # in-kernel reversal
        row = pl.multiple_of(t_idx * Bp, Bp)           # 8-aligned row block
        gates = gx_ref[pl.ds(row, Bp), :] + jnp.dot(
            h, w_hh, preferred_element_type=jnp.float32)   # (Bp, 4H)
        # PyTorch gate order: input, forget, cell(g), output
        i = jax.nn.sigmoid(gates[:, 0 * H:1 * H])
        f = jax.nn.sigmoid(gates[:, 1 * H:2 * H])
        g = jnp.tanh(gates[:, 2 * H:3 * H])
        o = jax.nn.sigmoid(gates[:, 3 * H:4 * H])
        c_new = f * c + i * g
        h_new = o * jnp.tanh(c_new)
        y_ref[pl.ds(row, Bp), :] = h_new
        return h_new, c_new

    h_fin, c_fin = lax.fori_loop(0, T, step, (h0_ref[...], c0_ref[...]),
                                 unroll=True)
    hn_ref[...] = h_fin
    cn_ref[...] = c_fin


def bilstm_layer(x, h0, c0, w_ih, w_hh, b, *, seq_len, batch_pad):
    """One bidirectional LSTM layer.

    x    : (S, T*Bp, F)       stacked input sections
    h0,c0: (2, Bp, H)         per-direction initial states
    w_ih : (2, S, F, 4H)      pre-transposed, per direction / section
    w_hh : (2, H, 4H)         pre-transposed
    b    : (2, 1, 4H)         b_ih + b_hh
    Returns (y (2, T*Bp, H), h_n (2, Bp, H), c_n (2, Bp, H)).
    """
    S, TB, F = x.shape
    H = w_hh.shape[1]
    kernel = functools.partial(_bilstm_layer_kernel, seq_len=seq_len,
                               batch_pad=batch_pad, hidden_size=H)

    in_specs = [
        pl.BlockSpec((S, TB, F), lambda d: (0, 0, 0)),              # x (shared)
        pl.BlockSpec((None, batch_pad, H), lambda d: (d, 0, 0)),    # h0
        pl.BlockSpec((None, batch_pad, H), lambda d: (d, 0, 0)),    # c0
        pl.BlockSpec((None, S, F, 4 * H), lambda d: (d, 0, 0, 0)),  # w_ih
        pl.BlockSpec((None, H, 4 * H), lambda d: (d, 0, 0)),        # w_hh
        pl.BlockSpec((None, 1, 4 * H), lambda d: (d, 0, 0)),        # b
    ]
    out_specs = (
        pl.BlockSpec((None, TB, H), lambda d: (d, 0, 0)),           # y
        pl.BlockSpec((None, batch_pad, H), lambda d: (d, 0, 0)),    # h_n
        pl.BlockSpec((None, batch_pad, H), lambda d: (d, 0, 0)),    # c_n
    )
    out_shapes = (
        jax.ShapeDtypeStruct((2, TB, H), jnp.float32),
        jax.ShapeDtypeStruct((2, batch_pad, H), jnp.float32),
        jax.ShapeDtypeStruct((2, batch_pad, H), jnp.float32),
    )
    return pl.pallas_call(
        kernel,
        grid=(2,),
        in_specs=in_specs,
        out_specs=out_specs,
        out_shape=out_shapes,
        scratch_shapes=[pltpu.VMEM((TB, 4 * H), jnp.float32)],
        compiler_params=pltpu.CompilerParams(
            dimension_semantics=("parallel",),       # fwd/bwd -> 2 TCs on v7x
            vmem_limit_bytes=32 * 1024 * 1024,
        ),
    )(x, h0, c0, w_ih, w_hh, b)


# ---------------------------------------------------------------------------
# Parameter initialization (PyTorch-like init; weights stored pre-transposed
# and stacked per direction so the forward pass does no transposes).
# ---------------------------------------------------------------------------
def init_encoder_params(key, vocab_size, embedding_size, hidden_size, num_layers):
    params = {}
    key, k_emb = jax.random.split(key)
    params["embedding"] = jax.random.normal(
        k_emb, (vocab_size, embedding_size), jnp.float32)

    H = hidden_size
    bound = 1.0 / float(H) ** 0.5
    layers = []
    for layer in range(num_layers):
        if layer == 0:
            S, F = 1, embedding_size
        else:
            S, F = 2, hidden_size             # input = [fwd half, bwd half]
        wih_dirs, whh_dirs, b_dirs = [], [], []
        for _d in range(2):                   # forward, reverse
            key, k1, k2, k3, k4 = jax.random.split(key, 5)
            w_ih = jax.random.uniform(k1, (4 * H, S * F), jnp.float32, -bound, bound)
            w_hh = jax.random.uniform(k2, (4 * H, H), jnp.float32, -bound, bound)
            b_ih = jax.random.uniform(k3, (4 * H,), jnp.float32, -bound, bound)
            b_hh = jax.random.uniform(k4, (4 * H,), jnp.float32, -bound, bound)
            wih_dirs.append(w_ih.T.reshape(S, F, 4 * H))   # pre-transposed/split
            whh_dirs.append(w_hh.T)                        # (H, 4H)
            b_dirs.append((b_ih + b_hh).reshape(1, 4 * H)) # folded biases
        layers.append({
            "w_ih": jnp.stack(wih_dirs),   # (2, S, F, 4H)
            "w_hh": jnp.stack(whh_dirs),   # (2, H, 4H)
            "b":    jnp.stack(b_dirs),     # (2, 1, 4H)
        })
    params["lstm"] = layers
    return params


# ---------------------------------------------------------------------------
# Encoder forward (mirrors Encoder.forward semantics in eval mode).
# ---------------------------------------------------------------------------
def encoder_forward(params, tokens, hidden, *, num_layers):
    h0, c0 = hidden                               # each (2*num_layers, B, H)
    T, B = tokens.shape
    H = h0.shape[-1]
    Bp = ((B + 7) // 8) * 8                       # pad batch to sublane count
    pad = Bp - B

    emb = params["embedding"][tokens]             # (T, B, E) — gather glue
    if pad:
        emb = jnp.pad(emb, ((0, 0), (0, pad), (0, 0)))
        h0 = jnp.pad(h0, ((0, 0), (0, pad), (0, 0)))
        c0 = jnp.pad(c0, ((0, 0), (0, pad), (0, 0)))

    x = emb.reshape(1, T * Bp, emb.shape[-1])     # (S=1, T*Bp, E), free reshape

    h_parts, c_parts = [], []
    for layer in range(num_layers):
        p = params["lstm"][layer]
        y, hn, cn = bilstm_layer(
            x,
            h0[2 * layer:2 * layer + 2], c0[2 * layer:2 * layer + 2],
            p["w_ih"], p["w_hh"], p["b"],
            seq_len=T, batch_pad=Bp)
        h_parts.append(hn[:, :B])
        c_parts.append(cn[:, :B])
        x = y                                     # (2, T*Bp, H): fed directly,
        #                                           no HBM concat / reversal
        # TODO(synk): nn.LSTM inter-layer dropout (p=0.5) is train-mode only;
        # eval semantics (identity) are reproduced here.

    y4 = x.reshape(2, T, Bp, H)[:, :, :B]                 # (2, T, B, H)
    output = jnp.concatenate([y4[0], y4[1]], axis=-1)     # (T, B, 2H)
    h_n = jnp.concatenate(h_parts, axis=0)                # (2L, B, H)
    c_n = jnp.concatenate(c_parts, axis=0)
    return output, (h_n, c_n)


# ---------------------------------------------------------------------------
if __name__ == "__main__":
    VOCAB = 50
    EMBED = 32
    HIDDEN = 32
    NUM_LAYERS = 2
    T, B = 8, 2

    key = jax.random.PRNGKey(0)
    key, k_tok, k_par = jax.random.split(key, 3)

    params = init_encoder_params(k_par, VOCAB, EMBED, HIDDEN, NUM_LAYERS)
    tokens = jax.random.randint(k_tok, (T, B), 0, VOCAB, dtype=jnp.int32)
    h_0 = jnp.zeros((2 * NUM_LAYERS, B, HIDDEN), jnp.float32)
    c_0 = jnp.zeros((2 * NUM_LAYERS, B, HIDDEN), jnp.float32)

    fwd = jax.jit(functools.partial(encoder_forward, num_layers=NUM_LAYERS))
    output, (h_n, c_n) = fwd(params, tokens, (h_0, c_0))

    jax.block_until_ready((output, h_n, c_n))
    assert output.shape == (T, B, 2 * HIDDEN)
    assert h_n.shape == (2 * NUM_LAYERS, B, HIDDEN)
    assert c_n.shape == (2 * NUM_LAYERS, B, HIDDEN)
    assert bool(jnp.all(jnp.isfinite(output)))
    print("KERNEL_OK")
</pallas_src>

<mosaic_0001>
module attributes {stable_mosaic.version = 11 : i64} {
  func.func @_bilstm_layer_kernel(%arg0: i32, %arg1: memref<2x64x32xf32, #tpu.memory_space<vmem>>, %arg2: memref<1x8x32xf32, #tpu.memory_space<vmem>>, %arg3: memref<1x8x32xf32, #tpu.memory_space<vmem>>, %arg4: memref<1x2x32x128xf32, #tpu.memory_space<vmem>>, %arg5: memref<1x32x128xf32, #tpu.memory_space<vmem>>, %arg6: memref<1x1x128xf32, #tpu.memory_space<vmem>>, %arg7: memref<1x64x32xf32, #tpu.memory_space<vmem>>, %arg8: memref<1x8x32xf32, #tpu.memory_space<vmem>>, %arg9: memref<1x8x32xf32, #tpu.memory_space<vmem>>, %arg10: memref<64x128xf32, #tpu.memory_space<vmem>>) attributes {dimension_semantics = [#tpu.dimension_semantics<parallel>], iteration_bounds = array<i64: 2>, scalar_prefetch = 0 : i64, scratch_operands = 1 : i64, tpu.core_type = #tpu.core_type<tc>, window_params = [{pipeline_mode = #tpu.pipeline_mode<synchronous>, transform_indices = @transform_0, window_bounds = array<i64: 2, 64, 32>}, {transform_indices = @transform_1, window_bounds = array<i64: 1, 8, 32>}, {transform_indices = @transform_2, window_bounds = array<i64: 1, 8, 32>}, {transform_indices = @transform_3, window_bounds = array<i64: 1, 2, 32, 128>}, {transform_indices = @transform_4, window_bounds = array<i64: 1, 32, 128>}, {transform_indices = @transform_5, window_bounds = array<i64: 1, 1, 128>}, {transform_indices = @transform_6, window_bounds = array<i64: 1, 64, 32>}, {transform_indices = @transform_7, window_bounds = array<i64: 1, 8, 32>}, {transform_indices = @transform_8, window_bounds = array<i64: 1, 8, 32>}]} {
    %c0 = arith.constant 0 : index
    %c0_0 = arith.constant 0 : index
    %c0_1 = arith.constant 0 : index
    %0 = vector.load %arg1[%c0, %c0_0, %c0_1] : memref<2x64x32xf32, #tpu.memory_space<vmem>>, vector<1x64x32xf32>
    %1 = vector.shape_cast %0 : vector<1x64x32xf32> to vector<64x32xf32>
    %c0_2 = arith.constant 0 : index
    %c0_3 = arith.constant 0 : index
    %c0_4 = arith.constant 0 : index
    %c0_5 = arith.constant 0 : index
    %2 = vector.load %arg4[%c0_2, %c0_3, %c0_4, %c0_5] : memref<1x2x32x128xf32, #tpu.memory_space<vmem>>, vector<1x1x32x128xf32>
    %3 = vector.shape_cast %2 : vector<1x1x32x128xf32> to vector<32x128xf32>
    %cst = arith.constant dense<0.000000e+00> : vector<64x128xf32>
    %4 = tpu.matmul %1, %3, %cst {dimension_numbers = #tpu.dot_dimension_numbers<[1], [0], [0], [1], [0, 0, 1, 1], [], []>} : vector<64x32xf32>, vector<32x128xf32>, vector<64x128xf32> -> vector<64x128xf32>
    %c1 = arith.constant 1 : index
    %c0_6 = arith.constant 0 : index
    %c0_7 = arith.constant 0 : index
    %5 = vector.load %arg1[%c1, %c0_6, %c0_7] : memref<2x64x32xf32, #tpu.memory_space<vmem>>, vector<1x64x32xf32>
    %6 = vector.shape_cast %5 : vector<1x64x32xf32> to vector<64x32xf32>
    %c0_8 = arith.constant 0 : index
    %c1_9 = arith.constant 1 : index
    %c0_10 = arith.constant 0 : index
    %c0_11 = arith.constant 0 : index
    %7 = vector.load %arg4[%c0_8, %c1_9, %c0_10, %c0_11] : memref<1x2x32x128xf32, #tpu.memory_space<vmem>>, vector<1x1x32x128xf32>
    %8 = vector.shape_cast %7 : vector<1x1x32x128xf32> to vector<32x128xf32>
    %cst_12 = arith.constant dense<0.000000e+00> : vector<64x128xf32>
    %9 = tpu.matmul %6, %8, %cst_12 {dimension_numbers = #tpu.dot_dimension_numbers<[1], [0], [0], [1], [0, 0, 1, 1], [], []>} : vector<64x32xf32>, vector<32x128xf32>, vector<64x128xf32> -> vector<64x128xf32>
    %10 = arith.addf %4, %9 : vector<64x128xf32>
    %c0_13 = arith.constant 0 : index
    %c0_14 = arith.constant 0 : index
    %c0_15 = arith.constant 0 : index
    %11 = vector.load %arg6[%c0_13, %c0_14, %c0_15] : memref<1x1x128xf32, #tpu.memory_space<vmem>>, vector<1x1x128xf32>
    %12 = vector.shape_cast %11 : vector<1x1x128xf32> to vector<1x128xf32>
    %13 = vector.broadcast %12 : vector<1x128xf32> to vector<64x128xf32>
    %14 = arith.addf %10, %13 : vector<64x128xf32>
    %c0_16 = arith.constant 0 : index
    %c0_17 = arith.constant 0 : index
    %15 = vector.load %arg10[%c0_16, %c0_17] : memref<64x128xf32, #tpu.memory_space<vmem>>, vector<64x128xf32>
    tpu.vector_store %arg10[%c0_16, %c0_17], %14 {strides = array<i32>} : memref<64x128xf32, #tpu.memory_space<vmem>>, vector<64x128xf32>,
    %c0_18 = arith.constant 0 : index
    %c0_19 = arith.constant 0 : index
    %c0_20 = arith.constant 0 : index
    %16 = vector.load %arg5[%c0_18, %c0_19, %c0_20] : memref<1x32x128xf32, #tpu.memory_space<vmem>>, vector<1x32x128xf32>
    %17 = vector.shape_cast %16 : vector<1x32x128xf32> to vector<32x128xf32>
    %c0_21 = arith.constant 0 : index
    %c0_22 = arith.constant 0 : index
    %c0_23 = arith.constant 0 : index
    %18 = vector.load %arg2[%c0_21, %c0_22, %c0_23] : memref<1x8x32xf32, #tpu.memory_space<vmem>>, vector<1x8x32xf32>
    %19 = vector.shape_cast %18 : vector<1x8x32xf32> to vector<8x32xf32>
    %c0_24 = arith.constant 0 : index
    %c0_25 = arith.constant 0 : index
    %c0_26 = arith.constant 0 : index
    %20 = vector.load %arg3[%c0_24, %c0_25, %c0_26] : memref<1x8x32xf32, #tpu.memory_space<vmem>>, vector<1x8x32xf32>
    %21 = vector.shape_cast %20 : vector<1x8x32xf32> to vector<8x32xf32>
    %c0_i32 = arith.constant 0 : i32
    %c0_i32_27 = arith.constant 0 : i32
    %22 = arith.cmpi eq, %arg0, %c0_i32_27 : i32
    %c7_i32 = arith.constant 7 : i32
    %23 = arith.subi %c7_i32, %c0_i32 : i32
    %24 = arith.select %22, %c0_i32, %23 : i32
    %c8_i32 = arith.constant 8 : i32
    %25 = arith.muli %24, %c8_i32 : i32
    %26 = tpu.assume_multiple %25, 8 : i32
    %27 = arith.index_cast %26 : i32 to index
    %c0_28 = arith.constant 0 : index
    %28 = vector.load %arg10[%27, %c0_28] : memref<64x128xf32, #tpu.memory_space<vmem>>, vector<8x128xf32>
    %cst_29 = arith.constant dense<0.000000e+00> : vector<8x128xf32>
    %29 = tpu.matmul %19, %17, %cst_29 {dimension_numbers = #tpu.dot_dimension_numbers<[1], [0], [0], [1], [0, 0, 1, 1], [], []>} : vector<8x32xf32>, vector<32x128xf32>, vector<8x128xf32> -> vector<8x128xf32>
    %30 = arith.addf %28, %29 : vector<8x128xf32>
    %31 = vector.extract_strided_slice %30 {offsets = [0, 0], sizes = [8, 32], strides = [1, 1]} : vector<8x128xf32> to vector<8x32xf32>
    %32 = arith.negf %31 : vector<8x32xf32>
    %33 = math.exp %32 : vector<8x32xf32>
    %cst_30 = arith.constant 1.000000e+00 : f32
    %34 = vector.broadcast %cst_30 : f32 to vector<8x32xf32>
    %35 = arith.addf %34, %33 : vector<8x32xf32>
    %36 = arith.divf %34, %35 : vector<8x32xf32>
    %37 = vector.extract_strided_slice %30 {offsets = [0, 32], sizes = [8, 32], strides = [1, 1]} : vector<8x128xf32> to vector<8x32xf32>
    %38 = arith.negf %37 : vector<8x32xf32>
    %39 = math.exp %38 : vector<8x32xf32>
    %cst_31 = arith.constant 1.000000e+00 : f32
    %40 = vector.broadcast %cst_31 : f32 to vector<8x32xf32>
    %41 = arith.addf %40, %39 : vector<8x32xf32>
    %42 = arith.divf %40, %41 : vector<8x32xf32>
    %43 = vector.extract_strided_slice %30 {offsets = [0, 64], sizes = [8, 32], strides = [1, 1]} : vector<8x128xf32> to vector<8x32xf32>
    %44 = math.tanh %43 : vector<8x32xf32>
    %45 = vector.extract_strided_slice %30 {offsets = [0, 96], sizes = [8, 32], strides = [1, 1]} : vector<8x128xf32> to vector<8x32xf32>
    %46 = arith.negf %45 : vector<8x32xf32>
    %47 = math.exp %46 : vector<8x32xf32>
    %cst_32 = arith.constant 1.000000e+00 : f32
    %48 = vector.broadcast %cst_32 : f32 to vector<8x32xf32>
    %49 = arith.addf %48, %47 : vector<8x32xf32>
    %50 = arith.divf %48, %49 : vector<8x32xf32>
    %51 = arith.mulf %42, %21 : vector<8x32xf32>
    %52 = arith.mulf %36, %44 : vector<8x32xf32>
    %53 = arith.addf %51, %52 : vector<8x32xf32>
    %54 = math.tanh %53 : vector<8x32xf32>
    %55 = arith.mulf %50, %54 : vector<8x32xf32>
    %c0_33 = arith.constant 0 : index
    %56 = arith.index_cast %26 : i32 to index
    %c0_34 = arith.constant 0 : index
    %57 = vector.load %arg7[%c0_33, %56, %c0_34] : memref<1x64x32xf32, #tpu.memory_space<vmem>>, vector<1x8x32xf32>
    %58 = vector.shape_cast %57 : vector<1x8x32xf32> to vector<8x32xf32>
    %59 = vector.shape_cast %55 : vector<8x32xf32> to vector<1x8x32xf32>
    tpu.vector_store %arg7[%c0_33, %56, %c0_34], %59 {strides = array<i32>} : memref<1x64x32xf32, #tpu.memory_space<vmem>>, vector<1x8x32xf32>,
    %c1_i32 = arith.constant 1 : i32
    %c0_i32_35 = arith.constant 0 : i32
    %60 = arith.cmpi eq, %arg0, %c0_i32_35 : i32
    %c7_i32_36 = arith.constant 7 : i32
    %61 = arith.subi %c7_i32_36, %c1_i32 : i32
    %62 = arith.select %60, %c1_i32, %61 : i32
    %c8_i32_37 = arith.constant 8 : i32
    %63 = arith.muli %62, %c8_i32_37 : i32
    %64 = tpu.assume_multiple %63, 8 : i32
    %65 = arith.index_cast %64 : i32 to index
    %c0_38 = arith.constant 0 : index
    %66 = vector.load %arg10[%65, %c0_38] : memref<64x128xf32, #tpu.memory_space<vmem>>, vector<8x128xf32>
    %cst_39 = arith.constant dense<0.000000e+00> : vector<8x128xf32>
    %67 = tpu.matmul %55, %17, %cst_39 {dimension_numbers = #tpu.dot_dimension_numbers<[1], [0], [0], [1], [0, 0, 1, 1], [], []>} : vector<8x32xf32>, vector<32x128xf32>, vector<8x128xf32> -> vector<8x128xf32>
    %68 = arith.addf %66, %67 : vector<8x128xf32>
    %69 = vector.extract_strided_slice %68 {offsets = [0, 0], sizes = [8, 32], strides = [1, 1]} : vector<8x128xf32> to vector<8x32xf32>
    %70 = arith.negf %69 : vector<8x32xf32>
    %71 = math.exp %70 : vector<8x32xf32>
    %cst_40 = arith.constant 1.000000e+00 : f32
    %72 = vector.broadcast %cst_40 : f32 to vector<8x32xf32>
    %73 = arith.addf %72, %71 : vector<8x32xf32>
    %74 = arith.divf %72, %73 : vector<8x32xf32>
    %75 = vector.extract_strided_slice %68 {offsets = [0, 32], sizes = [8, 32], strides = [1, 1]} : vector<8x128xf32> to vector<8x32xf32>
    %76 = arith.negf %75 : vector<8x32xf32>
    %77 = math.exp %76 : vector<8x32xf32>
    %cst_41 = arith.constant 1.000000e+00 : f32
    %78 = vector.broadcast %cst_41 : f32 to vector<8x32xf32>
    %79 = arith.addf %78, %77 : vector<8x32xf32>
    %80 = arith.divf %78, %79 : vector<8x32xf32>
    %81 = vector.extract_strided_slice %68 {offsets = [0, 64], sizes = [8, 32], strides = [1, 1]} : vector<8x128xf32> to vector<8x32xf32>
    %82 = math.tanh %81 : vector<8x32xf32>
    %83 = vector.extract_strided_slice %68 {offsets = [0, 96], sizes = [8, 32], strides = [1, 1]} : vector<8x128xf32> to vector<8x32xf32>
    %84 = arith.negf %83 : vector<8x32xf32>
    %85 = math.exp %84 : vector<8x32xf32>
    %cst_42 = arith.constant 1.000000e+00 : f32
    %86 = vector.broadcast %cst_42 : f32 to vector<8x32xf32>
    %87 = arith.addf %86, %85 : vector<8x32xf32>
    %88 = arith.divf %86, %87 : vector<8x32xf32>
    %89 = arith.mulf %80, %53 : vector<8x32xf32>
    %90 = arith.mulf %74, %82 : vector<8x32xf32>
    %91 = arith.addf %89, %90 : vector<8x32xf32>
    %92 = math.tanh %91 : vector<8x32xf32>
    %93 = arith.mulf %88, %92 : vector<8x32xf32>
    %c0_43 = arith.constant 0 : index
    %94 = arith.index_cast %64 : i32 to index
    %c0_44 = arith.constant 0 : index
    %95 = vector.load %arg7[%c0_43, %94, %c0_44] : memref<1x64x32xf32, #tpu.memory_space<vmem>>, vector<1x8x32xf32>
    %96 = vector.shape_cast %95 : vector<1x8x32xf32> to vector<8x32xf32>
    %97 = vector.shape_cast %93 : vector<8x32xf32> to vector<1x8x32xf32>
    tpu.vector_store %arg7[%c0_43, %94, %c0_44], %97 {strides = array<i32>} : memref<1x64x32xf32, #tpu.memory_space<vmem>>, vector<1x8x32xf32>,
    %c2_i32 = arith.constant 2 : i32
    %c0_i32_45 = arith.constant 0 : i32
    %98 = arith.cmpi eq, %arg0, %c0_i32_45 : i32
    %c7_i32_46 = arith.constant 7 : i32
    %99 = arith.subi %c7_i32_46, %c2_i32 : i32
    %100 = arith.select %98, %c2_i32, %99 : i32
    %c8_i32_47 = arith.constant 8 : i32
    %101 = arith.muli %100, %c8_i32_47 : i32
    %102 = tpu.assume_multiple %101, 8 : i32
    %103 = arith.index_cast %102 : i32 to index
    %c0_48 = arith.constant 0 : index
    %104 = vector.load %arg10[%103, %c0_48] : memref<64x128xf32, #tpu.memory_space<vmem>>, vector<8x128xf32>
    %cst_49 = arith.constant dense<0.000000e+00> : vector<8x128xf32>
    %105 = tpu.matmul %93, %17, %cst_49 {dimension_numbers = #tpu.dot_dimension_numbers<[1], [0], [0], [1], [0, 0, 1, 1], [], []>} : vector<8x32xf32>, vector<32x128xf32>, vector<8x128xf32> -> vector<8x128xf32>
    %106 = arith.addf %104, %105 : vector<8x128xf32>
    %107 = vector.extract_strided_slice %106 {offsets = [0, 0], sizes = [8, 32], strides = [1, 1]} : vector<8x128xf32> to vector<8x32xf32>
    %108 = arith.negf %107 : vector<8x32xf32>
    %109 = math.exp %108 : vector<8x32xf32>
    %cst_50 = arith.constant 1.000000e+00 : f32
    %110 = vector.broadcast %cst_50 : f32 to vector<8x32xf32>
    %111 = arith.addf %110, %109 : vector<8x32xf32>
    %112 = arith.divf %110, %111 : vector<8x32xf32>
    %113 = vector.extract_strided_slice %106 {offsets = [0, 32], sizes = [8, 32], strides = [1, 1]} : vector<8x128xf32> to vector<8x32xf32>
    %114 = arith.negf %113 : vector<8x32xf32>
    %115 = math.exp %114 : vector<8x32xf32>
    %cst_51 = arith.constant 1.000000e+00 : f32
    %116 = vector.broadcast %cst_51 : f32 to vector<8x32xf32>
    %117 = arith.addf %116, %115 : vector<8x32xf32>
    %118 = arith.divf %116, %117 : vector<8x32xf32>
    %119 = vector.extract_strided_slice %106 {offsets = [0, 64], sizes = [8, 32], strides = [1, 1]} : vector<8x128xf32> to vector<8x32xf32>
    %120 = math.tanh %119 : vector<8x32xf32>
    %121 = vector.extract_strided_slice %106 {offsets = [0, 96], sizes = [8, 32], strides = [1, 1]} : vector<8x128xf32> to vector<8x32xf32>
    %122 = arith.negf %121 : vector<8x32xf32>
    %123 = math.exp %122 : vector<8x32xf32>
    %cst_52 = arith.constant 1.000000e+00 : f32
    %124 = vector.broadcast %cst_52 : f32 to vector<8x32xf32>
    %125 = arith.addf %124, %123 : vector<8x32xf32>
    %126 = arith.divf %124, %125 : vector<8x32xf32>
    %127 = arith.mulf %118, %91 : vector<8x32xf32>
    %128 = arith.mulf %112, %120 : vector<8x32xf32>
    %129 = arith.addf %127, %128 : vector<8x32xf32>
    %130 = math.tanh %129 : vector<8x32xf32>
    %131 = arith.mulf %126, %130 : vector<8x32xf32>
    %c0_53 = arith.constant 0 : index
    %132 = arith.index_cast %102 : i32 to index
    %c0_54 = arith.constant 0 : index
    %133 = vector.load %arg7[%c0_53, %132, %c0_54] : memref<1x64x32xf32, #tpu.memory_space<vmem>>, vector<1x8x32xf32>
    %134 = vector.shape_cast %133 : vector<1x8x32xf32> to vector<8x32xf32>
    %135 = vector.shape_cast %131 : vector<8x32xf32> to vector<1x8x32xf32>
    tpu.vector_store %arg7[%c0_53, %132, %c0_54], %135 {strides = array<i32>} : memref<1x64x32xf32, #tpu.memory_space<vmem>>, vector<1x8x32xf32>,
    %c3_i32 = arith.constant 3 : i32
    %c0_i32_55 = arith.constant 0 : i32
    %136 = arith.cmpi eq, %arg0, %c0_i32_55 : i32
    %c7_i32_56 = arith.constant 7 : i32
    %137 = arith.subi %c7_i32_56, %c3_i32 : i32
    %138 = arith.select %136, %c3_i32, %137 : i32
    %c8_i32_57 = arith.constant 8 : i32
    %139 = arith.muli %138, %c8_i32_57 : i32
    %140 = tpu.assume_multiple %139, 8 : i32
    %141 = arith.index_cast %140 : i32 to index
    %c0_58 = arith.constant 0 : index
    %142 = vector.load %arg10[%141, %c0_58] : memref<64x128xf32, #tpu.memory_space<vmem>>, vector<8x128xf32>
    %cst_59 = arith.constant dense<0.000000e+00> : vector<8x128xf32>
    %143 = tpu.matmul %131, %17, %cst_59 {dimension_numbers = #tpu.dot_dimension_numbers<[1], [0], [0], [1], [0, 0, 1, 1], [], []>} : vector<8x32xf32>, vector<32x128xf32>, vector<8x128xf32> -> vector<8x128xf32>
    %144 = arith.addf %142, %143 : vector<8x128xf32>
    %145 = vector.extract_strided_slice %144 {offsets = [0, 0], sizes = [8, 32], strides = [1, 1]} : vector<8x128xf32> to vector<8x32xf32>
    %146 = arith.negf %145 : vector<8x32xf32>
    %147 = math.exp %146 : vector<8x32xf32>
    %cst_60 = arith.constant 1.000000e+00 : f32
    %148 = vector.broadcast %cst_60 : f32 to vector<8x32xf32>
    %149 = arith.addf %148, %147 : vector<8x32xf32>
    %150 = arith.divf %148, %149 : vector<8x32xf32>
    %151 = vector.extract_strided_slice %144 {offsets = [0, 32], sizes = [8, 32], strides = [1, 1]} : vector<8x128xf32> to vector<8x32xf32>
    %152 = arith.negf %151 : vector<8x32xf32>
    %153 = math.exp %152 : vector<8x32xf32>
    %cst_61 = arith.constant 1.000000e+00 : f32
    %154 = vector.broadcast %cst_61 : f32 to vector<8x32xf32>
    %155 = arith.addf %154, %153 : vector<8x32xf32>
    %156 = arith.divf %154, %155 : vector<8x32xf32>
    %157 = vector.extract_strided_slice %144 {offsets = [0, 64], sizes = [8, 32], strides = [1, 1]} : vector<8x128xf32> to vector<8x32xf32>
    %158 = math.tanh %157 : vector<8x32xf32>
    %159 = vector.extract_strided_slice %144 {offsets = [0, 96], sizes = [8, 32], strides = [1, 1]} : vector<8x128xf32> to vector<8x32xf32>
    %160 = arith.negf %159 : vector<8x32xf32>
    %161 = math.exp %160 : vector<8x32xf32>
    %cst_62 = arith.constant 1.000000e+00 : f32
    %162 = vector.broadcast %cst_62 : f32 to vector<8x32xf32>
    %163 = arith.addf %162, %161 : vector<8x32xf32>
    %164 = arith.divf %162, %163 : vector<8x32xf32>
    %165 = arith.mulf %156, %129 : vector<8x32xf32>
    %166 = arith.mulf %150, %158 : vector<8x32xf32>
    %167 = arith.addf %165, %166 : vector<8x32xf32>
    %168 = math.tanh %167 : vector<8x32xf32>
    %169 = arith.mulf %164, %168 : vector<8x32xf32>
    %c0_63 = arith.constant 0 : index
    %170 = arith.index_cast %140 : i32 to index
    %c0_64 = arith.constant 0 : index
    %171 = vector.load %arg7[%c0_63, %170, %c0_64] : memref<1x64x32xf32, #tpu.memory_space<vmem>>, vector<1x8x32xf32>
    %172 = vector.shape_cast %171 : vector<1x8x32xf32> to vector<8x32xf32>
    %173 = vector.shape_cast %169 : vector<8x32xf32> to vector<1x8x32xf32>
    tpu.vector_store %arg7[%c0_63, %170, %c0_64], %173 {strides = array<i32>} : memref<1x64x32xf32, #tpu.memory_space<vmem>>, vector<1x8x32xf32>,
    %c4_i32 = arith.constant 4 : i32
    %c0_i32_65 = arith.constant 0 : i32
    %174 = arith.cmpi eq, %arg0, %c0_i32_65 : i32
    %c7_i32_66 = arith.constant 7 : i32
    %175 = arith.subi %c7_i32_66, %c4_i32 : i32
    %176 = arith.select %174, %c4_i32, %175 : i32
    %c8_i32_67 = arith.constant 8 : i32
    %177 = arith.muli %176, %c8_i32_67 : i32
    %178 = tpu.assume_multiple %177, 8 : i32
    %179 = arith.index_cast %178 : i32 to index
    %c0_68 = arith.constant 0 : index
    %180 = vector.load %arg10[%179, %c0_68] : memref<64x128xf32, #tpu.memory_space<vmem>>, vector<8x128xf32>
    %cst_69 = arith.constant dense<0.000000e+00> : vector<8x128xf32>
    %181 = tpu.matmul %169, %17, %cst_69 {dimension_numbers = #tpu.dot_dimension_numbers<[1], [0], [0], [1], [0, 0, 1, 1], [], []>} : vector<8x32xf32>, vector<32x128xf32>, vector<8x128xf32> -> vector<8x128xf32>
    %182 = arith.addf %180, %181 : vector<8x128xf32>
    %183 = vector.extract_strided_slice %182 {offsets = [0, 0], sizes = [8, 32], strides = [1, 1]} : vector<8x128xf32> to vector<8x32xf32>
    %184 = arith.negf %183 : vector<8x32xf32>
    %185 = math.exp %184 : vector<8x32xf32>
    %cst_70 = arith.constant 1.000000e+00 : f32
    %186 = vector.broadcast %cst_70 : f32 to vector<8x32xf32>
    %187 = arith.addf %186, %185 : vector<8x32xf32>
    %188 = arith.divf %186, %187 : vector<8x32xf32>
    %189 = vector.extract_strided_slice %182 {offsets = [0, 32], sizes = [8, 32], strides = [1, 1]} : vector<8x128xf32> to vector<8x32xf32>
    %190 = arith.negf %189 : vector<8x32xf32>
    %191 = math.exp %190 : vector<8x32xf32>
    %cst_71 = arith.constant 1.000000e+00 : f32
    %192 = vector.broadcast %cst_71 : f32 to vector<8x32xf32>
    %193 = arith.addf %192, %191 : vector<8x32xf32>
    %194 = arith.divf %192, %193 : vector<8x32xf32>
    %195 = vector.extract_strided_slice %182 {offsets = [0, 64], sizes = [8, 32], strides = [1, 1]} : vector<8x128xf32> to vector<8x32xf32>
    %196 = math.tanh %195 : vector<8x32xf32>
    %197 = vector.extract_strided_slice %182 {offsets = [0, 96], sizes = [8, 32], strides = [1, 1]} : vector<8x128xf32> to vector<8x32xf32>
    %198 = arith.negf %197 : vector<8x32xf32>
    %199 = math.exp %198 : vector<8x32xf32>
    %cst_72 = arith.constant 1.000000e+00 : f32
    %200 = vector.broadcast %cst_72 : f32 to vector<8x32xf32>
    %201 = arith.addf %200, %199 : vector<8x32xf32>
    %202 = arith.divf %200, %201 : vector<8x32xf32>
    %203 = arith.mulf %194, %167 : vector<8x32xf32>
    %204 = arith.mulf %188, %196 : vector<8x32xf32>
    %205 = arith.addf %203, %204 : vector<8x32xf32>
    %206 = math.tanh %205 : vector<8x32xf32>
    %207 = arith.mulf %202, %206 : vector<8x32xf32>
    %c0_73 = arith.constant 0 : index
    %208 = arith.index_cast %178 : i32 to index
    %c0_74 = arith.constant 0 : index
    %209 = vector.load %arg7[%c0_73, %208, %c0_74] : memref<1x64x32xf32, #tpu.memory_space<vmem>>, vector<1x8x32xf32>
    %210 = vector.shape_cast %209 : vector<1x8x32xf32> to vector<8x32xf32>
    %211 = vector.shape_cast %207 : vector<8x32xf32> to vector<1x8x32xf32>
    tpu.vector_store %arg7[%c0_73, %208, %c0_74], %211 {strides = array<i32>} : memref<1x64x32xf32, #tpu.memory_space<vmem>>, vector<1x8x32xf32>,
    %c5_i32 = arith.constant 5 : i32
    %c0_i32_75 = arith.constant 0 : i32
    %212 = arith.cmpi eq, %arg0, %c0_i32_75 : i32
    %c7_i32_76 = arith.constant 7 : i32
    %213 = arith.subi %c7_i32_76, %c5_i32 : i32
    %214 = arith.select %212, %c5_i32, %213 : i32
    %c8_i32_77 = arith.constant 8 : i32
    %215 = arith.muli %214, %c8_i32_77 : i32
    %216 = tpu.assume_multiple %215, 8 : i32
    %217 = arith.index_cast %216 : i32 to index
    %c0_78 = arith.constant 0 : index
    %218 = vector.load %arg10[%217, %c0_78] : memref<64x128xf32, #tpu.memory_space<vmem>>, vector<8x128xf32>
    %cst_79 = arith.constant dense<0.000000e+00> : vector<8x128xf32>
    %219 = tpu.matmul %207, %17, %cst_79 {dimension_numbers = #tpu.dot_dimension_numbers<[1], [0], [0], [1], [0, 0, 1, 1], [], []>} : vector<8x32xf32>, vector<32x128xf32>, vector<8x128xf32> -> vector<8x128xf32>
    %220 = arith.addf %218, %219 : vector<8x128xf32>
    %221 = vector.extract_strided_slice %220 {offsets = [0, 0], sizes = [8, 32], strides = [1, 1]} : vector<8x128xf32> to vector<8x32xf32>
    %222 = arith.negf %221 : vector<8x32xf32>
    %223 = math.exp %222 : vector<8x32xf32>
    %cst_80 = arith.constant 1.000000e+00 : f32
    %224 = vector.broadcast %cst_80 : f32 to vector<8x32xf32>
    %225 = arith.addf %224, %223 : vector<8x32xf32>
    %226 = arith.divf %224, %225 : vector<8x32xf32>
    %227 = vector.extract_strided_slice %220 {offsets = [0, 32], sizes = [8, 32], strides = [1, 1]} : vector<8x128xf32> to vector<8x32xf32>
    %228 = arith.negf %227 : vector<8x32xf32>
    %229 = math.exp %228 : vector<8x32xf32>
    %cst_81 = arith.constant 1.000000e+00 : f32
    %230 = vector.broadcast %cst_81 : f32 to vector<8x32xf32>
    %231 = arith.addf %230, %229 : vector<8x32xf32>
    %232 = arith.divf %230, %231 : vector<8x32xf32>
    %233 = vector.extract_strided_slice %220 {offsets = [0, 64], sizes = [8, 32], strides = [1, 1]} : vector<8x128xf32> to vector<8x32xf32>
    %234 = math.tanh %233 : vector<8x32xf32>
    %235 = vector.extract_strided_slice %220 {offsets = [0, 96], sizes = [8, 32], strides = [1, 1]} : vector<8x128xf32> to vector<8x32xf32>
    %236 = arith.negf %235 : vector<8x32xf32>
    %237 = math.exp %236 : vector<8x32xf32>
    %cst_82 = arith.constant 1.000000e+00 : f32
    %238 = vector.broadcast %cst_82 : f32 to vector<8x32xf32>
    %239 = arith.addf %238, %237 : vector<8x32xf32>
    %240 = arith.divf %238, %239 : vector<8x32xf32>
    %241 = arith.mulf %232, %205 : vector<8x32xf32>
    %242 = arith.mulf %226, %234 : vector<8x32xf32>
    %243 = arith.addf %241, %242 : vector<8x32xf32>
    %244 = math.tanh %243 : vector<8x32xf32>
    %245 = arith.mulf %240, %244 : vector<8x32xf32>
    %c0_83 = arith.constant 0 : index
    %246 = arith.index_cast %216 : i32 to index
    %c0_84 = arith.constant 0 : index
    %247 = vector.load %arg7[%c0_83, %246, %c0_84] : memref<1x64x32xf32, #tpu.memory_space<vmem>>, vector<1x8x32xf32>
    %248 = vector.shape_cast %247 : vector<1x8x32xf32> to vector<8x32xf32>
    %249 = vector.shape_cast %245 : vector<8x32xf32> to vector<1x8x32xf32>
    tpu.vector_store %arg7[%c0_83, %246, %c0_84], %249 {strides = array<i32>} : memref<1x64x32xf32, #tpu.memory_space<vmem>>, vector<1x8x32xf32>,
    %c6_i32 = arith.constant 6 : i32
    %c0_i32_85 = arith.constant 0 : i32
    %250 = arith.cmpi eq, %arg0, %c0_i32_85 : i32
    %c7_i32_86 = arith.constant 7 : i32
    %251 = arith.subi %c7_i32_86, %c6_i32 : i32
    %252 = arith.select %250, %c6_i32, %251 : i32
    %c8_i32_87 = arith.constant 8 : i32
    %253 = arith.muli %252, %c8_i32_87 : i32
    %254 = tpu.assume_multiple %253, 8 : i32
    %255 = arith.index_cast %254 : i32 to index
    %c0_88 = arith.constant 0 : index
    %256 = vector.load %arg10[%255, %c0_88] : memref<64x128xf32, #tpu.memory_space<vmem>>, vector<8x128xf32>
    %cst_89 = arith.constant dense<0.000000e+00> : vector<8x128xf32>
    %257 = tpu.matmul %245, %17, %cst_89 {dimension_numbers = #tpu.dot_dimension_numbers<[1], [0], [0], [1], [0, 0, 1, 1], [], []>} : vector<8x32xf32>, vector<32x128xf32>, vector<8x128xf32> -> vector<8x128xf32>
    %258 = arith.addf %256, %257 : vector<8x128xf32>
    %259 = vector.extract_strided_slice %258 {offsets = [0, 0], sizes = [8, 32], strides = [1, 1]} : vector<8x128xf32> to vector<8x32xf32>
    %260 = arith.negf %259 : vector<8x32xf32>
    %261 = math.exp %260 : vector<8x32xf32>
    %cst_90 = arith.constant 1.000000e+00 : f32
    %262 = vector.broadcast %cst_90 : f32 to vector<8x32xf32>
    %263 = arith.addf %262, %261 : vector<8x32xf32>
    %264 = arith.divf %262, %263 : vector<8x32xf32>
    %265 = vector.extract_strided_slice %258 {offsets = [0, 32], sizes = [8, 32], strides = [1, 1]} : vector<8x128xf32> to vector<8x32xf32>
    %266 = arith.negf %265 : vector<8x32xf32>
    %267 = math.exp %266 : vector<8x32xf32>
    %cst_91 = arith.constant 1.000000e+00 : f32
    %268 = vector.broadcast %cst_91 : f32 to vector<8x32xf32>
    %269 = arith.addf %268, %267 : vector<8x32xf32>
    %270 = arith.divf %268, %269 : vector<8x32xf32>
    %271 = vector.extract_strided_slice %258 {offsets = [0, 64], sizes = [8, 32], strides = [1, 1]} : vector<8x128xf32> to vector<8x32xf32>
    %272 = math.tanh %271 : vector<8x32xf32>
    %273 = vector.extract_strided_slice %258 {offsets = [0, 96], sizes = [8, 32], strides = [1, 1]} : vector<8x128xf32> to vector<8x32xf32>
    %274 = arith.negf %273 : vector<8x32xf32>
    %275 = math.exp %274 : vector<8x32xf32>
    %cst_92 = arith.constant 1.000000e+00 : f32
    %276 = vector.broadcast %cst_92 : f32 to vector<8x32xf32>
    %277 = arith.addf %276, %275 : vector<8x32xf32>
    %278 = arith.divf %276, %277 : vector<8x32xf32>
    %279 = arith.mulf %270, %243 : vector<8x32xf32>
    %280 = arith.mulf %264, %272 : vector<8x32xf32>
    %281 = arith.addf %279, %280 : vector<8x32xf32>
    %282 = math.tanh %281 : vector<8x32xf32>
    %283 = arith.mulf %278, %282 : vector<8x32xf32>
    %c0_93 = arith.constant 0 : index
    %284 = arith.index_cast %254 : i32 to index
    %c0_94 = arith.constant 0 : index
    %285 = vector.load %arg7[%c0_93, %284, %c0_94] : memref<1x64x32xf32, #tpu.memory_space<vmem>>, vector<1x8x32xf32>
    %286 = vector.shape_cast %285 : vector<1x8x32xf32> to vector<8x32xf32>
    %287 = vector.shape_cast %283 : vector<8x32xf32> to vector<1x8x32xf32>
    tpu.vector_store %arg7[%c0_93, %284, %c0_94], %287 {strides = array<i32>} : memref<1x64x32xf32, #tpu.memory_space<vmem>>, vector<1x8x32xf32>,
    %c7_i32_95 = arith.constant 7 : i32
    %c0_i32_96 = arith.constant 0 : i32
    %288 = arith.cmpi eq, %arg0, %c0_i32_96 : i32
    %c7_i32_97 = arith.constant 7 : i32
    %289 = arith.subi %c7_i32_97, %c7_i32_95 : i32
    %290 = arith.select %288, %c7_i32_95, %289 : i32
    %c8_i32_98 = arith.constant 8 : i32
    %291 = arith.muli %290, %c8_i32_98 : i32
    %292 = tpu.assume_multiple %291, 8 : i32
    %293 = arith.index_cast %292 : i32 to index
    %c0_99 = arith.constant 0 : index
    %294 = vector.load %arg10[%293, %c0_99] : memref<64x128xf32, #tpu.memory_space<vmem>>, vector<8x128xf32>
    %cst_100 = arith.constant dense<0.000000e+00> : vector<8x128xf32>
    %295 = tpu.matmul %283, %17, %cst_100 {dimension_numbers = #tpu.dot_dimension_numbers<[1], [0], [0], [1], [0, 0, 1, 1], [], []>} : vector<8x32xf32>, vector<32x128xf32>, vector<8x128xf32> -> vector<8x128xf32>
    %296 = arith.addf %294, %295 : vector<8x128xf32>
    %297 = vector.extract_strided_slice %296 {offsets = [0, 0], sizes = [8, 32], strides = [1, 1]} : vector<8x128xf32> to vector<8x32xf32>
    %298 = arith.negf %297 : vector<8x32xf32>
    %299 = math.exp %298 : vector<8x32xf32>
    %cst_101 = arith.constant 1.000000e+00 : f32
    %300 = vector.broadcast %cst_101 : f32 to vector<8x32xf32>
    %301 = arith.addf %300, %299 : vector<8x32xf32>
    %302 = arith.divf %300, %301 : vector<8x32xf32>
    %303 = vector.extract_strided_slice %296 {offsets = [0, 32], sizes = [8, 32], strides = [1, 1]} : vector<8x128xf32> to vector<8x32xf32>
    %304 = arith.negf %303 : vector<8x32xf32>
    %305 = math.exp %304 : vector<8x32xf32>
    %cst_102 = arith.constant 1.000000e+00 : f32
    %306 = vector.broadcast %cst_102 : f32 to vector<8x32xf32>
    %307 = arith.addf %306, %305 : vector<8x32xf32>
    %308 = arith.divf %306, %307 : vector<8x32xf32>
    %309 = vector.extract_strided_slice %296 {offsets = [0, 64], sizes = [8, 32], strides = [1, 1]} : vector<8x128xf32> to vector<8x32xf32>
    %310 = math.tanh %309 : vector<8x32xf32>
    %311 = vector.extract_strided_slice %296 {offsets = [0, 96], sizes = [8, 32], strides = [1, 1]} : vector<8x128xf32> to vector<8x32xf32>
    %312 = arith.negf %311 : vector<8x32xf32>
    %313 = math.exp %312 : vector<8x32xf32>
    %cst_103 = arith.constant 1.000000e+00 : f32
    %314 = vector.broadcast %cst_103 : f32 to vector<8x32xf32>
    %315 = arith.addf %314, %313 : vector<8x32xf32>
    %316 = arith.divf %314, %315 : vector<8x32xf32>
    %317 = arith.mulf %308, %281 : vector<8x32xf32>
    %318 = arith.mulf %302, %310 : vector<8x32xf32>
    %319 = arith.addf %317, %318 : vector<8x32xf32>
    %320 = math.tanh %319 : vector<8x32xf32>
    %321 = arith.mulf %316, %320 : vector<8x32xf32>
    %c0_104 = arith.constant 0 : index
    %322 = arith.index_cast %292 : i32 to index
    %c0_105 = arith.constant 0 : index
    %323 = vector.load %arg7[%c0_104, %322, %c0_105] : memref<1x64x32xf32, #tpu.memory_space<vmem>>, vector<1x8x32xf32>
    %324 = vector.shape_cast %323 : vector<1x8x32xf32> to vector<8x32xf32>
    %325 = vector.shape_cast %321 : vector<8x32xf32> to vector<1x8x32xf32>
    tpu.vector_store %arg7[%c0_104, %322, %c0_105], %325 {strides = array<i32>} : memref<1x64x32xf32, #tpu.memory_space<vmem>>, vector<1x8x32xf32>,
    %c8_i32_106 = arith.constant 8 : i32
    %c0_107 = arith.constant 0 : index
    %c0_108 = arith.constant 0 : index
    %c0_109 = arith.constant 0 : index
    %326 = vector.load %arg8[%c0_107, %c0_108, %c0_109] : memref<1x8x32xf32, #tpu.memory_space<vmem>>, vector<1x8x32xf32>
    %327 = vector.shape_cast %326 : vector<1x8x32xf32> to vector<8x32xf32>
    %328 = vector.shape_cast %321 : vector<8x32xf32> to vector<1x8x32xf32>
    tpu.vector_store %arg8[%c0_107, %c0_108, %c0_109], %328 {strides = array<i32>} : memref<1x8x32xf32, #tpu.memory_space<vmem>>, vector<1x8x32xf32>,
    %c0_110 = arith.constant 0 : index
    %c0_111 = arith.constant 0 : index
    %c0_112 = arith.constant 0 : index
    %329 = vector.load %arg9[%c0_110, %c0_111, %c0_112] : memref<1x8x32xf32, #tpu.memory_space<vmem>>, vector<1x8x32xf32>
    %330 = vector.shape_cast %329 : vector<1x8x32xf32> to vector<8x32xf32>
    %331 = vector.shape_cast %319 : vector<8x32xf32> to vector<1x8x32xf32>
    tpu.vector_store %arg9[%c0_110, %c0_111, %c0_112], %331 {strides = array<i32>} : memref<1x8x32xf32, #tpu.memory_space<vmem>>, vector<1x8x32xf32>,
    return
  }
  func.func @transform_0(%arg0: i32) -> (i32, i32, i32) {
    %c0_i32 = arith.constant 0 : i32
    %c0_i32_0 = arith.constant 0 : i32
    %c0_i32_1 = arith.constant 0 : i32
    %c0_i32_2 = arith.constant 0 : i32
    return %c0_i32, %c0_i32_0, %c0_i32_1 : i32, i32, i32
  }
  func.func @transform_1(%arg0: i32) -> (i32, i32, i32) {
    %c0_i32 = arith.constant 0 : i32
    %c0_i32_0 = arith.constant 0 : i32
    %c0_i32_1 = arith.constant 0 : i32
    return %arg0, %c0_i32, %c0_i32_0 : i32, i32, i32
  }
  func.func @transform_2(%arg0: i32) -> (i32, i32, i32) {
    %c0_i32 = arith.constant 0 : i32
    %c0_i32_0 = arith.constant 0 : i32
    %c0_i32_1 = arith.constant 0 : i32
    return %arg0, %c0_i32, %c0_i32_0 : i32, i32, i32
  }
  func.func @transform_3(%arg0: i32) -> (i32, i32, i32, i32) {
    %c0_i32 = arith.constant 0 : i32
    %c0_i32_0 = arith.constant 0 : i32
    %c0_i32_1 = arith.constant 0 : i32
    %c0_i32_2 = arith.constant 0 : i32
    return %arg0, %c0_i32, %c0_i32_0, %c0_i32_1 : i32, i32, i32, i32
  }
  func.func @transform_4(%arg0: i32) -> (i32, i32, i32) {
    %c0_i32 = arith.constant 0 : i32
    %c0_i32_0 = arith.constant 0 : i32
    %c0_i32_1 = arith.constant 0 : i32
    return %arg0, %c0_i32, %c0_i32_0 : i32, i32, i32
  }
  func.func @transform_5(%arg0: i32) -> (i32, i32, i32) {
    %c0_i32 = arith.constant 0 : i32
    %c0_i32_0 = arith.constant 0 : i32
    %c0_i32_1 = arith.constant 0 : i32
    return %arg0, %c0_i32, %c0_i32_0 : i32, i32, i32
  }
  func.func @transform_6(%arg0: i32) -> (i32, i32, i32) {
    %c0_i32 = arith.constant 0 : i32
    %c0_i32_0 = arith.constant 0 : i32
    %c0_i32_1 = arith.constant 0 : i32
    return %arg0, %c0_i32, %c0_i32_0 : i32, i32, i32
  }
  func.func @transform_7(%arg0: i32) -> (i32, i32, i32) {
    %c0_i32 = arith.constant 0 : i32
    %c0_i32_0 = arith.constant 0 : i32
    %c0_i32_1 = arith.constant 0 : i32
    return %arg0, %c0_i32, %c0_i32_0 : i32, i32, i32
  }
  func.func @transform_8(%arg0: i32) -> (i32, i32, i32) {
    %c0_i32 = arith.constant 0 : i32
    %c0_i32_0 = arith.constant 0 : i32
    %c0_i32_1 = arith.constant 0 : i32
    return %arg0, %c0_i32, %c0_i32_0 : i32, i32, i32
  }
}

module attributes {stable_mosaic.version = 11 : i64} {
  func.func @_bilstm_layer_kernel(%arg0: i32, %arg1: memref<1x64x32xf32, #tpu.memory_space<vmem>>, %arg2: memref<1x8x32xf32, #tpu.memory_space<vmem>>, %arg3: memref<1x8x32xf32, #tpu.memory_space<vmem>>, %arg4: memref<1x1x32x128xf32, #tpu.memory_space<vmem>>, %arg5: memref<1x32x128xf32, #tpu.memory_space<vmem>>, %arg6: memref<1x1x128xf32, #tpu.memory_space<vmem>>, %arg7: memref<1x64x32xf32, #tpu.memory_space<vmem>>, %arg8: memref<1x8x32xf32, #tpu.memory_space<vmem>>, %arg9: memref<1x8x32xf32, #tpu.memory_space<vmem>>, %arg10: memref<64x128xf32, #tpu.memory_space<vmem>>) attributes {dimension_semantics = [#tpu.dimension_semantics<parallel>], iteration_bounds = array<i64: 2>, scalar_prefetch = 0 : i64, scratch_operands = 1 : i64, tpu.core_type = #tpu.core_type<tc>, window_params = [{pipeline_mode = #tpu.pipeline_mode<synchronous>, transform_indices = @transform_0, window_bounds = array<i64: 1, 64, 32>}, {transform_indices = @transform_1, window_bounds = array<i64: 1, 8, 32>}, {transform_indices = @transform_2, window_bounds = array<i64: 1, 8, 32>}, {transform_indices = @transform_3, window_bounds = array<i64: 1, 1, 32, 128>}, {transform_indices = @transform_4, window_bounds = array<i64: 1, 32, 128>}, {transform_indices = @transform_5, window_bounds = array<i64: 1, 1, 128>}, {transform_indices = @transform_6, window_bounds = array<i64: 1, 64, 32>}, {transform_indices = @transform_7, window_bounds = array<i64: 1, 8, 32>}, {transform_indices = @transform_8, window_bounds = array<i64: 1, 8, 32>}]} {
    %c0 = arith.constant 0 : index
    %c0_0 = arith.constant 0 : index
    %c0_1 = arith.constant 0 : index
    %0 = vector.load %arg1[%c0, %c0_0, %c0_1] : memref<1x64x32xf32, #tpu.memory_space<vmem>>, vector<1x64x32xf32>
    %1 = vector.shape_cast %0 : vector<1x64x32xf32> to vector<64x32xf32>
    %c0_2 = arith.constant 0 : index
    %c0_3 = arith.constant 0 : index
    %c0_4 = arith.constant 0 : index
    %c0_5 = arith.constant 0 : index
    %2 = vector.load %arg4[%c0_2, %c0_3, %c0_4, %c0_5] : memref<1x1x32x128xf32, #tpu.memory_space<vmem>>, vector<1x1x32x128xf32>
    %3 = vector.shape_cast %2 : vector<1x1x32x128xf32> to vector<32x128xf32>
    %cst = arith.constant dense<0.000000e+00> : vector<64x128xf32>
    %4 = tpu.matmul %1, %3, %cst {dimension_numbers = #tpu.dot_dimension_numbers<[1], [0], [0], [1], [0, 0, 1, 1], [], []>} : vector<64x32xf32>, vector<32x128xf32>, vector<64x128xf32> -> vector<64x128xf32>
    %c0_6 = arith.constant 0 : index
    %c0_7 = arith.constant 0 : index
    %c0_8 = arith.constant 0 : index
    %5 = vector.load %arg6[%c0_6, %c0_7, %c0_8] : memref<1x1x128xf32, #tpu.memory_space<vmem>>, vector<1x1x128xf32>
    %6 = vector.shape_cast %5 : vector<1x1x128xf32> to vector<1x128xf32>
    %7 = vector.broadcast %6 : vector<1x128xf32> to vector<64x128xf32>
    %8 = arith.addf %4, %7 : vector<64x128xf32>
    %c0_9 = arith.constant 0 : index
    %c0_10 = arith.constant 0 : index
    %9 = vector.load %arg10[%c0_9, %c0_10] : memref<64x128xf32, #tpu.memory_space<vmem>>, vector<64x128xf32>
    tpu.vector_store %arg10[%c0_9, %c0_10], %8 {strides = array<i32>} : memref<64x128xf32, #tpu.memory_space<vmem>>, vector<64x128xf32>,
    %c0_11 = arith.constant 0 : index
    %c0_12 = arith.constant 0 : index
    %c0_13 = arith.constant 0 : index
    %10 = vector.load %arg5[%c0_11, %c0_12, %c0_13] : memref<1x32x128xf32, #tpu.memory_space<vmem>>, vector<1x32x128xf32>
    %11 = vector.shape_cast %10 : vector<1x32x128xf32> to vector<32x128xf32>
    %c0_14 = arith.constant 0 : index
    %c0_15 = arith.constant 0 : index
    %c0_16 = arith.constant 0 : index
    %12 = vector.load %arg2[%c0_14, %c0_15, %c0_16] : memref<1x8x32xf32, #tpu.memory_space<vmem>>, vector<1x8x32xf32>
    %13 = vector.shape_cast %12 : vector<1x8x32xf32> to vector<8x32xf32>
    %c0_17 = arith.constant 0 : index
    %c0_18 = arith.constant 0 : index
    %c0_19 = arith.constant 0 : index
    %14 = vector.load %arg3[%c0_17, %c0_18, %c0_19] : memref<1x8x32xf32, #tpu.memory_space<vmem>>, vector<1x8x32xf32>
    %15 = vector.shape_cast %14 : vector<1x8x32xf32> to vector<8x32xf32>
    %c0_i32 = arith.constant 0 : i32
    %c0_i32_20 = arith.constant 0 : i32
    %16 = arith.cmpi eq, %arg0, %c0_i32_20 : i32
    %c7_i32 = arith.constant 7 : i32
    %17 = arith.subi %c7_i32, %c0_i32 : i32
    %18 = arith.select %16, %c0_i32, %17 : i32
    %c8_i32 = arith.constant 8 : i32
    %19 = arith.muli %18, %c8_i32 : i32
    %20 = tpu.assume_multiple %19, 8 : i32
    %21 = arith.index_cast %20 : i32 to index
    %c0_21 = arith.constant 0 : index
    %22 = vector.load %arg10[%21, %c0_21] : memref<64x128xf32, #tpu.memory_space<vmem>>, vector<8x128xf32>
    %cst_22 = arith.constant dense<0.000000e+00> : vector<8x128xf32>
    %23 = tpu.matmul %13, %11, %cst_22 {dimension_numbers = #tpu.dot_dimension_numbers<[1], [0], [0], [1], [0, 0, 1, 1], [], []>} : vector<8x32xf32>, vector<32x128xf32>, vector<8x128xf32> -> vector<8x128xf32>
    %24 = arith.addf %22, %23 : vector<8x128xf32>
    %25 = vector.extract_strided_slice %24 {offsets = [0, 0], sizes = [8, 32], strides = [1, 1]} : vector<8x128xf32> to vector<8x32xf32>
    %26 = arith.negf %25 : vector<8x32xf32>
    %27 = math.exp %26 : vector<8x32xf32>
    %cst_23 = arith.constant 1.000000e+00 : f32
    %28 = vector.broadcast %cst_23 : f32 to vector<8x32xf32>
    %29 = arith.addf %28, %27 : vector<8x32xf32>
    %30 = arith.divf %28, %29 : vector<8x32xf32>
    %31 = vector.extract_strided_slice %24 {offsets = [0, 32], sizes = [8, 32], strides = [1, 1]} : vector<8x128xf32> to vector<8x32xf32>
    %32 = arith.negf %31 : vector<8x32xf32>
    %33 = math.exp %32 : vector<8x32xf32>
    %cst_24 = arith.constant 1.000000e+00 : f32
    %34 = vector.broadcast %cst_24 : f32 to vector<8x32xf32>
    %35 = arith.addf %34, %33 : vector<8x32xf32>
    %36 = arith.divf %34, %35 : vector<8x32xf32>
    %37 = vector.extract_strided_slice %24 {offsets = [0, 64], sizes = [8, 32], strides = [1, 1]} : vector<8x128xf32> to vector<8x32xf32>
    %38 = math.tanh %37 : vector<8x32xf32>
    %39 = vector.extract_strided_slice %24 {offsets = [0, 96], sizes = [8, 32], strides = [1, 1]} : vector<8x128xf32> to vector<8x32xf32>
    %40 = arith.negf %39 : vector<8x32xf32>
    %41 = math.exp %40 : vector<8x32xf32>
    %cst_25 = arith.constant 1.000000e+00 : f32
    %42 = vector.broadcast %cst_25 : f32 to vector<8x32xf32>
    %43 = arith.addf %42, %41 : vector<8x32xf32>
    %44 = arith.divf %42, %43 : vector<8x32xf32>
    %45 = arith.mulf %36, %15 : vector<8x32xf32>
    %46 = arith.mulf %30, %38 : vector<8x32xf32>
    %47 = arith.addf %45, %46 : vector<8x32xf32>
    %48 = math.tanh %47 : vector<8x32xf32>
    %49 = arith.mulf %44, %48 : vector<8x32xf32>
    %c0_26 = arith.constant 0 : index
    %50 = arith.index_cast %20 : i32 to index
    %c0_27 = arith.constant 0 : index
    %51 = vector.load %arg7[%c0_26, %50, %c0_27] : memref<1x64x32xf32, #tpu.memory_space<vmem>>, vector<1x8x32xf32>
    %52 = vector.shape_cast %51 : vector<1x8x32xf32> to vector<8x32xf32>
    %53 = vector.shape_cast %49 : vector<8x32xf32> to vector<1x8x32xf32>
    tpu.vector_store %arg7[%c0_26, %50, %c0_27], %53 {strides = array<i32>} : memref<1x64x32xf32, #tpu.memory_space<vmem>>, vector<1x8x32xf32>,
    %c1_i32 = arith.constant 1 : i32
    %c0_i32_28 = arith.constant 0 : i32
    %54 = arith.cmpi eq, %arg0, %c0_i32_28 : i32
    %c7_i32_29 = arith.constant 7 : i32
    %55 = arith.subi %c7_i32_29, %c1_i32 : i32
    %56 = arith.select %54, %c1_i32, %55 : i32
    %c8_i32_30 = arith.constant 8 : i32
    %57 = arith.muli %56, %c8_i32_30 : i32
    %58 = tpu.assume_multiple %57, 8 : i32
    %59 = arith.index_cast %58 : i32 to index
    %c0_31 = arith.constant 0 : index
    %60 = vector.load %arg10[%59, %c0_31] : memref<64x128xf32, #tpu.memory_space<vmem>>, vector<8x128xf32>
    %cst_32 = arith.constant dense<0.000000e+00> : vector<8x128xf32>
    %61 = tpu.matmul %49, %11, %cst_32 {dimension_numbers = #tpu.dot_dimension_numbers<[1], [0], [0], [1], [0, 0, 1, 1], [], []>} : vector<8x32xf32>, vector<32x128xf32>, vector<8x128xf32> -> vector<8x128xf32>
    %62 = arith.addf %60, %61 : vector<8x128xf32>
    %63 = vector.extract_strided_slice %62 {offsets = [0, 0], sizes = [8, 32], strides = [1, 1]} : vector<8x128xf32> to vector<8x32xf32>
    %64 = arith.negf %63 : vector<8x32xf32>
    %65 = math.exp %64 : vector<8x32xf32>
    %cst_33 = arith.constant 1.000000e+00 : f32
    %66 = vector.broadcast %cst_33 : f32 to vector<8x32xf32>
    %67 = arith.addf %66, %65 : vector<8x32xf32>
    %68 = arith.divf %66, %67 : vector<8x32xf32>
    %69 = vector.extract_strided_slice %62 {offsets = [0, 32], sizes = [8, 32], strides = [1, 1]} : vector<8x128xf32> to vector<8x32xf32>
    %70 = arith.negf %69 : vector<8x32xf32>
    %71 = math.exp %70 : vector<8x32xf32>
    %cst_34 = arith.constant 1.000000e+00 : f32
    %72 = vector.broadcast %cst_34 : f32 to vector<8x32xf32>
    %73 = arith.addf %72, %71 : vector<8x32xf32>
    %74 = arith.divf %72, %73 : vector<8x32xf32>
    %75 = vector.extract_strided_slice %62 {offsets = [0, 64], sizes = [8, 32], strides = [1, 1]} : vector<8x128xf32> to vector<8x32xf32>
    %76 = math.tanh %75 : vector<8x32xf32>
    %77 = vector.extract_strided_slice %62 {offsets = [0, 96], sizes = [8, 32], strides = [1, 1]} : vector<8x128xf32> to vector<8x32xf32>
    %78 = arith.negf %77 : vector<8x32xf32>
    %79 = math.exp %78 : vector<8x32xf32>
    %cst_35 = arith.constant 1.000000e+00 : f32
    %80 = vector.broadcast %cst_35 : f32 to vector<8x32xf32>
    %81 = arith.addf %80, %79 : vector<8x32xf32>
    %82 = arith.divf %80, %81 : vector<8x32xf32>
    %83 = arith.mulf %74, %47 : vector<8x32xf32>
    %84 = arith.mulf %68, %76 : vector<8x32xf32>
    %85 = arith.addf %83, %84 : vector<8x32xf32>
    %86 = math.tanh %85 : vector<8x32xf32>
    %87 = arith.mulf %82, %86 : vector<8x32xf32>
    %c0_36 = arith.constant 0 : index
    %88 = arith.index_cast %58 : i32 to index
    %c0_37 = arith.constant 0 : index
    %89 = vector.load %arg7[%c0_36, %88, %c0_37] : memref<1x64x32xf32, #tpu.memory_space<vmem>>, vector<1x8x32xf32>
    %90 = vector.shape_cast %89 : vector<1x8x32xf32> to vector<8x32xf32>
    %91 = vector.shape_cast %87 : vector<8x32xf32> to vector<1x8x32xf32>
    tpu.vector_store %arg7[%c0_36, %88, %c0_37], %91 {strides = array<i32>} : memref<1x64x32xf32, #tpu.memory_space<vmem>>, vector<1x8x32xf32>,
    %c2_i32 = arith.constant 2 : i32
    %c0_i32_38 = arith.constant 0 : i32
    %92 = arith.cmpi eq, %arg0, %c0_i32_38 : i32
    %c7_i32_39 = arith.constant 7 : i32
    %93 = arith.subi %c7_i32_39, %c2_i32 : i32
    %94 = arith.select %92, %c2_i32, %93 : i32
    %c8_i32_40 = arith.constant 8 : i32
    %95 = arith.muli %94, %c8_i32_40 : i32
    %96 = tpu.assume_multiple %95, 8 : i32
    %97 = arith.index_cast %96 : i32 to index
    %c0_41 = arith.constant 0 : index
    %98 = vector.load %arg10[%97, %c0_41] : memref<64x128xf32, #tpu.memory_space<vmem>>, vector<8x128xf32>
    %cst_42 = arith.constant dense<0.000000e+00> : vector<8x128xf32>
    %99 = tpu.matmul %87, %11, %cst_42 {dimension_numbers = #tpu.dot_dimension_numbers<[1], [0], [0], [1], [0, 0, 1, 1], [], []>} : vector<8x32xf32>, vector<32x128xf32>, vector<8x128xf32> -> vector<8x128xf32>
    %100 = arith.addf %98, %99 : vector<8x128xf32>
    %101 = vector.extract_strided_slice %100 {offsets = [0, 0], sizes = [8, 32], strides = [1, 1]} : vector<8x128xf32> to vector<8x32xf32>
    %102 = arith.negf %101 : vector<8x32xf32>
    %103 = math.exp %102 : vector<8x32xf32>
    %cst_43 = arith.constant 1.000000e+00 : f32
    %104 = vector.broadcast %cst_43 : f32 to vector<8x32xf32>
    %105 = arith.addf %104, %103 : vector<8x32xf32>
    %106 = arith.divf %104, %105 : vector<8x32xf32>
    %107 = vector.extract_strided_slice %100 {offsets = [0, 32], sizes = [8, 32], strides = [1, 1]} : vector<8x128xf32> to vector<8x32xf32>
    %108 = arith.negf %107 : vector<8x32xf32>
    %109 = math.exp %108 : vector<8x32xf32>
    %cst_44 = arith.constant 1.000000e+00 : f32
    %110 = vector.broadcast %cst_44 : f32 to vector<8x32xf32>
    %111 = arith.addf %110, %109 : vector<8x32xf32>
    %112 = arith.divf %110, %111 : vector<8x32xf32>
    %113 = vector.extract_strided_slice %100 {offsets = [0, 64], sizes = [8, 32], strides = [1, 1]} : vector<8x128xf32> to vector<8x32xf32>
    %114 = math.tanh %113 : vector<8x32xf32>
    %115 = vector.extract_strided_slice %100 {offsets = [0, 96], sizes = [8, 32], strides = [1, 1]} : vector<8x128xf32> to vector<8x32xf32>
    %116 = arith.negf %115 : vector<8x32xf32>
    %117 = math.exp %116 : vector<8x32xf32>
    %cst_45 = arith.constant 1.000000e+00 : f32
    %118 = vector.broadcast %cst_45 : f32 to vector<8x32xf32>
    %119 = arith.addf %118, %117 : vector<8x32xf32>
    %120 = arith.divf %118, %119 : vector<8x32xf32>
    %121 = arith.mulf %112, %85 : vector<8x32xf32>
    %122 = arith.mulf %106, %114 : vector<8x32xf32>
    %123 = arith.addf %121, %122 : vector<8x32xf32>
    %124 = math.tanh %123 : vector<8x32xf32>
    %125 = arith.mulf %120, %124 : vector<8x32xf32>
    %c0_46 = arith.constant 0 : index
    %126 = arith.index_cast %96 : i32 to index
    %c0_47 = arith.constant 0 : index
    %127 = vector.load %arg7[%c0_46, %126, %c0_47] : memref<1x64x32xf32, #tpu.memory_space<vmem>>, vector<1x8x32xf32>
    %128 = vector.shape_cast %127 : vector<1x8x32xf32> to vector<8x32xf32>
    %129 = vector.shape_cast %125 : vector<8x32xf32> to vector<1x8x32xf32>
    tpu.vector_store %arg7[%c0_46, %126, %c0_47], %129 {strides = array<i32>} : memref<1x64x32xf32, #tpu.memory_space<vmem>>, vector<1x8x32xf32>,
    %c3_i32 = arith.constant 3 : i32
    %c0_i32_48 = arith.constant 0 : i32
    %130 = arith.cmpi eq, %arg0, %c0_i32_48 : i32
    %c7_i32_49 = arith.constant 7 : i32
    %131 = arith.subi %c7_i32_49, %c3_i32 : i32
    %132 = arith.select %130, %c3_i32, %131 : i32
    %c8_i32_50 = arith.constant 8 : i32
    %133 = arith.muli %132, %c8_i32_50 : i32
    %134 = tpu.assume_multiple %133, 8 : i32
    %135 = arith.index_cast %134 : i32 to index
    %c0_51 = arith.constant 0 : index
    %136 = vector.load %arg10[%135, %c0_51] : memref<64x128xf32, #tpu.memory_space<vmem>>, vector<8x128xf32>
    %cst_52 = arith.constant dense<0.000000e+00> : vector<8x128xf32>
    %137 = tpu.matmul %125, %11, %cst_52 {dimension_numbers = #tpu.dot_dimension_numbers<[1], [0], [0], [1], [0, 0, 1, 1], [], []>} : vector<8x32xf32>, vector<32x128xf32>, vector<8x128xf32> -> vector<8x128xf32>
    %138 = arith.addf %136, %137 : vector<8x128xf32>
    %139 = vector.extract_strided_slice %138 {offsets = [0, 0], sizes = [8, 32], strides = [1, 1]} : vector<8x128xf32> to vector<8x32xf32>
    %140 = arith.negf %139 : vector<8x32xf32>
    %141 = math.exp %140 : vector<8x32xf32>
    %cst_53 = arith.constant 1.000000e+00 : f32
    %142 = vector.broadcast %cst_53 : f32 to vector<8x32xf32>
    %143 = arith.addf %142, %141 : vector<8x32xf32>
    %144 = arith.divf %142, %143 : vector<8x32xf32>
    %145 = vector.extract_strided_slice %138 {offsets = [0, 32], sizes = [8, 32], strides = [1, 1]} : vector<8x128xf32> to vector<8x32xf32>
    %146 = arith.negf %145 : vector<8x32xf32>
    %147 = math.exp %146 : vector<8x32xf32>
    %cst_54 = arith.constant 1.000000e+00 : f32
    %148 = vector.broadcast %cst_54 : f32 to vector<8x32xf32>
    %149 = arith.addf %148, %147 : vector<8x32xf32>
    %150 = arith.divf %148, %149 : vector<8x32xf32>
    %151 = vector.extract_strided_slice %138 {offsets = [0, 64], sizes = [8, 32], strides = [1, 1]} : vector<8x128xf32> to vector<8x32xf32>
    %152 = math.tanh %151 : vector<8x32xf32>
    %153 = vector.extract_strided_slice %138 {offsets = [0, 96], sizes = [8, 32], strides = [1, 1]} : vector<8x128xf32> to vector<8x32xf32>
    %154 = arith.negf %153 : vector<8x32xf32>
    %155 = math.exp %154 : vector<8x32xf32>
    %cst_55 = arith.constant 1.000000e+00 : f32
    %156 = vector.broadcast %cst_55 : f32 to vector<8x32xf32>
    %157 = arith.addf %156, %155 : vector<8x32xf32>
    %158 = arith.divf %156, %157 : vector<8x32xf32>
    %159 = arith.mulf %150, %123 : vector<8x32xf32>
    %160 = arith.mulf %144, %152 : vector<8x32xf32>
    %161 = arith.addf %159, %160 : vector<8x32xf32>
    %162 = math.tanh %161 : vector<8x32xf32>
    %163 = arith.mulf %158, %162 : vector<8x32xf32>
    %c0_56 = arith.constant 0 : index
    %164 = arith.index_cast %134 : i32 to index
    %c0_57 = arith.constant 0 : index
    %165 = vector.load %arg7[%c0_56, %164, %c0_57] : memref<1x64x32xf32, #tpu.memory_space<vmem>>, vector<1x8x32xf32>
    %166 = vector.shape_cast %165 : vector<1x8x32xf32> to vector<8x32xf32>
    %167 = vector.shape_cast %163 : vector<8x32xf32> to vector<1x8x32xf32>
    tpu.vector_store %arg7[%c0_56, %164, %c0_57], %167 {strides = array<i32>} : memref<1x64x32xf32, #tpu.memory_space<vmem>>, vector<1x8x32xf32>,
    %c4_i32 = arith.constant 4 : i32
    %c0_i32_58 = arith.constant 0 : i32
    %168 = arith.cmpi eq, %arg0, %c0_i32_58 : i32
    %c7_i32_59 = arith.constant 7 : i32
    %169 = arith.subi %c7_i32_59, %c4_i32 : i32
    %170 = arith.select %168, %c4_i32, %169 : i32
    %c8_i32_60 = arith.constant 8 : i32
    %171 = arith.muli %170, %c8_i32_60 : i32
    %172 = tpu.assume_multiple %171, 8 : i32
    %173 = arith.index_cast %172 : i32 to index
    %c0_61 = arith.constant 0 : index
    %174 = vector.load %arg10[%173, %c0_61] : memref<64x128xf32, #tpu.memory_space<vmem>>, vector<8x128xf32>
    %cst_62 = arith.constant dense<0.000000e+00> : vector<8x128xf32>
    %175 = tpu.matmul %163, %11, %cst_62 {dimension_numbers = #tpu.dot_dimension_numbers<[1], [0], [0], [1], [0, 0, 1, 1], [], []>} : vector<8x32xf32>, vector<32x128xf32>, vector<8x128xf32> -> vector<8x128xf32>
    %176 = arith.addf %174, %175 : vector<8x128xf32>
    %177 = vector.extract_strided_slice %176 {offsets = [0, 0], sizes = [8, 32], strides = [1, 1]} : vector<8x128xf32> to vector<8x32xf32>
    %178 = arith.negf %177 : vector<8x32xf32>
    %179 = math.exp %178 : vector<8x32xf32>
    %cst_63 = arith.constant 1.000000e+00 : f32
    %180 = vector.broadcast %cst_63 : f32 to vector<8x32xf32>
    %181 = arith.addf %180, %179 : vector<8x32xf32>
    %182 = arith.divf %180, %181 : vector<8x32xf32>
    %183 = vector.extract_strided_slice %176 {offsets = [0, 32], sizes = [8, 32], strides = [1, 1]} : vector<8x128xf32> to vector<8x32xf32>
    %184 = arith.negf %183 : vector<8x32xf32>
    %185 = math.exp %184 : vector<8x32xf32>
    %cst_64 = arith.constant 1.000000e+00 : f32
    %186 = vector.broadcast %cst_64 : f32 to vector<8x32xf32>
    %187 = arith.addf %186, %185 : vector<8x32xf32>
    %188 = arith.divf %186, %187 : vector<8x32xf32>
    %189 = vector.extract_strided_slice %176 {offsets = [0, 64], sizes = [8, 32], strides = [1, 1]} : vector<8x128xf32> to vector<8x32xf32>
    %190 = math.tanh %189 : vector<8x32xf32>
    %191 = vector.extract_strided_slice %176 {offsets = [0, 96], sizes = [8, 32], strides = [1, 1]} : vector<8x128xf32> to vector<8x32xf32>
    %192 = arith.negf %191 : vector<8x32xf32>
    %193 = math.exp %192 : vector<8x32xf32>
    %cst_65 = arith.constant 1.000000e+00 : f32
    %194 = vector.broadcast %cst_65 : f32 to vector<8x32xf32>
    %195 = arith.addf %194, %193 : vector<8x32xf32>
    %196 = arith.divf %194, %195 : vector<8x32xf32>
    %197 = arith.mulf %188, %161 : vector<8x32xf32>
    %198 = arith.mulf %182, %190 : vector<8x32xf32>
    %199 = arith.addf %197, %198 : vector<8x32xf32>
    %200 = math.tanh %199 : vector<8x32xf32>
    %201 = arith.mulf %196, %200 : vector<8x32xf32>
    %c0_66 = arith.constant 0 : index
    %202 = arith.index_cast %172 : i32 to index
    %c0_67 = arith.constant 0 : index
    %203 = vector.load %arg7[%c0_66, %202, %c0_67] : memref<1x64x32xf32, #tpu.memory_space<vmem>>, vector<1x8x32xf32>
    %204 = vector.shape_cast %203 : vector<1x8x32xf32> to vector<8x32xf32>
    %205 = vector.shape_cast %201 : vector<8x32xf32> to vector<1x8x32xf32>
    tpu.vector_store %arg7[%c0_66, %202, %c0_67], %205 {strides = array<i32>} : memref<1x64x32xf32, #tpu.memory_space<vmem>>, vector<1x8x32xf32>,
    %c5_i32 = arith.constant 5 : i32
    %c0_i32_68 = arith.constant 0 : i32
    %206 = arith.cmpi eq, %arg0, %c0_i32_68 : i32
    %c7_i32_69 = arith.constant 7 : i32
    %207 = arith.subi %c7_i32_69, %c5_i32 : i32
    %208 = arith.select %206, %c5_i32, %207 : i32
    %c8_i32_70 = arith.constant 8 : i32
    %209 = arith.muli %208, %c8_i32_70 : i32
    %210 = tpu.assume_multiple %209, 8 : i32
    %211 = arith.index_cast %210 : i32 to index
    %c0_71 = arith.constant 0 : index
    %212 = vector.load %arg10[%211, %c0_71] : memref<64x128xf32, #tpu.memory_space<vmem>>, vector<8x128xf32>
    %cst_72 = arith.constant dense<0.000000e+00> : vector<8x128xf32>
    %213 = tpu.matmul %201, %11, %cst_72 {dimension_numbers = #tpu.dot_dimension_numbers<[1], [0], [0], [1], [0, 0, 1, 1], [], []>} : vector<8x32xf32>, vector<32x128xf32>, vector<8x128xf32> -> vector<8x128xf32>
    %214 = arith.addf %212, %213 : vector<8x128xf32>
    %215 = vector.extract_strided_slice %214 {offsets = [0, 0], sizes = [8, 32], strides = [1, 1]} : vector<8x128xf32> to vector<8x32xf32>
    %216 = arith.negf %215 : vector<8x32xf32>
    %217 = math.exp %216 : vector<8x32xf32>
    %cst_73 = arith.constant 1.000000e+00 : f32
    %218 = vector.broadcast %cst_73 : f32 to vector<8x32xf32>
    %219 = arith.addf %218, %217 : vector<8x32xf32>
    %220 = arith.divf %218, %219 : vector<8x32xf32>
    %221 = vector.extract_strided_slice %214 {offsets = [0, 32], sizes = [8, 32], strides = [1, 1]} : vector<8x128xf32> to vector<8x32xf32>
    %222 = arith.negf %221 : vector<8x32xf32>
    %223 = math.exp %222 : vector<8x32xf32>
    %cst_74 = arith.constant 1.000000e+00 : f32
    %224 = vector.broadcast %cst_74 : f32 to vector<8x32xf32>
    %225 = arith.addf %224, %223 : vector<8x32xf32>
    %226 = arith.divf %224, %225 : vector<8x32xf32>
    %227 = vector.extract_strided_slice %214 {offsets = [0, 64], sizes = [8, 32], strides = [1, 1]} : vector<8x128xf32> to vector<8x32xf32>
    %228 = math.tanh %227 : vector<8x32xf32>
    %229 = vector.extract_strided_slice %214 {offsets = [0, 96], sizes = [8, 32], strides = [1, 1]} : vector<8x128xf32> to vector<8x32xf32>
    %230 = arith.negf %229 : vector<8x32xf32>
    %231 = math.exp %230 : vector<8x32xf32>
    %cst_75 = arith.constant 1.000000e+00 : f32
    %232 = vector.broadcast %cst_75 : f32 to vector<8x32xf32>
    %233 = arith.addf %232, %231 : vector<8x32xf32>
    %234 = arith.divf %232, %233 : vector<8x32xf32>
    %235 = arith.mulf %226, %199 : vector<8x32xf32>
    %236 = arith.mulf %220, %228 : vector<8x32xf32>
    %237 = arith.addf %235, %236 : vector<8x32xf32>
    %238 = math.tanh %237 : vector<8x32xf32>
    %239 = arith.mulf %234, %238 : vector<8x32xf32>
    %c0_76 = arith.constant 0 : index
    %240 = arith.index_cast %210 : i32 to index
    %c0_77 = arith.constant 0 : index
    %241 = vector.load %arg7[%c0_76, %240, %c0_77] : memref<1x64x32xf32, #tpu.memory_space<vmem>>, vector<1x8x32xf32>
    %242 = vector.shape_cast %241 : vector<1x8x32xf32> to vector<8x32xf32>
    %243 = vector.shape_cast %239 : vector<8x32xf32> to vector<1x8x32xf32>
    tpu.vector_store %arg7[%c0_76, %240, %c0_77], %243 {strides = array<i32>} : memref<1x64x32xf32, #tpu.memory_space<vmem>>, vector<1x8x32xf32>,
    %c6_i32 = arith.constant 6 : i32
    %c0_i32_78 = arith.constant 0 : i32
    %244 = arith.cmpi eq, %arg0, %c0_i32_78 : i32
    %c7_i32_79 = arith.constant 7 : i32
    %245 = arith.subi %c7_i32_79, %c6_i32 : i32
    %246 = arith.select %244, %c6_i32, %245 : i32
    %c8_i32_80 = arith.constant 8 : i32
    %247 = arith.muli %246, %c8_i32_80 : i32
    %248 = tpu.assume_multiple %247, 8 : i32
    %249 = arith.index_cast %248 : i32 to index
    %c0_81 = arith.constant 0 : index
    %250 = vector.load %arg10[%249, %c0_81] : memref<64x128xf32, #tpu.memory_space<vmem>>, vector<8x128xf32>
    %cst_82 = arith.constant dense<0.000000e+00> : vector<8x128xf32>
    %251 = tpu.matmul %239, %11, %cst_82 {dimension_numbers = #tpu.dot_dimension_numbers<[1], [0], [0], [1], [0, 0, 1, 1], [], []>} : vector<8x32xf32>, vector<32x128xf32>, vector<8x128xf32> -> vector<8x128xf32>
    %252 = arith.addf %250, %251 : vector<8x128xf32>
    %253 = vector.extract_strided_slice %252 {offsets = [0, 0], sizes = [8, 32], strides = [1, 1]} : vector<8x128xf32> to vector<8x32xf32>
    %254 = arith.negf %253 : vector<8x32xf32>
    %255 = math.exp %254 : vector<8x32xf32>
    %cst_83 = arith.constant 1.000000e+00 : f32
    %256 = vector.broadcast %cst_83 : f32 to vector<8x32xf32>
    %257 = arith.addf %256, %255 : vector<8x32xf32>
    %258 = arith.divf %256, %257 : vector<8x32xf32>
    %259 = vector.extract_strided_slice %252 {offsets = [0, 32], sizes = [8, 32], strides = [1, 1]} : vector<8x128xf32> to vector<8x32xf32>
    %260 = arith.negf %259 : vector<8x32xf32>
    %261 = math.exp %260 : vector<8x32xf32>
    %cst_84 = arith.constant 1.000000e+00 : f32
    %262 = vector.broadcast %cst_84 : f32 to vector<8x32xf32>
    %263 = arith.addf %262, %261 : vector<8x32xf32>
    %264 = arith.divf %262, %263 : vector<8x32xf32>
    %265 = vector.extract_strided_slice %252 {offsets = [0, 64], sizes = [8, 32], strides = [1, 1]} : vector<8x128xf32> to vector<8x32xf32>
    %266 = math.tanh %265 : vector<8x32xf32>
    %267 = vector.extract_strided_slice %252 {offsets = [0, 96], sizes = [8, 32], strides = [1, 1]} : vector<8x128xf32> to vector<8x32xf32>
    %268 = arith.negf %267 : vector<8x32xf32>
    %269 = math.exp %268 : vector<8x32xf32>
    %cst_85 = arith.constant 1.000000e+00 : f32
    %270 = vector.broadcast %cst_85 : f32 to vector<8x32xf32>
    %271 = arith.addf %270, %269 : vector<8x32xf32>
    %272 = arith.divf %270, %271 : vector<8x32xf32>
    %273 = arith.mulf %264, %237 : vector<8x32xf32>
    %274 = arith.mulf %258, %266 : vector<8x32xf32>
    %275 = arith.addf %273, %274 : vector<8x32xf32>
    %276 = math.tanh %275 : vector<8x32xf32>
    %277 = arith.mulf %272, %276 : vector<8x32xf32>
    %c0_86 = arith.constant 0 : index
    %278 = arith.index_cast %248 : i32 to index
    %c0_87 = arith.constant 0 : index
    %279 = vector.load %arg7[%c0_86, %278, %c0_87] : memref<1x64x32xf32, #tpu.memory_space<vmem>>, vector<1x8x32xf32>
    %280 = vector.shape_cast %279 : vector<1x8x32xf32> to vector<8x32xf32>
    %281 = vector.shape_cast %277 : vector<8x32xf32> to vector<1x8x32xf32>
    tpu.vector_store %arg7[%c0_86, %278, %c0_87], %281 {strides = array<i32>} : memref<1x64x32xf32, #tpu.memory_space<vmem>>, vector<1x8x32xf32>,
    %c7_i32_88 = arith.constant 7 : i32
    %c0_i32_89 = arith.constant 0 : i32
    %282 = arith.cmpi eq, %arg0, %c0_i32_89 : i32
    %c7_i32_90 = arith.constant 7 : i32
    %283 = arith.subi %c7_i32_90, %c7_i32_88 : i32
    %284 = arith.select %282, %c7_i32_88, %283 : i32
    %c8_i32_91 = arith.constant 8 : i32
    %285 = arith.muli %284, %c8_i32_91 : i32
    %286 = tpu.assume_multiple %285, 8 : i32
    %287 = arith.index_cast %286 : i32 to index
    %c0_92 = arith.constant 0 : index
    %288 = vector.load %arg10[%287, %c0_92] : memref<64x128xf32, #tpu.memory_space<vmem>>, vector<8x128xf32>
    %cst_93 = arith.constant dense<0.000000e+00> : vector<8x128xf32>
    %289 = tpu.matmul %277, %11, %cst_93 {dimension_numbers = #tpu.dot_dimension_numbers<[1], [0], [0], [1], [0, 0, 1, 1], [], []>} : vector<8x32xf32>, vector<32x128xf32>, vector<8x128xf32> -> vector<8x128xf32>
    %290 = arith.addf %288, %289 : vector<8x128xf32>
    %291 = vector.extract_strided_slice %290 {offsets = [0, 0], sizes = [8, 32], strides = [1, 1]} : vector<8x128xf32> to vector<8x32xf32>
    %292 = arith.negf %291 : vector<8x32xf32>
    %293 = math.exp %292 : vector<8x32xf32>
    %cst_94 = arith.constant 1.000000e+00 : f32
    %294 = vector.broadcast %cst_94 : f32 to vector<8x32xf32>
    %295 = arith.addf %294, %293 : vector<8x32xf32>
    %296 = arith.divf %294, %295 : vector<8x32xf32>
    %297 = vector.extract_strided_slice %290 {offsets = [0, 32], sizes = [8, 32], strides = [1, 1]} : vector<8x128xf32> to vector<8x32xf32>
    %298 = arith.negf %297 : vector<8x32xf32>
    %299 = math.exp %298 : vector<8x32xf32>
    %cst_95 = arith.constant 1.000000e+00 : f32
    %300 = vector.broadcast %cst_95 : f32 to vector<8x32xf32>
    %301 = arith.addf %300, %299 : vector<8x32xf32>
    %302 = arith.divf %300, %301 : vector<8x32xf32>
    %303 = vector.extract_strided_slice %290 {offsets = [0, 64], sizes = [8, 32], strides = [1, 1]} : vector<8x128xf32> to vector<8x32xf32>
    %304 = math.tanh %303 : vector<8x32xf32>
    %305 = vector.extract_strided_slice %290 {offsets = [0, 96], sizes = [8, 32], strides = [1, 1]} : vector<8x128xf32> to vector<8x32xf32>
    %306 = arith.negf %305 : vector<8x32xf32>
    %307 = math.exp %306 : vector<8x32xf32>
    %cst_96 = arith.constant 1.000000e+00 : f32
    %308 = vector.broadcast %cst_96 : f32 to vector<8x32xf32>
    %309 = arith.addf %308, %307 : vector<8x32xf32>
    %310 = arith.divf %308, %309 : vector<8x32xf32>
    %311 = arith.mulf %302, %275 : vector<8x32xf32>
    %312 = arith.mulf %296, %304 : vector<8x32xf32>
    %313 = arith.addf %311, %312 : vector<8x32xf32>
    %314 = math.tanh %313 : vector<8x32xf32>
    %315 = arith.mulf %310, %314 : vector<8x32xf32>
    %c0_97 = arith.constant 0 : index
    %316 = arith.index_cast %286 : i32 to index
    %c0_98 = arith.constant 0 : index
    %317 = vector.load %arg7[%c0_97, %316, %c0_98] : memref<1x64x32xf32, #tpu.memory_space<vmem>>, vector<1x8x32xf32>
    %318 = vector.shape_cast %317 : vector<1x8x32xf32> to vector<8x32xf32>
    %319 = vector.shape_cast %315 : vector<8x32xf32> to vector<1x8x32xf32>
    tpu.vector_store %arg7[%c0_97, %316, %c0_98], %319 {strides = array<i32>} : memref<1x64x32xf32, #tpu.memory_space<vmem>>, vector<1x8x32xf32>,
    %c8_i32_99 = arith.constant 8 : i32
    %c0_100 = arith.constant 0 : index
    %c0_101 = arith.constant 0 : index
    %c0_102 = arith.constant 0 : index
    %320 = vector.load %arg8[%c0_100, %c0_101, %c0_102] : memref<1x8x32xf32, #tpu.memory_space<vmem>>, vector<1x8x32xf32>
    %321 = vector.shape_cast %320 : vector<1x8x32xf32> to vector<8x32xf32>
    %322 = vector.shape_cast %315 : vector<8x32xf32> to vector<1x8x32xf32>
    tpu.vector_store %arg8[%c0_100, %c0_101, %c0_102], %322 {strides = array<i32>} : memref<1x8x32xf32, #tpu.memory_space<vmem>>, vector<1x8x32xf32>,
    %c0_103 = arith.constant 0 : index
    %c0_104 = arith.constant 0 : index
    %c0_105 = arith.constant 0 : index
    %323 = vector.load %arg9[%c0_103, %c0_104, %c0_105] : memref<1x8x32xf32, #tpu.memory_space<vmem>>, vector<1x8x32xf32>
    %324 = vector.shape_cast %323 : vector<1x8x32xf32> to vector<8x32xf32>
    %325 = vector.shape_cast %313 : vector<8x32xf32> to vector<1x8x32xf32>
    tpu.vector_store %arg9[%c0_103, %c0_104, %c0_105], %325 {strides = array<i32>} : memref<1x8x32xf32, #tpu.memory_space<vmem>>, vector<1x8x32xf32>,
    return
  }
  func.func @transform_0(%arg0: i32) -> (i32, i32, i32) {
    %c0_i32 = arith.constant 0 : i32
    %c0_i32_0 = arith.constant 0 : i32
    %c0_i32_1 = arith.constant 0 : i32
    %c0_i32_2 = arith.constant 0 : i32
    return %c0_i32, %c0_i32_0, %c0_i32_1 : i32, i32, i32
  }
  func.func @transform_1(%arg0: i32) -> (i32, i32, i32) {
    %c0_i32 = arith.constant 0 : i32
    %c0_i32_0 = arith.constant 0 : i32
    %c0_i32_1 = arith.constant 0 : i32
    return %arg0, %c0_i32, %c0_i32_0 : i32, i32, i32
  }
  func.func @transform_2(%arg0: i32) -> (i32, i32, i32) {
    %c0_i32 = arith.constant 0 : i32
    %c0_i32_0 = arith.constant 0 : i32
    %c0_i32_1 = arith.constant 0 : i32
    return %arg0, %c0_i32, %c0_i32_0 : i32, i32, i32
  }
  func.func @transform_3(%arg0: i32) -> (i32, i32, i32, i32) {
    %c0_i32 = arith.constant 0 : i32
    %c0_i32_0 = arith.constant 0 : i32
    %c0_i32_1 = arith.constant 0 : i32
    %c0_i32_2 = arith.constant 0 : i32
    return %arg0, %c0_i32, %c0_i32_0, %c0_i32_1 : i32, i32, i32, i32
  }
  func.func @transform_4(%arg0: i32) -> (i32, i32, i32) {
    %c0_i32 = arith.constant 0 : i32
    %c0_i32_0 = arith.constant 0 : i32
    %c0_i32_1 = arith.constant 0 : i32
    return %arg0, %c0_i32, %c0_i32_0 : i32, i32, i32
  }
  func.func @transform_5(%arg0: i32) -> (i32, i32, i32) {
    %c0_i32 = arith.constant 0 : i32
    %c0_i32_0 = arith.constant 0 : i32
    %c0_i32_1 = arith.constant 0 : i32
    return %arg0, %c0_i32, %c0_i32_0 : i32, i32, i32
  }
  func.func @transform_6(%arg0: i32) -> (i32, i32, i32) {
    %c0_i32 = arith.constant 0 : i32
    %c0_i32_0 = arith.constant 0 : i32
    %c0_i32_1 = arith.constant 0 : i32
    return %arg0, %c0_i32, %c0_i32_0 : i32, i32, i32
  }
  func.func @transform_7(%arg0: i32) -> (i32, i32, i32) {
    %c0_i32 = arith.constant 0 : i32
    %c0_i32_0 = arith.constant 0 : i32
    %c0_i32_1 = arith.constant 0 : i32
    return %arg0, %c0_i32, %c0_i32_0 : i32, i32, i32
  }
  func.func @transform_8(%arg0: i32) -> (i32, i32, i32) {
    %c0_i32 = arith.constant 0 : i32
    %c0_i32_0 = arith.constant 0 : i32
    %c0_i32_1 = arith.constant 0 : i32
    return %arg0, %c0_i32, %c0_i32_0 : i32, i32, i32
  }
}

</mosaic_0001>

<llo_original>
// kernel: encoder_forward.2
$region0: #{encoder_forward.2}
  #allocation0 [shape = 'u32[]', space=smem, size = 0x4, offset = 0x4, fixed_abs, tag = 'smem constant byte address 0x4 - core index']
  #allocation1 [shape = 'u32[72,128]{1,0:T(1,128)}', space=vmem, size = 0x9000, scoped, tag = 'internal scratch']
  #allocation2 [shape = 'f32[64,128]{1,0:T(8,128)}', space=vmem, size = 0x8000, scoped, tag = 'scratch operand']
  %s0 = inlined_call_operand.vmem [shape: f32[1,64,32], index: 0, kind: input, shape index: {}]
  %s1 = inlined_call_operand.vmem [shape: f32[2,8,32], index: 1, kind: input, shape index: {}]
  %s2 = inlined_call_operand.vmem [shape: f32[2,8,32], index: 2, kind: input, shape index: {}]
  %s3 = inlined_call_operand.vmem [shape: f32[2,1,32,128], index: 3, kind: input, shape index: {}]
  %s4 = inlined_call_operand.vmem [shape: f32[2,32,128], index: 4, kind: input, shape index: {}]
  %s5 = inlined_call_operand.vmem [shape: f32[2,1,128], index: 5, kind: input, shape index: {}]
  %s6 = inlined_call_operand.vmem [shape: f32[2,64,32], index: 6, kind: output, shape index: {0}]
  %s7 = inlined_call_operand.vmem [shape: f32[2,8,32], index: 7, kind: output, shape index: {1}]
  %s8 = inlined_call_operand.vmem [shape: f32[2,8,32], index: 8, kind: output, shape index: {2}]
  %9 = xla_tuple %s6, %s7, %s8
  %s10 = sld [smem:[#allocation0]]
  $region73: #{encoder_forward.2} parent=0
    _
  %s12 = ssub.s32 1, %s10
  %s13 = scalar_select 0, %s12, %s10
  loop: start=0, step=1, limit=4
  $region2: #{encoder_forward.2} parent=0 // loop_pre_header
    _
  $region3: #{encoder_forward.2} parent=0 // loop_header
    %s15 = sphi 0, %s19
    %p16 = scmp.ge.s32.totalorder %s15, 4
    %s23 = sphi 0, %s23
    %s25 = sphi 0, %s23
    %s26 = sphi 0, %s25
    %s40 = sphi 0, %s26
    %s46 = sphi 0, %s48
    %s49 = sphi 0, %s46
    %s50 = sphi 0, %s49
    %s66 = sphi 0, %s50
    %s72 = sphi 0, %s74
    %s75 = sphi 0, %s72
    %s76 = sphi 0, %s75
    %s92 = sphi 0, %s76
    %s98 = sphi 0, %s100
    %s101 = sphi 0, %s98
    %s102 = sphi 0, %s101
    %s118 = sphi 0, %s102
    %s124 = sphi 0, %s126
    %s127 = sphi 0, %s124
    %s128 = sphi 0, %s127
    %s144 = sphi 0, %s128
    %s150 = sphi 0, %s152
    %s153 = sphi 0, %s150
    %s154 = sphi 0, %s153
    %s170 = sphi 0, %s154
    %s176 = sphi 0, %s178
    %s179 = sphi 0, %s176
    %s180 = sphi 0, %s179
    %s196 = sphi 0, %s180
    %s202 = sphi 0, %s204
    %s205 = sphi 0, %s202
    %s206 = sphi 0, %s205
    %s222 = sphi 0, %s206
    %s228 = sphi 0, %s230
    %s231 = sphi 0, %s228
    %s232 = sphi 0, %s231
    %s248 = sphi 0, %s232
  $region4: #{encoder_forward.2} parent=0 // loop_header_branch
    %18 = sbr.rel (%p16) target = $region8
  $region5: #{encoder_forward.2} parent=0 // loop_body
    %s20 = ssub.s32 %s15, 1
    %s21 = ssub.s32 %s15, 2
    %s22 = sadd.s32 %s15, 1
    %s24 = sadd.s32 %s23, 1
    %p27 = scmp.eq.s32.totalorder %s15, 1
    %p28 = scmp.ne.s32.totalorder %s23, %s25
    %p29 = scmp.eq.s32.totalorder %s15, 0
    %p30 = por %p28, %p29
    %p31 = scmp.ne.s32.totalorder %s23, %s25
    %p32 = scmp.eq.s32.totalorder %s20, 1
    %p33 = por %p31, %p32
    %p34 = scmp.ne.s32.totalorder %s25, %s26
    %p35 = scmp.eq.s32.totalorder %s20, 0
    %p36 = por %p34, %p35
    %p37 = scmp.ne.s32.totalorder %s25, %s26
    %p38 = scmp.eq.s32.totalorder %s21, 1
    %p39 = por %p37, %p38
    %p41 = scmp.ne.s32.totalorder %s26, %s40
    %p42 = scmp.eq.s32.totalorder %s21, 0
    %p43 = por %p41, %p42
    %s44 = ssub.s32 %s15, %s22
    %p45 = scmp.eq.s32.totalorder %s44, 0
    %s47 = sadd.s32 %s46, 1
    %s48 = scalar_select %p45, %s46, %s47
    %p51 = pneg %p45
    %p52 = scmp.eq.s32.totalorder %s15, 1
    %p53 = por %p51, %p52
    %p54 = scmp.ne.s32.totalorder %s46, %s49
    %p55 = scmp.eq.s32.totalorder %s15, 0
    %p56 = por %p54, %p55
    %p57 = scmp.ne.s32.totalorder %s46, %s49
    %p58 = scmp.eq.s32.totalorder %s20, 1
    %p59 = por %p57, %p58
    %p60 = scmp.ne.s32.totalorder %s49, %s50
    %p61 = scmp.eq.s32.totalorder %s20, 0
    %p62 = por %p60, %p61
    %p63 = scmp.ne.s32.totalorder %s49, %s50
    %p64 = scmp.eq.s32.totalorder %s21, 1
    %p65 = por %p63, %p64
    %p67 = scmp.ne.s32.totalorder %s50, %s66
    %p68 = scmp.eq.s32.totalorder %s21, 0
    %p69 = por %p67, %p68
    %s70 = ssub.s32 %s15, %s22
    %p71 = scmp.eq.s32.totalorder %s70, 0
    %s73 = sadd.s32 %s72, 1
    %s74 = scalar_select %p71, %s72, %s73
    %p77 = pneg %p71
    %p78 = scmp.eq.s32.totalorder %s15, 1
    %p79 = por %p77, %p78
    %p80 = scmp.ne.s32.totalorder %s72, %s75
    %p81 = scmp.eq.s32.totalorder %s15, 0
    %p82 = por %p80, %p81
    %p83 = scmp.ne.s32.totalorder %s72, %s75
    %p84 = scmp.eq.s32.totalorder %s20, 1
    %p85 = por %p83, %p84
    %p86 = scmp.ne.s32.totalorder %s75, %s76
    %p87 = scmp.eq.s32.totalorder %s20, 0
    %p88 = por %p86, %p87
    %p89 = scmp.ne.s32.totalorder %s75, %s76
    %p90 = scmp.eq.s32.totalorder %s21, 1
    %p91 = por %p89, %p90
    %p93 = scmp.ne.s32.totalorder %s76, %s92
    %p94 = scmp.eq.s32.totalorder %s21, 0
    %p95 = por %p93, %p94
    %s96 = ssub.s32 %s15, %s22
    %p97 = scmp.eq.s32.totalorder %s96, 0
    %s99 = sadd.s32 %s98, 1
    %s100 = scalar_select %p97, %s98, %s99
    %p103 = pneg %p97
    %p104 = scmp.eq.s32.totalorder %s15, 1
    %p105 = por %p103, %p104
    %p106 = scmp.ne.s32.totalorder %s98, %s101
    %p107 = scmp.eq.s32.totalorder %s15, 0
    %p108 = por %p106, %p107
    %p109 = scmp.ne.s32.totalorder %s98, %s101
    %p110 = scmp.eq.s32.totalorder %s20, 1
    %p111 = por %p109, %p110
    %p112 = scmp.ne.s32.totalorder %s101, %s102
    %p113 = scmp.eq.s32.totalorder %s20, 0
    %p114 = por %p112, %p113
    %p115 = scmp.ne.s32.totalorder %s101, %s102
    %p116 = scmp.eq.s32.totalorder %s21, 1
    %p117 = por %p115, %p116
    %p119 = scmp.ne.s32.totalorder %s102, %s118
    %p120 = scmp.eq.s32.totalorder %s21, 0
    %p121 = por %p119, %p120
    %s122 = ssub.s32 %s15, %s22
    %p123 = scmp.eq.s32.totalorder %s122, 0
    %s125 = sadd.s32 %s124, 1
    %s126 = scalar_select %p123, %s124, %s125
    %p129 = pneg %p123
    %p130 = scmp.eq.s32.totalorder %s15, 1
    %p131 = por %p129, %p130
    %p132 = scmp.ne.s32.totalorder %s124, %s127
    %p133 = scmp.eq.s32.totalorder %s15, 0
    %p134 = por %p132, %p133
    %p135 = scmp.ne.s32.totalorder %s124, %s127
    %p136 = scmp.eq.s32.totalorder %s20, 1
    %p137 = por %p135, %p136
    %p138 = scmp.ne.s32.totalorder %s127, %s128
    %p139 = scmp.eq.s32.totalorder %s20, 0
    %p140 = por %p138, %p139
    %p141 = scmp.ne.s32.totalorder %s127, %s128
    %p142 = scmp.eq.s32.totalorder %s21, 1
    %p143 = por %p141, %p142
    %p145 = scmp.ne.s32.totalorder %s128, %s144
    %p146 = scmp.eq.s32.totalorder %s21, 0
    %p147 = por %p145, %p146
    %s148 = ssub.s32 %s15, %s22
    %p149 = scmp.eq.s32.totalorder %s148, 0
    %s151 = sadd.s32 %s150, 1
    %s152 = scalar_select %p149, %s150, %s151
    %p155 = pneg %p149
    %p156 = scmp.eq.s32.totalorder %s15, 1
    %p157 = por %p155, %p156
    %p158 = scmp.ne.s32.totalorder %s150, %s153
    %p159 = scmp.eq.s32.totalorder %s15, 0
    %p160 = por %p158, %p159
    %p161 = scmp.ne.s32.totalorder %s150, %s153
    %p162 = scmp.eq.s32.totalorder %s20, 1
    %p163 = por %p161, %p162
    %p164 = scmp.ne.s32.totalorder %s153, %s154
    %p165 = scmp.eq.s32.totalorder %s20, 0
    %p166 = por %p164, %p165
    %p167 = scmp.ne.s32.totalorder %s153, %s154
    %p168 = scmp.eq.s32.totalorder %s21, 1
    %p169 = por %p167, %p168
    %p171 = scmp.ne.s32.totalorder %s154, %s170
    %p172 = scmp.eq.s32.totalorder %s21, 0
    %p173 = por %p171, %p172
    %s174 = ssub.s32 %s15, %s22
    %p175 = scmp.eq.s32.totalorder %s174, 0
    %s177 = sadd.s32 %s176, 1
    %s178 = scalar_select %p175, %s176, %s177
    %p181 = pneg %p175
    %p182 = scmp.eq.s32.totalorder %s15, 1
    %p183 = por %p181, %p182
    %p184 = scmp.ne.s32.totalorder %s176, %s179
    %p185 = scmp.eq.s32.totalorder %s15, 0
    %p186 = por %p184, %p185
    %p187 = scmp.ne.s32.totalorder %s176, %s179
    %p188 = scmp.eq.s32.totalorder %s20, 1
    %p189 = por %p187, %p188
    %p190 = scmp.ne.s32.totalorder %s179, %s180
    %p191 = scmp.eq.s32.totalorder %s20, 0
    %p192 = por %p190, %p191
    %p193 = scmp.ne.s32.totalorder %s179, %s180
    %p194 = scmp.eq.s32.totalorder %s21, 1
    %p195 = por %p193, %p194
    %p197 = scmp.ne.s32.totalorder %s180, %s196
    %p198 = scmp.eq.s32.totalorder %s21, 0
    %p199 = por %p197, %p198
    %s200 = ssub.s32 %s15, %s22
    %p201 = scmp.eq.s32.totalorder %s200, 0
    %s203 = sadd.s32 %s202, 1
    %s204 = scalar_select %p201, %s202, %s203
    %p207 = pneg %p201
    %p208 = scmp.eq.s32.totalorder %s15, 1
    %p209 = por %p207, %p208
    %p210 = scmp.ne.s32.totalorder %s202, %s205
    %p211 = scmp.eq.s32.totalorder %s15, 0
    %p212 = por %p210, %p211
    %p213 = scmp.ne.s32.totalorder %s202, %s205
    %p214 = scmp.eq.s32.totalorder %s20, 1
    %p215 = por %p213, %p214
    %p216 = scmp.ne.s32.totalorder %s205, %s206
    %p217 = scmp.eq.s32.totalorder %s20, 0
    %p218 = por %p216, %p217
    %p219 = scmp.ne.s32.totalorder %s205, %s206
    %p220 = scmp.eq.s32.totalorder %s21, 1
    %p221 = por %p219, %p220
    %p223 = scmp.ne.s32.totalorder %s206, %s222
    %p224 = scmp.eq.s32.totalorder %s21, 0
    %p225 = por %p223, %p224
    %s226 = ssub.s32 %s15, %s22
    %p227 = scmp.eq.s32.totalorder %s226, 0
    %s229 = sadd.s32 %s228, 1
    %s230 = scalar_select %p227, %s228, %s229
    %p233 = pneg %p227
    %p234 = scmp.eq.s32.totalorder %s15, 1
    %p235 = por %p233, %p234
    %p236 = scmp.ne.s32.totalorder %s228, %s231
    %p237 = scmp.eq.s32.totalorder %s15, 0
    %p238 = por %p236, %p237
    %p239 = scmp.ne.s32.totalorder %s228, %s231
    %p240 = scmp.eq.s32.totalorder %s20, 1
    %p241 = por %p239, %p240
    %p242 = scmp.ne.s32.totalorder %s231, %s232
    %p243 = scmp.eq.s32.totalorder %s20, 0
    %p244 = por %p242, %p243
    %p245 = scmp.ne.s32.totalorder %s231, %s232
    %p246 = scmp.eq.s32.totalorder %s21, 1
    %p247 = por %p245, %p246
    %p249 = scmp.ne.s32.totalorder %s232, %s248
    %p250 = scmp.eq.s32.totalorder %s21, 0
    %p251 = por %p249, %p250
    %p252 = scmp.le.s32.totalorder 1, %s15
    %p253 = scmp.lt.s32.totalorder %s15, 3
    %p254 = pnand %p252, %p253
    %p255 = pneg %p254
    // Predicated region
    $region9: #{encoder_forward.2} parent=5 // pred_check
      _
    $region10: #{encoder_forward.2} parent=5 // pred_check_branch
      %257 = sbr.rel (%p254) target = $region12
    $region11: #{encoder_forward.2} parent=5 // pred_region
      %s258 = ssub.s32 %s15, 1
      // Predicated region
      $region13: #{encoder_forward.2} parent=11 // pred_check
        %p259 = pneg %p36
      $region14: #{encoder_forward.2} parent=11 // pred_check_branch
        %261 = sbr.rel (%p259) target = $region16
      $region15: #{encoder_forward.2} parent=11 // pred_region
        _
      $region16: #{encoder_forward.2} parent=11 // pred_fallthru
        _
    $region12: #{encoder_forward.2} parent=5 // pred_fallthru
      _
    %p262 = scmp.lt.s32.totalorder %s15, 2
    // Predicated region
    $region17: #{encoder_forward.2} parent=5 // pred_check
      %p263 = pneg %p262
    $region18: #{encoder_forward.2} parent=5 // pred_check_branch
      %265 = sbr.rel (%p263) target = $region20
    $region19: #{encoder_forward.2} parent=5 // pred_region
      // Predicated region
      $region21: #{encoder_forward.2} parent=19 // pred_check
        %p266 = pneg %p56
      $region22: #{encoder_forward.2} parent=19 // pred_check_branch
        %268 = sbr.rel (%p266) target = $region24
      $region23: #{encoder_forward.2} parent=19 // pred_region
        %p269 = scmp.lt.s32.totalorder %s15, 1
        %s270 = scalar_select %p269, %s15, 1
        %s271 = smul.addr %s270, 8
        %s272 = scalar_lea.vmem %s1, %s271
      $region24: #{encoder_forward.2} parent=19 // pred_fallthru
        _
      // Predicated region
      $region25: #{encoder_forward.2} parent=19 // pred_check
        %p273 = pneg %p82
      $region26: #{encoder_forward.2} parent=19 // pred_check_branch
        %275 = sbr.rel (%p273) target = $region28
      $region27: #{encoder_forward.2} parent=19 // pred_region
        %p276 = scmp.lt.s32.totalorder %s15, 1
        %s277 = scalar_select %p276, %s15, 1
        %s278 = smul.addr %s277, 8
        %s279 = scalar_lea.vmem %s2, %s278
      $region28: #{encoder_forward.2} parent=19 // pred_fallthru
        _
      // Predicated region
      $region29: #{encoder_forward.2} parent=19 // pred_check
        %p280 = pneg %p108
      $region30: #{encoder_forward.2} parent=19 // pred_check_branch
        %282 = sbr.rel (%p280) target = $region32
      $region31: #{encoder_forward.2} parent=19 // pred_region
        %p283 = scmp.lt.s32.totalorder %s15, 1
        %s284 = scalar_select %p283, %s15, 1
        %s285 = smul.addr %s284, 4
        %s286 = smul.addr %s285, 8
        %s287 = scalar_lea.vmem %s3, %s286
      $region32: #{encoder_forward.2} parent=19 // pred_fallthru
        _
      // Predicated region
      $region33: #{encoder_forward.2} parent=19 // pred_check
        %p288 = pneg %p134
      $region34: #{encoder_forward.2} parent=19 // pred_check_branch
        %290 = sbr.rel (%p288) target = $region36
      $region35: #{encoder_forward.2} parent=19 // pred_region
        %p291 = scmp.lt.s32.totalorder %s15, 1
        %s292 = scalar_select %p291, %s15, 1
        %s293 = smul.addr %s292, 4
        %s294 = smul.addr %s293, 8
        %s295 = scalar_lea.vmem %s4, %s294
      $region36: #{encoder_forward.2} parent=19 // pred_fallthru
        _
      // Predicated region
      $region37: #{encoder_forward.2} parent=19 // pred_check
        %p296 = pneg %p160
      $region38: #{encoder_forward.2} parent=19 // pred_check_branch
        %298 = sbr.rel (%p296) target = $region40
      $region39: #{encoder_forward.2} parent=19 // pred_region
        %p299 = scmp.lt.s32.totalorder %s15, 1
        %s300 = scalar_select %p299, %s15, 1
        %s301 = scalar_lea.vmem %s5, %s300
      $region40: #{encoder_forward.2} parent=19 // pred_fallthru
        _
    $region20: #{encoder_forward.2} parent=5 // pred_fallthru
      _
    %p302 = scmp.le.s32.totalorder 1, %s15
    %p303 = scmp.lt.s32.totalorder %s15, 3
    %p304 = pnand %p302, %p303
    %p305 = pneg %p304
    // Predicated region
    $region41: #{encoder_forward.2} parent=5 // pred_check
      _
    $region42: #{encoder_forward.2} parent=5 // pred_check_branch
      %307 = sbr.rel (%p304) target = $region44
    $region43: #{encoder_forward.2} parent=5 // pred_region
      %s308 = ssub.s32 %s15, 1
      %p309 = pneg %p36
      %p310 = pneg %p33
      %p311 = scmp.lt.s32.totalorder %s20, 1
      %s312 = scalar_select %p311, %s20, 1
      %s313 = smul.addr %s312, 8
      %s314 = scalar_lea.vmem %s1, %s313
      %p315 = pneg %p62
      %p316 = pneg %p59
      %p317 = scmp.lt.s32.totalorder %s20, 1
      %s318 = scalar_select %p317, %s20, 1
      %s319 = smul.addr %s318, 8
      %s320 = scalar_lea.vmem %s2, %s319
      %p321 = pneg %p88
      %p322 = pneg %p85
      %p323 = scmp.lt.s32.totalorder %s20, 1
      %s324 = scalar_select %p323, %s20, 1
      %s325 = smul.addr %s324, 4
      %s326 = smul.addr %s325, 8
      %s327 = scalar_lea.vmem %s3, %s326
      %p328 = pneg %p114
      %p329 = pneg %p111
      %p330 = scmp.lt.s32.totalorder %s20, 1
      %s331 = scalar_select %p330, %s20, 1
      %s332 = smul.addr %s331, 4
      %s333 = smul.addr %s332, 8
      %s334 = scalar_lea.vmem %s4, %s333
      %p335 = pneg %p140
      %p336 = pneg %p137
      %p337 = scmp.lt.s32.totalorder %s20, 1
      %s338 = scalar_select %p337, %s20, 1
      %s339 = scalar_lea.vmem %s5, %s338
      %p340 = pneg %p166
      %p341 = pneg %p163
      %p342 = pneg %p192
      %p343 = pneg %p189
      %p344 = scmp.lt.s32.totalorder %s20, 1
      %s345 = scalar_select %p344, %s20, 1
      %s346 = smul.addr %s345, 8
      %s347 = smul.addr %s346, 8
      %s348 = scalar_lea.vmem %s6, %s347
      %p349 = pneg %p218
      %p350 = pneg %p215
      %p351 = scmp.lt.s32.totalorder %s20, 1
      %s352 = scalar_select %p351, %s20, 1
      %s353 = smul.addr %s352, 8
      %s354 = scalar_lea.vmem %s7, %s353
      %p355 = pneg %p244
      %p356 = pneg %p241
      %p357 = scmp.lt.s32.totalorder %s20, 1
      %s358 = scalar_select %p357, %s20, 1
      %s359 = smul.addr %s358, 8
      %s360 = scalar_lea.vmem %s8, %s359
      %p361 = scmp.lt.s32.totalorder %s20, 1
      %s362 = scalar_select %p361, %s20, 1
      %s363 = smul.addr %s362, 8
      %s364 = scalar_lea.vmem %s1, %s363
      %p365 = scmp.lt.s32.totalorder %s20, 1
      %s366 = scalar_select %p365, %s20, 1
      %s367 = smul.addr %s366, 8
      %s368 = scalar_lea.vmem %s2, %s367
      %p369 = scmp.lt.s32.totalorder %s20, 1
      %s370 = scalar_select %p369, %s20, 1
      %s371 = smul.addr %s370, 4
      %s372 = smul.addr %s371, 8
      %s373 = scalar_lea.vmem %s3, %s372
      %p374 = scmp.lt.s32.totalorder %s20, 1
      %s375 = scalar_select %p374, %s20, 1
      %s376 = smul.addr %s375, 4
      %s377 = smul.addr %s376, 8
      %s378 = scalar_lea.vmem %s4, %s377
      %p379 = scmp.lt.s32.totalorder %s20, 1
      %s380 = scalar_select %p379, %s20, 1
      %s381 = scalar_lea.vmem %s5, %s380
      %p382 = scmp.lt.s32.totalorder %s20, 1
      %s383 = scalar_select %p382, %s20, 1
      %s384 = smul.addr %s383, 8
      %s385 = smul.addr %s384, 8
      %s386 = scalar_lea.vmem %s6, %s385
      %p387 = scmp.lt.s32.totalorder %s20, 1
      %s388 = scalar_select %p387, %s20, 1
      %s389 = smul.addr %s388, 8
      %s390 = scalar_lea.vmem %s7, %s389
      %p391 = scmp.lt.s32.totalorder %s20, 1
      %s392 = scalar_select %p391, %s20, 1
      %s393 = smul.addr %s392, 8
      %s394 = scalar_lea.vmem %s8, %s393
      %v395 = vld [vmem:[%s0] sm:$0xff]
      %v396 = vld [vmem:[%s0 + $0x8] sm:$0xff]
      %v397 = vld [vmem:[%s0 + $0x10] sm:$0xff]
      %v398 = vld [vmem:[%s0 + $0x18] sm:$0xff]
      %v399 = vld [vmem:[%s0 + $0x20] sm:$0xff]
      %v400 = vld [vmem:[%s0 + $0x28] sm:$0xff]
      %v401 = vld [vmem:[%s0 + $0x30] sm:$0xff]
      %v402 = vld [vmem:[%s0 + $0x38] sm:$0xff]
      %v403 = vld [vmem:[%s373] sm:$0xff]
      %v404 = vld [vmem:[%s373 + $0x8] sm:$0xff]
      %v405 = vld [vmem:[%s373 + $0x10] sm:$0xff]
      %v406 = vld [vmem:[%s373 + $0x18] sm:$0xff]
      %v407 = vld [vmem:[%s381] sm:$0x1]
      %v409 = vperm.slane %v407, 0
      %vm411 = vcmask 261120
      %v413 = vsel %vm411, %v395, 0
      %v416 = vsel %vm411, %v396, 0
      %v419 = vsel %vm411, %v397, 0
      %v422 = vsel %vm411, %v398, 0
      %v425 = vsel %vm411, %v399, 0
      %v428 = vsel %vm411, %v400, 0
      %v431 = vsel %vm411, %v401, 0
      %v434 = vsel %vm411, %v402, 0
      %436 = vmatpush.msra.mxu0 0.0
      %437 = vmatpush.msra.mxu0 0.0
      %438 = vmatpush.msra.mxu0 0.0
      %439 = vmatpush.msra.mxu0 0.0
      %440 = vmatpush.msra.mxu0 0.0
      %441 = vmatpush.msra.mxu0 0.0
      %442 = vmatpush.msra.mxu0 0.0
      %443 = vmatpush.msra.mxu0 0.0
      %444 = vmatpush.msra.mxu0 0.0
      %445 = vmatpush.msra.mxu0 0.0
      %446 = vmatpush.msra.mxu0 0.0
      %447 = vmatpush.msra.mxu0 0.0
      %448 = vmatpush.msra.mxu0 %v406
      %449 = vmatpush.msra.mxu0 %v405
      %450 = vmatpush.msra.mxu0 %v404
      %451 = vmatpush.msra.mxu0 %v403
      %452 = vmatmul.f32.gmra.mxu0 %v413
      %v453 = vpop.f32.mrf.mxu0
      %v454 = vadd.f32 %v409, %v453
      %455 = vmatmul.f32.gmra.mxu0 %v416
      %v456 = vpop.f32.mrf.mxu0
      %v457 = vadd.f32 %v409, %v456
      %458 = vmatmul.f32.gmra.mxu0 %v419
      %v459 = vpop.f32.mrf.mxu0
      %v460 = vadd.f32 %v409, %v459
      %461 = vmatmul.f32.gmra.mxu0 %v422
      %v462 = vpop.f32.mrf.mxu0
      %v463 = vadd.f32 %v409, %v462
      %464 = vmatmul.f32.gmra.mxu0 %v425
      %v465 = vpop.f32.mrf.mxu0
      %v466 = vadd.f32 %v409, %v465
      %467 = vmatmul.f32.gmra.mxu0 %v428
      %v468 = vpop.f32.mrf.mxu0
      %v469 = vadd.f32 %v409, %v468
      %470 = vmatmul.f32.gmra.mxu0 %v431
      %v471 = vpop.f32.mrf.mxu0
      %v472 = vadd.f32 %v409, %v471
      %473 = vmatmul.f32.gmra.mxu0 %v434
      %v474 = vpop.f32.mrf.mxu0
      %v475 = vadd.f32 %v409, %v474
      %476 = vdwg.mxu0
      %477 = vst [vmem:[#allocation2] sm:$0xff] %v454
      %478 = vst [vmem:[#allocation2 + $0x8] sm:$0xff] %v457
      %479 = vst [vmem:[#allocation2 + $0x10] sm:$0xff] %v460
      %480 = vst [vmem:[#allocation2 + $0x18] sm:$0xff] %v463
      %481 = vst [vmem:[#allocation2 + $0x20] sm:$0xff] %v466
      %482 = vst [vmem:[#allocation2 + $0x28] sm:$0xff] %v469
      %483 = vst [vmem:[#allocation2 + $0x30] sm:$0xff] %v472
      %484 = vst [vmem:[#allocation2 + $0x38] sm:$0xff] %v475
      %v485 = vld [vmem:[%s378] sm:$0xff]
      %v486 = vld [vmem:[%s378 + $0x8] sm:$0xff]
      %v487 = vld [vmem:[%s378 + $0x10] sm:$0xff]
      %v488 = vld [vmem:[%s378 + $0x18] sm:$0xff]
      %v489 = vld [vmem:[%s364] sm:$0xff]
      %v490 = vld [vmem:[%s368] sm:$0xff]
      %p491 = scmp.eq.s32.totalorder %s20, 0
      %s492 = scalar_select %p491, 0, 7
      %s493 = smul.u32 %s492, 8
      %s494 = scalar_lea.vmem [#allocation2], %s493
      %v495 = vld [vmem:[%s494] sm:$0xff]
      %v497 = vsel %vm411, %v489, 0
      %499 = vmatpush.msra.mxu0 0.0
      %500 = vmatpush.msra.mxu0 0.0
      %501 = vmatpush.msra.mxu0 0.0
      %502 = vmatpush.msra.mxu0 0.0
      %503 = vmatpush.msra.mxu0 0.0
      %504 = vmatpush.msra.mxu0 0.0
      %505 = vmatpush.msra.mxu0 0.0
      %506 = vmatpush.msra.mxu0 0.0
      %507 = vmatpush.msra.mxu0 0.0
      %508 = vmatpush.msra.mxu0 0.0
      %509 = vmatpush.msra.mxu0 0.0
      %510 = vmatpush.msra.mxu0 0.0
      %511 = vmatpush.msra.mxu0 %v488
      %512 = vmatpush.msra.mxu0 %v487
      %513 = vmatpush.msra.mxu0 %v486
      %514 = vmatpush.msra.mxu0 %v485
      %515 = vmatmul.f32.gmra.mxu0 %v497
      %v516 = vpop.f32.mrf.mxu0
      %v517 = vadd.f32 0.0, %v516
      %518 = vdwg.mxu0
      %v519 = vadd.f32 %v495, %v517
      %v520 = vxor.u32 %v519, 2147483648
      %v521 = vmul.f32 %v520, 1.442695
      %v522 = vpow.pop %v521
      %v523 = vadd.f32 %v522, 1.0
      %v524 = vrcp.pop %v523
      %v525 = vmul.f32 %v523, %v524
      %v526 = vsub.f32 1.0, %v525
      %v527 = vmul.f32 %v524, %v526
      %v528 = vadd.f32 %v524, %v527
      %vm529 = vweird.f32 %v523
      %vm530 = vweird.f32 %v524
      %vm531 = vmor %vm529, %vm530
      %v532 = vsel %vm531, %v524, %v528
      %v533 = vand.u32 2147483647, %v523
      %vm534 = vcmp.eq.f32.partialorder %v533, 8.507059e+37
      %v535 = vand.u32 %v523, 2147483648
      %v536 = vor.u32 1.1754944e-38, %v535
      %v537 = vsel %vm534, %v536, %v532
      %v538 = vmul.f32 1.0, %v537
      %v539 = vtanh.pop %v519
      %541 = vrot.lane.b32.xlu0 %v490, 32
      %v542 = vpop.permute.xlu0 %541
      %v544 = vmul.f32 %v538, %v542
      %546 = vrot.lane.b32.xlu0 %v539, 64
      %v547 = vpop.permute.xlu0 %546
      %v549 = vmul.f32 %v538, %v547
      %551 = vrot.lane.b32.xlu0 %v549, 32
      %v552 = vpop.permute.xlu0 %551
      %v554 = vadd.f32 %v544, %v552
      %v555 = vtanh.pop %v554
      %557 = vrot.lane.b32.xlu0 %v555, 64
      %v558 = vpop.permute.xlu0 %557
      %v560 = vmul.f32 %v538, %v558
      %562 = vrot.lane.b32.xlu0 %v560, 32
      %v563 = vpop.permute.xlu0 %562
      %s565 = scalar_lea.vmem %s386, %s493
      %566 = vst.msk [vmem:[%s565] sm:$0xff] %vm411, %v563
      %s567 = scalar_select %p491, 1, 6
      %s568 = smul.u32 %s567, 8
      %s569 = scalar_lea.vmem [#allocation2], %s568
      %v570 = vld [vmem:[%s569] sm:$0xff]
      %v571 = vsel %vm411, %v563, 0
      %573 = vmatpush.msra.mxu0 0.0
      %574 = vmatpush.msra.mxu0 0.0
      %575 = vmatpush.msra.mxu0 0.0
      %576 = vmatpush.msra.mxu0 0.0
      %577 = vmatpush.msra.mxu0 0.0
      %578 = vmatpush.msra.mxu0 0.0
      %579 = vmatpush.msra.mxu0 0.0
      %580 = vmatpush.msra.mxu0 0.0
      %581 = vmatpush.msra.mxu0 0.0
      %582 = vmatpush.msra.mxu0 0.0
      %583 = vmatpush.msra.mxu0 0.0
      %584 = vmatpush.msra.mxu0 0.0
      %585 = vmatpush.msra.mxu0 %v488
      %586 = vmatpush.msra.mxu0 %v487
      %587 = vmatpush.msra.mxu0 %v486
      %588 = vmatpush.msra.mxu0 %v485
      %589 = vmatmul.f32.gmra.mxu0 %v571
      %v590 = vpop.f32.mrf.mxu0
      %v591 = vadd.f32 0.0, %v590
      %592 = vdwg.mxu0
      %v593 = vadd.f32 %v570, %v591
      %v594 = vxor.u32 %v593, 2147483648
      %v595 = vmul.f32 %v594, 1.442695
      %v596 = vpow.pop %v595
      %v597 = vadd.f32 %v596, 1.0
      %v598 = vrcp.pop %v597
      %v599 = vmul.f32 %v597, %v598
      %v600 = vsub.f32 1.0, %v599
      %v601 = vmul.f32 %v598, %v600
      %v602 = vadd.f32 %v598, %v601
      %vm603 = vweird.f32 %v597
      %vm604 = vweird.f32 %v598
      %vm605 = vmor %vm603, %vm604
      %v606 = vsel %vm605, %v598, %v602
      %v607 = vand.u32 2147483647, %v597
      %vm608 = vcmp.eq.f32.partialorder %v607, 8.507059e+37
      %v609 = vand.u32 %v597, 2147483648
      %v610 = vor.u32 1.1754944e-38, %v609
      %v611 = vsel %vm608, %v610, %v606
      %v612 = vmul.f32 1.0, %v611
      %v613 = vtanh.pop %v593
      %v614 = vmul.f32 %v612, %v554
      %616 = vrot.lane.b32.xlu0 %v613, 64
      %v617 = vpop.permute.xlu0 %616
      %v619 = vmul.f32 %v612, %v617
      %621 = vrot.lane.b32.xlu0 %v619, 32
      %v622 = vpop.permute.xlu0 %621
      %v624 = vadd.f32 %v614, %v622
      %v625 = vtanh.pop %v624
      %627 = vrot.lane.b32.xlu0 %v625, 64
      %v628 = vpop.permute.xlu0 %627
      %v630 = vmul.f32 %v612, %v628
      %632 = vrot.lane.b32.xlu0 %v630, 32
      %v633 = vpop.permute.xlu0 %632
      %s635 = scalar_lea.vmem %s386, %s568
      %636 = vst.msk [vmem:[%s635] sm:$0xff] %vm411, %v633
      %s637 = scalar_select %p491, 2, 5
      %s638 = smul.u32 %s637, 8
      %s639 = scalar_lea.vmem [#allocation2], %s638
      %v640 = vld [vmem:[%s639] sm:$0xff]
      %v641 = vsel %vm411, %v633, 0
      %643 = vmatpush.msra.mxu0 0.0
      %644 = vmatpush.msra.mxu0 0.0
      %645 = vmatpush.msra.mxu0 0.0
      %646 = vmatpush.msra.mxu0 0.0
      %647 = vmatpush.msra.mxu0 0.0
      %648 = vmatpush.msra.mxu0 0.0
      %649 = vmatpush.msra.mxu0 0.0
      %650 = vmatpush.msra.mxu0 0.0
      %651 = vmatpush.msra.mxu0 0.0
      %652 = vmatpush.msra.mxu0 0.0
      %653 = vmatpush.msra.mxu0 0.0
      %654 = vmatpush.msra.mxu0 0.0
      %655 = vmatpush.msra.mxu0 %v488
      %656 = vmatpush.msra.mxu0 %v487
      %657 = vmatpush.msra.mxu0 %v486
      %658 = vmatpush.msra.mxu0 %v485
      %659 = vmatmul.f32.gmra.mxu0 %v641
      %v660 = vpop.f32.mrf.mxu0
      %v661 = vadd.f32 0.0, %v660
      %662 = vdwg.mxu0
      %v663 = vadd.f32 %v640, %v661
      %v664 = vxor.u32 %v663, 2147483648
      %v665 = vmul.f32 %v664, 1.442695
      %v666 = vpow.pop %v665
      %v667 = vadd.f32 %v666, 1.0
      %v668 = vrcp.pop %v667
      %v669 = vmul.f32 %v667, %v668
      %v670 = vsub.f32 1.0, %v669
      %v671 = vmul.f32 %v668, %v670
      %v672 = vadd.f32 %v668, %v671
      %vm673 = vweird.f32 %v667
      %vm674 = vweird.f32 %v668
      %vm675 = vmor %vm673, %vm674
      %v676 = vsel %vm675, %v668, %v672
      %v677 = vand.u32 2147483647, %v667
      %vm678 = vcmp.eq.f32.partialorder %v677, 8.507059e+37
      %v679 = vand.u32 %v667, 2147483648
      %v680 = vor.u32 1.1754944e-38, %v679
      %v681 = vsel %vm678, %v680, %v676
      %v682 = vmul.f32 1.0, %v681
      %v683 = vtanh.pop %v663
      %v684 = vmul.f32 %v682, %v624
      %686 = vrot.lane.b32.xlu0 %v683, 64
      %v687 = vpop.permute.xlu0 %686
      %v689 = vmul.f32 %v682, %v687
      %691 = vrot.lane.b32.xlu0 %v689, 32
      %v692 = vpop.permute.xlu0 %691
      %v694 = vadd.f32 %v684, %v692
      %v695 = vtanh.pop %v694
      %697 = vrot.lane.b32.xlu0 %v695, 64
      %v698 = vpop.permute.xlu0 %697
      %v700 = vmul.f32 %v682, %v698
      %702 = vrot.lane.b32.xlu0 %v700, 32
      %v703 = vpop.permute.xlu0 %702
      %s705 = scalar_lea.vmem %s386, %s638
      %706 = vst.msk [vmem:[%s705] sm:$0xff] %vm411, %v703
      %s707 = scalar_select %p491, 3, 4
      %s708 = smul.u32 %s707, 8
      %s709 = scalar_lea.vmem [#allocation2], %s708
      %v710 = vld [vmem:[%s709] sm:$0xff]
      %v711 = vsel %vm411, %v703, 0
      %713 = vmatpush.msra.mxu0 0.0
      %714 = vmatpush.msra.mxu0 0.0
      %715 = vmatpush.msra.mxu0 0.0
      %716 = vmatpush.msra.mxu0 0.0
      %717 = vmatpush.msra.mxu0 0.0
      %718 = vmatpush.msra.mxu0 0.0
      %719 = vmatpush.msra.mxu0 0.0
      %720 = vmatpush.msra.mxu0 0.0
      %721 = vmatpush.msra.mxu0 0.0
      %722 = vmatpush.msra.mxu0 0.0
      %723 = vmatpush.msra.mxu0 0.0
      %724 = vmatpush.msra.mxu0 0.0
      %725 = vmatpush.msra.mxu0 %v488
      %726 = vmatpush.msra.mxu0 %v487
      %727 = vmatpush.msra.mxu0 %v486
      %728 = vmatpush.msra.mxu0 %v485
      %729 = vmatmul.f32.gmra.mxu0 %v711
      %v730 = vpop.f32.mrf.mxu0
      %v731 = vadd.f32 0.0, %v730
      %732 = vdwg.mxu0
      %v733 = vadd.f32 %v710, %v731
      %v734 = vxor.u32 %v733, 2147483648
      %v735 = vmul.f32 %v734, 1.442695
      %v736 = vpow.pop %v735
      %v737 = vadd.f32 %v736, 1.0
      %v738 = vrcp.pop %v737
      %v739 = vmul.f32 %v737, %v738
      %v740 = vsub.f32 1.0, %v739
      %v741 = vmul.f32 %v738, %v740
      %v742 = vadd.f32 %v738, %v741
      %vm743 = vweird.f32 %v737
      %vm744 = vweird.f32 %v738
      %vm745 = vmor %vm743, %vm744
      %v746 = vsel %vm745, %v738, %v742
      %v747 = vand.u32 2147483647, %v737
      %vm748 = vcmp.eq.f32.partialorder %v747, 8.507059e+37
      %v749 = vand.u32 %v737, 2147483648
      %v750 = vor.u32 1.1754944e-38, %v749
      %v751 = vsel %vm748, %v750, %v746
      %v752 = vmul.f32 1.0, %v751
      %v753 = vtanh.pop %v733
      %v754 = vmul.f32 %v752, %v694
      %756 = vrot.lane.b32.xlu0 %v753, 64
      %v757 = vpop.permute.xlu0 %756
      %v759 = vmul.f32 %v752, %v757
      %761 = vrot.lane.b32.xlu0 %v759, 32
      %v762 = vpop.permute.xlu0 %761
      %v764 = vadd.f32 %v754, %v762
      %v765 = vtanh.pop %v764
      %767 = vrot.lane.b32.xlu0 %v765, 64
      %v768 = vpop.permute.xlu0 %767
      %v770 = vmul.f32 %v752, %v768
      %772 = vrot.lane.b32.xlu0 %v770, 32
      %v773 = vpop.permute.xlu0 %772
      %s775 = scalar_lea.vmem %s386, %s708
      %776 = vst.msk [vmem:[%s775] sm:$0xff] %vm411, %v773
      %s777 = scalar_select %p491, 4, 3
      %s778 = smul.u32 %s777, 8
      %s779 = scalar_lea.vmem [#allocation2], %s778
      %v780 = vld [vmem:[%s779] sm:$0xff]
      %v781 = vsel %vm411, %v773, 0
      %783 = vmatpush.msra.mxu0 0.0
      %784 = vmatpush.msra.mxu0 0.0
      %785 = vmatpush.msra.mxu0 0.0
      %786 = vmatpush.msra.mxu0 0.0
      %787 = vmatpush.msra.mxu0 0.0
      %788 = vmatpush.msra.mxu0 0.0
      %789 = vmatpush.msra.mxu0 0.0
      %790 = vmatpush.msra.mxu0 0.0
      %791 = vmatpush.msra.mxu0 0.0
      %792 = vmatpush.msra.mxu0 0.0
      %793 = vmatpush.msra.mxu0 0.0
      %794 = vmatpush.msra.mxu0 0.0
      %795 = vmatpush.msra.mxu0 %v488
      %796 = vmatpush.msra.mxu0 %v487
      %797 = vmatpush.msra.mxu0 %v486
      %798 = vmatpush.msra.mxu0 %v485
      %799 = vmatmul.f32.gmra.mxu0 %v781
      %v800 = vpop.f32.mrf.mxu0
      %v801 = vadd.f32 0.0, %v800
      %802 = vdwg.mxu0
      %v803 = vadd.f32 %v780, %v801
      %v804 = vxor.u32 %v803, 2147483648
      %v805 = vmul.f32 %v804, 1.442695
      %v806 = vpow.pop %v805
      %v807 = vadd.f32 %v806, 1.0
      %v808 = vrcp.pop %v807
      %v809 = vmul.f32 %v807, %v808
      %v810 = vsub.f32 1.0, %v809
      %v811 = vmul.f32 %v808, %v810
      %v812 = vadd.f32 %v808, %v811
      %vm813 = vweird.f32 %v807
      %vm814 = vweird.f32 %v808
      %vm815 = vmor %vm813, %vm814
      %v816 = vsel %vm815, %v808, %v812
      %v817 = vand.u32 2147483647, %v807
      %vm818 = vcmp.eq.f32.partialorder %v817, 8.507059e+37
      %v819 = vand.u32 %v807, 2147483648
      %v820 = vor.u32 1.1754944e-38, %v819
      %v821 = vsel %vm818, %v820, %v816
      %v822 = vmul.f32 1.0, %v821
      %v823 = vtanh.pop %v803
      %v824 = vmul.f32 %v822, %v764
      %826 = vrot.lane.b32.xlu0 %v823, 64
      %v827 = vpop.permute.xlu0 %826
      %v829 = vmul.f32 %v822, %v827
      %831 = vrot.lane.b32.xlu0 %v829, 32
      %v832 = vpop.permute.xlu0 %831
      %v834 = vadd.f32 %v824, %v832
      %v835 = vtanh.pop %v834
      %837 = vrot.lane.b32.xlu0 %v835, 64
      %v838 = vpop.permute.xlu0 %837
      %v840 = vmul.f32 %v822, %v838
      %842 = vrot.lane.b32.xlu0 %v840, 32
      %v843 = vpop.permute.xlu0 %842
      %s845 = scalar_lea.vmem %s386, %s778
      %846 = vst.msk [vmem:[%s845] sm:$0xff] %vm411, %v843
      %s847 = scalar_select %p491, 5, 2
      %s848 = smul.u32 %s847, 8
      %s849 = scalar_lea.vmem [#allocation2], %s848
      %v850 = vld [vmem:[%s849] sm:$0xff]
      %v851 = vsel %vm411, %v843, 0
      %853 = vmatpush.msra.mxu0 0.0
      %854 = vmatpush.msra.mxu0 0.0
      %855 = vmatpush.msra.mxu0 0.0
      %856 = vmatpush.msra.mxu0 0.0
      %857 = vmatpush.msra.mxu0 0.0
      %858 = vmatpush.msra.mxu0 0.0
      %859 = vmatpush.msra.mxu0 0.0
      %860 = vmatpush.msra.mxu0 0.0
      %861 = vmatpush.msra.mxu0 0.0
      %862 = vmatpush.msra.mxu0 0.0
      %863 = vmatpush.msra.mxu0 0.0
      %864 = vmatpush.msra.mxu0 0.0
      %865 = vmatpush.msra.mxu0 %v488
      %866 = vmatpush.msra.mxu0 %v487
      %867 = vmatpush.msra.mxu0 %v486
      %868 = vmatpush.msra.mxu0 %v485
      %869 = vmatmul.f32.gmra.mxu0 %v851
      %v870 = vpop.f32.mrf.mxu0
      %v871 = vadd.f32 0.0, %v870
      %872 = vdwg.mxu0
      %v873 = vadd.f32 %v850, %v871
      %v874 = vxor.u32 %v873, 2147483648
      %v875 = vmul.f32 %v874, 1.442695
      %v876 = vpow.pop %v875
      %v877 = vadd.f32 %v876, 1.0
      %v878 = vrcp.pop %v877
      %v879 = vmul.f32 %v877, %v878
      %v880 = vsub.f32 1.0, %v879
      %v881 = vmul.f32 %v878, %v880
      %v882 = vadd.f32 %v878, %v881
      %vm883 = vweird.f32 %v877
      %vm884 = vweird.f32 %v878
      %vm885 = vmor %vm883, %vm884
      %v886 = vsel %vm885, %v878, %v882
      %v887 = vand.u32 2147483647, %v877
      %vm888 = vcmp.eq.f32.partialorder %v887, 8.507059e+37
      %v889 = vand.u32 %v877, 2147483648
      %v890 = vor.u32 1.1754944e-38, %v889
      %v891 = vsel %vm888, %v890, %v886
      %v892 = vmul.f32 1.0, %v891
      %v893 = vtanh.pop %v873
      %v894 = vmul.f32 %v892, %v834
      %896 = vrot.lane.b32.xlu0 %v893, 64
      %v897 = vpop.permute.xlu0 %896
      %v899 = vmul.f32 %v892, %v897
      %901 = vrot.lane.b32.xlu0 %v899, 32
      %v902 = vpop.permute.xlu0 %901
      %v904 = vadd.f32 %v894, %v902
      %v905 = vtanh.pop %v904
      %907 = vrot.lane.b32.xlu0 %v905, 64
      %v908 = vpop.permute.xlu0 %907
      %v910 = vmul.f32 %v892, %v908
      %912 = vrot.lane.b32.xlu0 %v910, 32
      %v913 = vpop.permute.xlu0 %912
      %s915 = scalar_lea.vmem %s386, %s848
      %916 = vst.msk [vmem:[%s915] sm:$0xff] %vm411, %v913
      %s917 = scalar_select %p491, 6, 1
      %s918 = smul.u32 %s917, 8
      %s919 = scalar_lea.vmem [#allocation2], %s918
      %v920 = vld [vmem:[%s919] sm:$0xff]
      %v921 = vsel %vm411, %v913, 0
      %923 = vmatpush.msra.mxu0 0.0
      %924 = vmatpush.msra.mxu0 0.0
      %925 = vmatpush.msra.mxu0 0.0
      %926 = vmatpush.msra.mxu0 0.0
      %927 = vmatpush.msra.mxu0 0.0
      %928 = vmatpush.msra.mxu0 0.0
      %929 = vmatpush.msra.mxu0 0.0
      %930 = vmatpush.msra.mxu0 0.0
      %931 = vmatpush.msra.mxu0 0.0
      %932 = vmatpush.msra.mxu0 0.0
      %933 = vmatpush.msra.mxu0 0.0
      %934 = vmatpush.msra.mxu0 0.0
      %935 = vmatpush.msra.mxu0 %v488
      %936 = vmatpush.msra.mxu0 %v487
      %937 = vmatpush.msra.mxu0 %v486
      %938 = vmatpush.msra.mxu0 %v485
      %939 = vmatmul.f32.gmra.mxu0 %v921
      %v940 = vpop.f32.mrf.mxu0
      %v941 = vadd.f32 0.0, %v940
      %942 = vdwg.mxu0
      %v943 = vadd.f32 %v920, %v941
      %v944 = vxor.u32 %v943, 2147483648
      %v945 = vmul.f32 %v944, 1.442695
      %v946 = vpow.pop %v945
      %v947 = vadd.f32 %v946, 1.0
      %v948 = vrcp.pop %v947
      %v949 = vmul.f32 %v947, %v948
      %v950 = vsub.f32 1.0, %v949
      %v951 = vmul.f32 %v948, %v950
      %v952 = vadd.f32 %v948, %v951
      %vm953 = vweird.f32 %v947
      %vm954 = vweird.f32 %v948
      %vm955 = vmor %vm953, %vm954
      %v956 = vsel %vm955, %v948, %v952
      %v957 = vand.u32 2147483647, %v947
      %vm958 = vcmp.eq.f32.partialorder %v957, 8.507059e+37
      %v959 = vand.u32 %v947, 2147483648
      %v960 = vor.u32 1.1754944e-38, %v959
      %v961 = vsel %vm958, %v960, %v956
      %v962 = vmul.f32 1.0, %v961
      %v963 = vtanh.pop %v943
      %v964 = vmul.f32 %v962, %v904
      %966 = vrot.lane.b32.xlu0 %v963, 64
      %v967 = vpop.permute.xlu0 %966
      %v969 = vmul.f32 %v962, %v967
      %971 = vrot.lane.b32.xlu0 %v969, 32
      %v972 = vpop.permute.xlu0 %971
      %v974 = vadd.f32 %v964, %v972
      %v975 = vtanh.pop %v974
      %977 = vrot.lane.b32.xlu0 %v975, 64
      %v978 = vpop.permute.xlu0 %977
      %v980 = vmul.f32 %v962, %v978
      %982 = vrot.lane.b32.xlu0 %v980, 32
      %v983 = vpop.permute.xlu0 %982
      %s985 = scalar_lea.vmem %s386, %s918
      %986 = vst.msk [vmem:[%s985] sm:$0xff] %vm411, %v983
      %s987 = scalar_select %p491, 7, 0
      %s988 = smul.u32 %s987, 8
      %s989 = scalar_lea.vmem [#allocation2], %s988
      %v990 = vld [vmem:[%s989] sm:$0xff]
      %v991 = vsel %vm411, %v983, 0
      %993 = vmatpush.msra.mxu0 0.0
      %994 = vmatpush.msra.mxu0 0.0
      %995 = vmatpush.msra.mxu0 0.0
      %996 = vmatpush.msra.mxu0 0.0
      %997 = vmatpush.msra.mxu0 0.0
      %998 = vmatpush.msra.mxu0 0.0
      %999 = vmatpush.msra.mxu0 0.0
      %1000 = vmatpush.msra.mxu0 0.0
      %1001 = vmatpush.msra.mxu0 0.0
      %1002 = vmatpush.msra.mxu0 0.0
      %1003 = vmatpush.msra.mxu0 0.0
      %1004 = vmatpush.msra.mxu0 0.0
      %1005 = vmatpush.msra.mxu0 %v488
      %1006 = vmatpush.msra.mxu0 %v487
      %1007 = vmatpush.msra.mxu0 %v486
      %1008 = vmatpush.msra.mxu0 %v485
      %1009 = vmatmul.f32.gmra.mxu0 %v991
      %v1010 = vpop.f32.mrf.mxu0
      %v1011 = vadd.f32 0.0, %v1010
      %1012 = vdwg.mxu0
      %v1013 = vadd.f32 %v990, %v1011
      %v1014 = vxor.u32 %v1013, 2147483648
      %v1015 = vmul.f32 %v1014, 1.442695
      %v1016 = vpow.pop %v1015
      %v1017 = vadd.f32 %v1016, 1.0
      %v1018 = vrcp.pop %v1017
      %v1019 = vmul.f32 %v1017, %v1018
      %v1020 = vsub.f32 1.0, %v1019
      %v1021 = vmul.f32 %v1018, %v1020
      %v1022 = vadd.f32 %v1018, %v1021
      %vm1023 = vweird.f32 %v1017
      %vm1024 = vweird.f32 %v1018
      %vm1025 = vmor %vm1023, %vm1024
      %v1026 = vsel %vm1025, %v1018, %v1022
      %v1027 = vand.u32 2147483647, %v1017
      %vm1028 = vcmp.eq.f32.partialorder %v1027, 8.507059e+37
      %v1029 = vand.u32 %v1017, 2147483648
      %v1030 = vor.u32 1.1754944e-38, %v1029
      %v1031 = vsel %vm1028, %v1030, %v1026
      %v1032 = vmul.f32 1.0, %v1031
      %v1033 = vtanh.pop %v1013
      %v1034 = vmul.f32 %v1032, %v974
      %1036 = vrot.lane.b32.xlu0 %v1033, 64
      %v1037 = vpop.permute.xlu0 %1036
      %v1039 = vmul.f32 %v1032, %v1037
      %1041 = vrot.lane.b32.xlu0 %v1039, 32
      %v1042 = vpop.permute.xlu0 %1041
      %v1044 = vadd.f32 %v1034, %v1042
      %v1045 = vtanh.pop %v1044
      %1047 = vrot.lane.b32.xlu0 %v1045, 64
      %v1048 = vpop.permute.xlu0 %1047
      %v1050 = vmul.f32 %v1032, %v1048
      %1052 = vrot.lane.b32.xlu0 %v1050, 32
      %v1053 = vpop.permute.xlu0 %1052
      %s1055 = scalar_lea.vmem %s386, %s988
      %1056 = vst.msk [vmem:[%s1055] sm:$0xff] %vm411, %v1053
      %1057 = vst.msk [vmem:[%s390] sm:$0xff] %vm411, %v1053
      %1059 = vrot.lane.b32.xlu0 %v1044, 96
      %v1060 = vpop.permute.xlu0 %1059
      %1062 = vst.msk [vmem:[%s394] sm:$0xff] %vm411, %v1060
      %p1063 = scmp.lt.s32.totalorder %s20, 1
      %s1064 = scalar_select %p1063, %s20, 1
      %s1065 = smul.addr %s1064, 8
      %s1066 = smul.addr %s1065, 8
      %s1067 = scalar_lea.vmem %s6, %s1066
      %p1068 = scmp.lt.s32.totalorder %s20, 1
      %s1069 = scalar_select %p1068, %s20, 1
      %s1070 = smul.addr %s1069, 8
      %s1071 = scalar_lea.vmem %s7, %s1070
      %p1072 = scmp.lt.s32.totalorder %s20, 1
      %s1073 = scalar_select %p1072, %s20, 1
      %s1074 = smul.addr %s1073, 8
      %s1075 = scalar_lea.vmem %s8, %s1074
      // Predicated region
      $region45: #{encoder_forward.2} parent=43 // pred_check
        %p1076 = pneg %p189
      $region46: #{encoder_forward.2} parent=43 // pred_check_branch
        %1078 = sbr.rel (%p1076) target = $region48
      $region47: #{encoder_forward.2} parent=43 // pred_region
        _
      $region48: #{encoder_forward.2} parent=43 // pred_fallthru
        _
      // Predicated region
      $region49: #{encoder_forward.2} parent=43 // pred_check
        %p1079 = pneg %p215
      $region50: #{encoder_forward.2} parent=43 // pred_check_branch
        %1081 = sbr.rel (%p1079) target = $region52
      $region51: #{encoder_forward.2} parent=43 // pred_region
        _
      $region52: #{encoder_forward.2} parent=43 // pred_fallthru
        _
      // Predicated region
      $region53: #{encoder_forward.2} parent=43 // pred_check
        %p1082 = pneg %p241
      $region54: #{encoder_forward.2} parent=43 // pred_check_branch
        %1084 = sbr.rel (%p1082) target = $region56
      $region55: #{encoder_forward.2} parent=43 // pred_region
        _
      $region56: #{encoder_forward.2} parent=43 // pred_fallthru
        _
    $region44: #{encoder_forward.2} parent=5 // pred_fallthru
      _
    %p1085 = scmp.le.s32.totalorder 2, %s15
    // Predicated region
    $region57: #{encoder_forward.2} parent=5 // pred_check
      %p1086 = pneg %p1085
    $region58: #{encoder_forward.2} parent=5 // pred_check_branch
      %1088 = sbr.rel (%p1086) target = $region60
    $region59: #{encoder_forward.2} parent=5 // pred_region
      %s1089 = ssub.s32 %s15, 2
      // Predicated region
      $region61: #{encoder_forward.2} parent=59 // pred_check
        %p1090 = pneg %p195
      $region62: #{encoder_forward.2} parent=59 // pred_check_branch
        %1092 = sbr.rel (%p1090) target = $region64
      $region63: #{encoder_forward.2} parent=59 // pred_region
        %p1093 = scmp.lt.s32.totalorder %s21, 1
        %s1094 = scalar_select %p1093, %s21, 1
        %s1095 = smul.addr %s1094, 8
        %s1096 = smul.addr %s1095, 8
        %s1097 = scalar_lea.vmem %s6, %s1096
      $region64: #{encoder_forward.2} parent=59 // pred_fallthru
        _
      // Predicated region
      $region65: #{encoder_forward.2} parent=59 // pred_check
        %p1098 = pneg %p221
      $region66: #{encoder_forward.2} parent=59 // pred_check_branch
        %1100 = sbr.rel (%p1098) target = $region68
      $region67: #{encoder_forward.2} parent=59 // pred_region
        %p1101 = scmp.lt.s32.totalorder %s21, 1
        %s1102 = scalar_select %p1101, %s21, 1
        %s1103 = smul.addr %s1102, 8
        %s1104 = scalar_lea.vmem %s7, %s1103
      $region68: #{encoder_forward.2} parent=59 // pred_fallthru
        _
      // Predicated region
      $region69: #{encoder_forward.2} parent=59 // pred_check
        %p1105 = pneg %p247
      $region70: #{encoder_forward.2} parent=59 // pred_check_branch
        %1107 = sbr.rel (%p1105) target = $region72
      $region71: #{encoder_forward.2} parent=59 // pred_region
        %p1108 = scmp.lt.s32.totalorder %s21, 1
        %s1109 = scalar_select %p1108, %s21, 1
        %s1110 = smul.addr %s1109, 8
        %s1111 = scalar_lea.vmem %s8, %s1110
      $region72: #{encoder_forward.2} parent=59 // pred_fallthru
        _
    $region60: #{encoder_forward.2} parent=5 // pred_fallthru
      _
  $region6: #{encoder_forward.2} parent=0 // loop_footer
    %s19 = sadd.s32 1, %s15
  $region7: #{encoder_forward.2} parent=0 // loop_footer_branch
    %14 = sbr.rel target = $region3
  $region8: #{encoder_forward.2} parent=0 // loop_exit
    _

// kernel: encoder_forward.3
$region0: #{encoder_forward.3}
  #allocation0 [shape = 'u32[]', space=smem, size = 0x4, offset = 0x4, fixed_abs, tag = 'smem constant byte address 0x4 - core index']
  #allocation1 [shape = 'u32[72,128]{1,0:T(1,128)}', space=vmem, size = 0x9000, scoped, tag = 'internal scratch']
  #allocation2 [shape = 'f32[64,128]{1,0:T(8,128)}', space=vmem, size = 0x8000, scoped, tag = 'scratch operand']
  %s0 = inlined_call_operand.vmem [shape: f32[2,64,32], index: 0, kind: input, shape index: {}]
  %s1 = inlined_call_operand.vmem [shape: f32[2,8,32], index: 1, kind: input, shape index: {}]
  %s2 = inlined_call_operand.vmem [shape: f32[2,8,32], index: 2, kind: input, shape index: {}]
  %s3 = inlined_call_operand.vmem [shape: f32[2,2,32,128], index: 3, kind: input, shape index: {}]
  %s4 = inlined_call_operand.vmem [shape: f32[2,32,128], index: 4, kind: input, shape index: {}]
  %s5 = inlined_call_operand.vmem [shape: f32[2,1,128], index: 5, kind: input, shape index: {}]
  %s6 = inlined_call_operand.vmem [shape: f32[2,64,32], index: 6, kind: output, shape index: {0}]
  %s7 = inlined_call_operand.vmem [shape: f32[2,8,32], index: 7, kind: output, shape index: {1}]
  %s8 = inlined_call_operand.vmem [shape: f32[2,8,32], index: 8, kind: output, shape index: {2}]
  %9 = xla_tuple %s6, %s7, %s8
  %s10 = sld [smem:[#allocation0]]
  $region73: #{encoder_forward.3} parent=0
    _
  %s12 = ssub.s32 1, %s10
  %s13 = scalar_select 0, %s12, %s10
  loop: start=0, step=1, limit=4
  $region2: #{encoder_forward.3} parent=0 // loop_pre_header
    _
  $region3: #{encoder_forward.3} parent=0 // loop_header
    %s15 = sphi 0, %s19
    %p16 = scmp.ge.s32.totalorder %s15, 4
    %s23 = sphi 0, %s23
    %s25 = sphi 0, %s23
    %s26 = sphi 0, %s25
    %s40 = sphi 0, %s26
    %s46 = sphi 0, %s48
    %s49 = sphi 0, %s46
    %s50 = sphi 0, %s49
    %s66 = sphi 0, %s50
    %s72 = sphi 0, %s74
    %s75 = sphi 0, %s72
    %s76 = sphi 0, %s75
    %s92 = sphi 0, %s76
    %s98 = sphi 0, %s100
    %s101 = sphi 0, %s98
    %s102 = sphi 0, %s101
    %s118 = sphi 0, %s102
    %s124 = sphi 0, %s126
    %s127 = sphi 0, %s124
    %s128 = sphi 0, %s127
    %s144 = sphi 0, %s128
    %s150 = sphi 0, %s152
    %s153 = sphi 0, %s150
    %s154 = sphi 0, %s153
    %s170 = sphi 0, %s154
    %s176 = sphi 0, %s178
    %s179 = sphi 0, %s176
    %s180 = sphi 0, %s179
    %s196 = sphi 0, %s180
    %s202 = sphi 0, %s204
    %s205 = sphi 0, %s202
    %s206 = sphi 0, %s205
    %s222 = sphi 0, %s206
    %s228 = sphi 0, %s230
    %s231 = sphi 0, %s228
    %s232 = sphi 0, %s231
    %s248 = sphi 0, %s232
  $region4: #{encoder_forward.3} parent=0 // loop_header_branch
    %18 = sbr.rel (%p16) target = $region8
  $region5: #{encoder_forward.3} parent=0 // loop_body
    %s20 = ssub.s32 %s15, 1
    %s21 = ssub.s32 %s15, 2
    %s22 = sadd.s32 %s15, 1
    %s24 = sadd.s32 %s23, 1
    %p27 = scmp.eq.s32.totalorder %s15, 1
    %p28 = scmp.ne.s32.totalorder %s23, %s25
    %p29 = scmp.eq.s32.totalorder %s15, 0
    %p30 = por %p28, %p29
    %p31 = scmp.ne.s32.totalorder %s23, %s25
    %p32 = scmp.eq.s32.totalorder %s20, 1
    %p33 = por %p31, %p32
    %p34 = scmp.ne.s32.totalorder %s25, %s26
    %p35 = scmp.eq.s32.totalorder %s20, 0
    %p36 = por %p34, %p35
    %p37 = scmp.ne.s32.totalorder %s25, %s26
    %p38 = scmp.eq.s32.totalorder %s21, 1
    %p39 = por %p37, %p38
    %p41 = scmp.ne.s32.totalorder %s26, %s40
    %p42 = scmp.eq.s32.totalorder %s21, 0
    %p43 = por %p41, %p42
    %s44 = ssub.s32 %s15, %s22
    %p45 = scmp.eq.s32.totalorder %s44, 0
    %s47 = sadd.s32 %s46, 1
    %s48 = scalar_select %p45, %s46, %s47
    %p51 = pneg %p45
    %p52 = scmp.eq.s32.totalorder %s15, 1
    %p53 = por %p51, %p52
    %p54 = scmp.ne.s32.totalorder %s46, %s49
    %p55 = scmp.eq.s32.totalorder %s15, 0
    %p56 = por %p54, %p55
    %p57 = scmp.ne.s32.totalorder %s46, %s49
    %p58 = scmp.eq.s32.totalorder %s20, 1
    %p59 = por %p57, %p58
    %p60 = scmp.ne.s32.totalorder %s49, %s50
    %p61 = scmp.eq.s32.totalorder %s20, 0
    %p62 = por %p60, %p61
    %p63 = scmp.ne.s32.totalorder %s49, %s50
    %p64 = scmp.eq.s32.totalorder %s21, 1
    %p65 = por %p63, %p64
    %p67 = scmp.ne.s32.totalorder %s50, %s66
    %p68 = scmp.eq.s32.totalorder %s21, 0
    %p69 = por %p67, %p68
    %s70 = ssub.s32 %s15, %s22
    %p71 = scmp.eq.s32.totalorder %s70, 0
    %s73 = sadd.s32 %s72, 1
    %s74 = scalar_select %p71, %s72, %s73
    %p77 = pneg %p71
    %p78 = scmp.eq.s32.totalorder %s15, 1
    %p79 = por %p77, %p78
    %p80 = scmp.ne.s32.totalorder %s72, %s75
    %p81 = scmp.eq.s32.totalorder %s15, 0
    %p82 = por %p80, %p81
    %p83 = scmp.ne.s32.totalorder %s72, %s75
    %p84 = scmp.eq.s32.totalorder %s20, 1
    %p85 = por %p83, %p84
    %p86 = scmp.ne.s32.totalorder %s75, %s76
    %p87 = scmp.eq.s32.totalorder %s20, 0
    %p88 = por %p86, %p87
    %p89 = scmp.ne.s32.totalorder %s75, %s76
    %p90 = scmp.eq.s32.totalorder %s21, 1
    %p91 = por %p89, %p90
    %p93 = scmp.ne.s32.totalorder %s76, %s92
    %p94 = scmp.eq.s32.totalorder %s21, 0
    %p95 = por %p93, %p94
    %s96 = ssub.s32 %s15, %s22
    %p97 = scmp.eq.s32.totalorder %s96, 0
    %s99 = sadd.s32 %s98, 1
    %s100 = scalar_select %p97, %s98, %s99
    %p103 = pneg %p97
    %p104 = scmp.eq.s32.totalorder %s15, 1
    %p105 = por %p103, %p104
    %p106 = scmp.ne.s32.totalorder %s98, %s101
    %p107 = scmp.eq.s32.totalorder %s15, 0
    %p108 = por %p106, %p107
    %p109 = scmp.ne.s32.totalorder %s98, %s101
    %p110 = scmp.eq.s32.totalorder %s20, 1
    %p111 = por %p109, %p110
    %p112 = scmp.ne.s32.totalorder %s101, %s102
    %p113 = scmp.eq.s32.totalorder %s20, 0
    %p114 = por %p112, %p113
    %p115 = scmp.ne.s32.totalorder %s101, %s102
    %p116 = scmp.eq.s32.totalorder %s21, 1
    %p117 = por %p115, %p116
    %p119 = scmp.ne.s32.totalorder %s102, %s118
    %p120 = scmp.eq.s32.totalorder %s21, 0
    %p121 = por %p119, %p120
    %s122 = ssub.s32 %s15, %s22
    %p123 = scmp.eq.s32.totalorder %s122, 0
    %s125 = sadd.s32 %s124, 1
    %s126 = scalar_select %p123, %s124, %s125
    %p129 = pneg %p123
    %p130 = scmp.eq.s32.totalorder %s15, 1
    %p131 = por %p129, %p130
    %p132 = scmp.ne.s32.totalorder %s124, %s127
    %p133 = scmp.eq.s32.totalorder %s15, 0
    %p134 = por %p132, %p133
    %p135 = scmp.ne.s32.totalorder %s124, %s127
    %p136 = scmp.eq.s32.totalorder %s20, 1
    %p137 = por %p135, %p136
    %p138 = scmp.ne.s32.totalorder %s127, %s128
    %p139 = scmp.eq.s32.totalorder %s20, 0
    %p140 = por %p138, %p139
    %p141 = scmp.ne.s32.totalorder %s127, %s128
    %p142 = scmp.eq.s32.totalorder %s21, 1
    %p143 = por %p141, %p142
    %p145 = scmp.ne.s32.totalorder %s128, %s144
    %p146 = scmp.eq.s32.totalorder %s21, 0
    %p147 = por %p145, %p146
    %s148 = ssub.s32 %s15, %s22
    %p149 = scmp.eq.s32.totalorder %s148, 0
    %s151 = sadd.s32 %s150, 1
    %s152 = scalar_select %p149, %s150, %s151
    %p155 = pneg %p149
    %p156 = scmp.eq.s32.totalorder %s15, 1
    %p157 = por %p155, %p156
    %p158 = scmp.ne.s32.totalorder %s150, %s153
    %p159 = scmp.eq.s32.totalorder %s15, 0
    %p160 = por %p158, %p159
    %p161 = scmp.ne.s32.totalorder %s150, %s153
    %p162 = scmp.eq.s32.totalorder %s20, 1
    %p163 = por %p161, %p162
    %p164 = scmp.ne.s32.totalorder %s153, %s154
    %p165 = scmp.eq.s32.totalorder %s20, 0
    %p166 = por %p164, %p165
    %p167 = scmp.ne.s32.totalorder %s153, %s154
    %p168 = scmp.eq.s32.totalorder %s21, 1
    %p169 = por %p167, %p168
    %p171 = scmp.ne.s32.totalorder %s154, %s170
    %p172 = scmp.eq.s32.totalorder %s21, 0
    %p173 = por %p171, %p172
    %s174 = ssub.s32 %s15, %s22
    %p175 = scmp.eq.s32.totalorder %s174, 0
    %s177 = sadd.s32 %s176, 1
    %s178 = scalar_select %p175, %s176, %s177
    %p181 = pneg %p175
    %p182 = scmp.eq.s32.totalorder %s15, 1
    %p183 = por %p181, %p182
    %p184 = scmp.ne.s32.totalorder %s176, %s179
    %p185 = scmp.eq.s32.totalorder %s15, 0
    %p186 = por %p184, %p185
    %p187 = scmp.ne.s32.totalorder %s176, %s179
    %p188 = scmp.eq.s32.totalorder %s20, 1
    %p189 = por %p187, %p188
    %p190 = scmp.ne.s32.totalorder %s179, %s180
    %p191 = scmp.eq.s32.totalorder %s20, 0
    %p192 = por %p190, %p191
    %p193 = scmp.ne.s32.totalorder %s179, %s180
    %p194 = scmp.eq.s32.totalorder %s21, 1
    %p195 = por %p193, %p194
    %p197 = scmp.ne.s32.totalorder %s180, %s196
    %p198 = scmp.eq.s32.totalorder %s21, 0
    %p199 = por %p197, %p198
    %s200 = ssub.s32 %s15, %s22
    %p201 = scmp.eq.s32.totalorder %s200, 0
    %s203 = sadd.s32 %s202, 1
    %s204 = scalar_select %p201, %s202, %s203
    %p207 = pneg %p201
    %p208 = scmp.eq.s32.totalorder %s15, 1
    %p209 = por %p207, %p208
    %p210 = scmp.ne.s32.totalorder %s202, %s205
    %p211 = scmp.eq.s32.totalorder %s15, 0
    %p212 = por %p210, %p211
    %p213 = scmp.ne.s32.totalorder %s202, %s205
    %p214 = scmp.eq.s32.totalorder %s20, 1
    %p215 = por %p213, %p214
    %p216 = scmp.ne.s32.totalorder %s205, %s206
    %p217 = scmp.eq.s32.totalorder %s20, 0
    %p218 = por %p216, %p217
    %p219 = scmp.ne.s32.totalorder %s205, %s206
    %p220 = scmp.eq.s32.totalorder %s21, 1
    %p221 = por %p219, %p220
    %p223 = scmp.ne.s32.totalorder %s206, %s222
    %p224 = scmp.eq.s32.totalorder %s21, 0
    %p225 = por %p223, %p224
    %s226 = ssub.s32 %s15, %s22
    %p227 = scmp.eq.s32.totalorder %s226, 0
    %s229 = sadd.s32 %s228, 1
    %s230 = scalar_select %p227, %s228, %s229
    %p233 = pneg %p227
    %p234 = scmp.eq.s32.totalorder %s15, 1
    %p235 = por %p233, %p234
    %p236 = scmp.ne.s32.totalorder %s228, %s231
    %p237 = scmp.eq.s32.totalorder %s15, 0
    %p238 = por %p236, %p237
    %p239 = scmp.ne.s32.totalorder %s228, %s231
    %p240 = scmp.eq.s32.totalorder %s20, 1
    %p241 = por %p239, %p240
    %p242 = scmp.ne.s32.totalorder %s231, %s232
    %p243 = scmp.eq.s32.totalorder %s20, 0
    %p244 = por %p242, %p243
    %p245 = scmp.ne.s32.totalorder %s231, %s232
    %p246 = scmp.eq.s32.totalorder %s21, 1
    %p247 = por %p245, %p246
    %p249 = scmp.ne.s32.totalorder %s232, %s248
    %p250 = scmp.eq.s32.totalorder %s21, 0
    %p251 = por %p249, %p250
    %p252 = scmp.le.s32.totalorder 1, %s15
    %p253 = scmp.lt.s32.totalorder %s15, 3
    %p254 = pnand %p252, %p253
    %p255 = pneg %p254
    // Predicated region
    $region9: #{encoder_forward.3} parent=5 // pred_check
      _
    $region10: #{encoder_forward.3} parent=5 // pred_check_branch
      %257 = sbr.rel (%p254) target = $region12
    $region11: #{encoder_forward.3} parent=5 // pred_region
      %s258 = ssub.s32 %s15, 1
      // Predicated region
      $region13: #{encoder_forward.3} parent=11 // pred_check
        %p259 = pneg %p36
      $region14: #{encoder_forward.3} parent=11 // pred_check_branch
        %261 = sbr.rel (%p259) target = $region16
      $region15: #{encoder_forward.3} parent=11 // pred_region
        _
      $region16: #{encoder_forward.3} parent=11 // pred_fallthru
        _
    $region12: #{encoder_forward.3} parent=5 // pred_fallthru
      _
    %p262 = scmp.lt.s32.totalorder %s15, 2
    // Predicated region
    $region17: #{encoder_forward.3} parent=5 // pred_check
      %p263 = pneg %p262
    $region18: #{encoder_forward.3} parent=5 // pred_check_branch
      %265 = sbr.rel (%p263) target = $region20
    $region19: #{encoder_forward.3} parent=5 // pred_region
      // Predicated region
      $region21: #{encoder_forward.3} parent=19 // pred_check
        %p266 = pneg %p56
      $region22: #{encoder_forward.3} parent=19 // pred_check_branch
        %268 = sbr.rel (%p266) target = $region24
      $region23: #{encoder_forward.3} parent=19 // pred_region
        %p269 = scmp.lt.s32.totalorder %s15, 1
        %s270 = scalar_select %p269, %s15, 1
        %s271 = smul.addr %s270, 8
        %s272 = scalar_lea.vmem %s1, %s271
      $region24: #{encoder_forward.3} parent=19 // pred_fallthru
        _
      // Predicated region
      $region25: #{encoder_forward.3} parent=19 // pred_check
        %p273 = pneg %p82
      $region26: #{encoder_forward.3} parent=19 // pred_check_branch
        %275 = sbr.rel (%p273) target = $region28
      $region27: #{encoder_forward.3} parent=19 // pred_region
        %p276 = scmp.lt.s32.totalorder %s15, 1
        %s277 = scalar_select %p276, %s15, 1
        %s278 = smul.addr %s277, 8
        %s279 = scalar_lea.vmem %s2, %s278
      $region28: #{encoder_forward.3} parent=19 // pred_fallthru
        _
      // Predicated region
      $region29: #{encoder_forward.3} parent=19 // pred_check
        %p280 = pneg %p108
      $region30: #{encoder_forward.3} parent=19 // pred_check_branch
        %282 = sbr.rel (%p280) target = $region32
      $region31: #{encoder_forward.3} parent=19 // pred_region
        %p283 = scmp.lt.s32.totalorder %s15, 1
        %s284 = scalar_select %p283, %s15, 1
        %s285 = smul.addr %s284, 8
        %s286 = smul.addr %s285, 8
        %s287 = scalar_lea.vmem %s3, %s286
      $region32: #{encoder_forward.3} parent=19 // pred_fallthru
        _
      // Predicated region
      $region33: #{encoder_forward.3} parent=19 // pred_check
        %p288 = pneg %p134
      $region34: #{encoder_forward.3} parent=19 // pred_check_branch
        %290 = sbr.rel (%p288) target = $region36
      $region35: #{encoder_forward.3} parent=19 // pred_region
        %p291 = scmp.lt.s32.totalorder %s15, 1
        %s292 = scalar_select %p291, %s15, 1
        %s293 = smul.addr %s292, 4
        %s294 = smul.addr %s293, 8
        %s295 = scalar_lea.vmem %s4, %s294
      $region36: #{encoder_forward.3} parent=19 // pred_fallthru
        _
      // Predicated region
      $region37: #{encoder_forward.3} parent=19 // pred_check
        %p296 = pneg %p160
      $region38: #{encoder_forward.3} parent=19 // pred_check_branch
        %298 = sbr.rel (%p296) target = $region40
      $region39: #{encoder_forward.3} parent=19 // pred_region
        %p299 = scmp.lt.s32.totalorder %s15, 1
        %s300 = scalar_select %p299, %s15, 1
        %s301 = scalar_lea.vmem %s5, %s300
      $region40: #{encoder_forward.3} parent=19 // pred_fallthru
        _
    $region20: #{encoder_forward.3} parent=5 // pred_fallthru
      _
    %p302 = scmp.le.s32.totalorder 1, %s15
    %p303 = scmp.lt.s32.totalorder %s15, 3
    %p304 = pnand %p302, %p303
    %p305 = pneg %p304
    // Predicated region
    $region41: #{encoder_forward.3} parent=5 // pred_check
      _
    $region42: #{encoder_forward.3} parent=5 // pred_check_branch
      %307 = sbr.rel (%p304) target = $region44
    $region43: #{encoder_forward.3} parent=5 // pred_region
      %s308 = ssub.s32 %s15, 1
      %p309 = pneg %p36
      %p310 = pneg %p33
      %p311 = scmp.lt.s32.totalorder %s20, 1
      %s312 = scalar_select %p311, %s20, 1
      %s313 = smul.addr %s312, 8
      %s314 = scalar_lea.vmem %s1, %s313
      %p315 = pneg %p62
      %p316 = pneg %p59
      %p317 = scmp.lt.s32.totalorder %s20, 1
      %s318 = scalar_select %p317, %s20, 1
      %s319 = smul.addr %s318, 8
      %s320 = scalar_lea.vmem %s2, %s319
      %p321 = pneg %p88
      %p322 = pneg %p85
      %p323 = scmp.lt.s32.totalorder %s20, 1
      %s324 = scalar_select %p323, %s20, 1
      %s325 = smul.addr %s324, 8
      %s326 = smul.addr %s325, 8
      %s327 = scalar_lea.vmem %s3, %s326
      %p328 = pneg %p114
      %p329 = pneg %p111
      %p330 = scmp.lt.s32.totalorder %s20, 1
      %s331 = scalar_select %p330, %s20, 1
      %s332 = smul.addr %s331, 4
      %s333 = smul.addr %s332, 8
      %s334 = scalar_lea.vmem %s4, %s333
      %p335 = pneg %p140
      %p336 = pneg %p137
      %p337 = scmp.lt.s32.totalorder %s20, 1
      %s338 = scalar_select %p337, %s20, 1
      %s339 = scalar_lea.vmem %s5, %s338
      %p340 = pneg %p166
      %p341 = pneg %p163
      %p342 = pneg %p192
      %p343 = pneg %p189
      %p344 = scmp.lt.s32.totalorder %s20, 1
      %s345 = scalar_select %p344, %s20, 1
      %s346 = smul.addr %s345, 8
      %s347 = smul.addr %s346, 8
      %s348 = scalar_lea.vmem %s6, %s347
      %p349 = pneg %p218
      %p350 = pneg %p215
      %p351 = scmp.lt.s32.totalorder %s20, 1
      %s352 = scalar_select %p351, %s20, 1
      %s353 = smul.addr %s352, 8
      %s354 = scalar_lea.vmem %s7, %s353
      %p355 = pneg %p244
      %p356 = pneg %p241
      %p357 = scmp.lt.s32.totalorder %s20, 1
      %s358 = scalar_select %p357, %s20, 1
      %s359 = smul.addr %s358, 8
      %s360 = scalar_lea.vmem %s8, %s359
      %p361 = scmp.lt.s32.totalorder %s20, 1
      %s362 = scalar_select %p361, %s20, 1
      %s363 = smul.addr %s362, 8
      %s364 = scalar_lea.vmem %s1, %s363
      %p365 = scmp.lt.s32.totalorder %s20, 1
      %s366 = scalar_select %p365, %s20, 1
      %s367 = smul.addr %s366, 8
      %s368 = scalar_lea.vmem %s2, %s367
      %p369 = scmp.lt.s32.totalorder %s20, 1
      %s370 = scalar_select %p369, %s20, 1
      %s371 = smul.addr %s370, 8
      %s372 = smul.addr %s371, 8
      %s373 = scalar_lea.vmem %s3, %s372
      %p374 = scmp.lt.s32.totalorder %s20, 1
      %s375 = scalar_select %p374, %s20, 1
      %s376 = smul.addr %s375, 4
      %s377 = smul.addr %s376, 8
      %s378 = scalar_lea.vmem %s4, %s377
      %p379 = scmp.lt.s32.totalorder %s20, 1
      %s380 = scalar_select %p379, %s20, 1
      %s381 = scalar_lea.vmem %s5, %s380
      %p382 = scmp.lt.s32.totalorder %s20, 1
      %s383 = scalar_select %p382, %s20, 1
      %s384 = smul.addr %s383, 8
      %s385 = smul.addr %s384, 8
      %s386 = scalar_lea.vmem %s6, %s385
      %p387 = scmp.lt.s32.totalorder %s20, 1
      %s388 = scalar_select %p387, %s20, 1
      %s389 = smul.addr %s388, 8
      %s390 = scalar_lea.vmem %s7, %s389
      %p391 = scmp.lt.s32.totalorder %s20, 1
      %s392 = scalar_select %p391, %s20, 1
      %s393 = smul.addr %s392, 8
      %s394 = scalar_lea.vmem %s8, %s393
      %v395 = vld [vmem:[%s0] sm:$0xff]
      %v396 = vld [vmem:[%s0 + $0x8] sm:$0xff]
      %v397 = vld [vmem:[%s0 + $0x10] sm:$0xff]
      %v398 = vld [vmem:[%s0 + $0x18] sm:$0xff]
      %v399 = vld [vmem:[%s0 + $0x20] sm:$0xff]
      %v400 = vld [vmem:[%s0 + $0x28] sm:$0xff]
      %v401 = vld [vmem:[%s0 + $0x30] sm:$0xff]
      %v402 = vld [vmem:[%s0 + $0x38] sm:$0xff]
      %v403 = vld [vmem:[%s373] sm:$0xff]
      %v404 = vld [vmem:[%s373 + $0x8] sm:$0xff]
      %v405 = vld [vmem:[%s373 + $0x10] sm:$0xff]
      %v406 = vld [vmem:[%s373 + $0x18] sm:$0xff]
      %s407 = scalar_lea.vmem %s0, 64
      %v408 = vld [vmem:[%s407] sm:$0xff]
      %v409 = vld [vmem:[%s407 + $0x8] sm:$0xff]
      %v410 = vld [vmem:[%s407 + $0x10] sm:$0xff]
      %v411 = vld [vmem:[%s407 + $0x18] sm:$0xff]
      %v412 = vld [vmem:[%s407 + $0x20] sm:$0xff]
      %v413 = vld [vmem:[%s407 + $0x28] sm:$0xff]
      %v414 = vld [vmem:[%s407 + $0x30] sm:$0xff]
      %v415 = vld [vmem:[%s407 + $0x38] sm:$0xff]
      %s416 = scalar_lea.vmem %s373, 32
      %v417 = vld [vmem:[%s416] sm:$0xff]
      %v418 = vld [vmem:[%s416 + $0x8] sm:$0xff]
      %v419 = vld [vmem:[%s416 + $0x10] sm:$0xff]
      %v420 = vld [vmem:[%s416 + $0x18] sm:$0xff]
      %vm421 = vcmask 261120
      %v423 = vsel %vm421, %v408, 0
      %v426 = vsel %vm421, %v409, 0
      %v429 = vsel %vm421, %v410, 0
      %v432 = vsel %vm421, %v411, 0
      %v435 = vsel %vm421, %v412, 0
      %v438 = vsel %vm421, %v413, 0
      %v441 = vsel %vm421, %v414, 0
      %v444 = vsel %vm421, %v415, 0
      %446 = vmatpush.msra.mxu0 0.0
      %447 = vmatpush.msra.mxu0 0.0
      %448 = vmatpush.msra.mxu0 0.0
      %449 = vmatpush.msra.mxu0 0.0
      %450 = vmatpush.msra.mxu0 0.0
      %451 = vmatpush.msra.mxu0 0.0
      %452 = vmatpush.msra.mxu0 0.0
      %453 = vmatpush.msra.mxu0 0.0
      %454 = vmatpush.msra.mxu0 0.0
      %455 = vmatpush.msra.mxu0 0.0
      %456 = vmatpush.msra.mxu0 0.0
      %457 = vmatpush.msra.mxu0 0.0
      %458 = vmatpush.msra.mxu0 %v420
      %459 = vmatpush.msra.mxu0 %v419
      %460 = vmatpush.msra.mxu0 %v418
      %461 = vmatpush.msra.mxu0 %v417
      %462 = vmatmul.f32.gmra.mxu0 %v423
      %v463 = vpop.f32.mrf.mxu0
      %v464 = vadd.f32 0.0, %v463
      %465 = vmatmul.f32.gmra.mxu0 %v426
      %v466 = vpop.f32.mrf.mxu0
      %v467 = vadd.f32 0.0, %v466
      %468 = vmatmul.f32.gmra.mxu0 %v429
      %v469 = vpop.f32.mrf.mxu0
      %v470 = vadd.f32 0.0, %v469
      %471 = vmatmul.f32.gmra.mxu0 %v432
      %v472 = vpop.f32.mrf.mxu0
      %v473 = vadd.f32 0.0, %v472
      %474 = vmatmul.f32.gmra.mxu0 %v435
      %v475 = vpop.f32.mrf.mxu0
      %v476 = vadd.f32 0.0, %v475
      %477 = vmatmul.f32.gmra.mxu0 %v438
      %v478 = vpop.f32.mrf.mxu0
      %v479 = vadd.f32 0.0, %v478
      %480 = vmatmul.f32.gmra.mxu0 %v441
      %v481 = vpop.f32.mrf.mxu0
      %v482 = vadd.f32 0.0, %v481
      %483 = vmatmul.f32.gmra.mxu0 %v444
      %v484 = vpop.f32.mrf.mxu0
      %v485 = vadd.f32 0.0, %v484
      %486 = vdwg.mxu0
      %v488 = vsel %vm421, %v395, 0
      %v491 = vsel %vm421, %v396, 0
      %v494 = vsel %vm421, %v397, 0
      %v497 = vsel %vm421, %v398, 0
      %v500 = vsel %vm421, %v399, 0
      %v503 = vsel %vm421, %v400, 0
      %v506 = vsel %vm421, %v401, 0
      %v509 = vsel %vm421, %v402, 0
      %511 = vmatpush.msra.mxu0 0.0
      %512 = vmatpush.msra.mxu0 0.0
      %513 = vmatpush.msra.mxu0 0.0
      %514 = vmatpush.msra.mxu0 0.0
      %515 = vmatpush.msra.mxu0 0.0
      %516 = vmatpush.msra.mxu0 0.0
      %517 = vmatpush.msra.mxu0 0.0
      %518 = vmatpush.msra.mxu0 0.0
      %519 = vmatpush.msra.mxu0 0.0
      %520 = vmatpush.msra.mxu0 0.0
      %521 = vmatpush.msra.mxu0 0.0
      %522 = vmatpush.msra.mxu0 0.0
      %523 = vmatpush.msra.mxu0 %v406
      %524 = vmatpush.msra.mxu0 %v405
      %525 = vmatpush.msra.mxu0 %v404
      %526 = vmatpush.msra.mxu0 %v403
      %527 = vmatmul.f32.gmra.mxu0 %v488
      %v528 = vpop.f32.mrf.mxu0
      %v529 = vadd.f32 %v464, %v528
      %530 = vmatmul.f32.gmra.mxu0 %v491
      %v531 = vpop.f32.mrf.mxu0
      %v532 = vadd.f32 %v467, %v531
      %533 = vmatmul.f32.gmra.mxu0 %v494
      %v534 = vpop.f32.mrf.mxu0
      %v535 = vadd.f32 %v470, %v534
      %536 = vmatmul.f32.gmra.mxu0 %v497
      %v537 = vpop.f32.mrf.mxu0
      %v538 = vadd.f32 %v473, %v537
      %539 = vmatmul.f32.gmra.mxu0 %v500
      %v540 = vpop.f32.mrf.mxu0
      %v541 = vadd.f32 %v476, %v540
      %542 = vmatmul.f32.gmra.mxu0 %v503
      %v543 = vpop.f32.mrf.mxu0
      %v544 = vadd.f32 %v479, %v543
      %545 = vmatmul.f32.gmra.mxu0 %v506
      %v546 = vpop.f32.mrf.mxu0
      %v547 = vadd.f32 %v482, %v546
      %548 = vmatmul.f32.gmra.mxu0 %v509
      %v549 = vpop.f32.mrf.mxu0
      %v550 = vadd.f32 %v485, %v549
      %551 = vdwg.mxu0
      %v552 = vld [vmem:[%s381] sm:$0x1]
      %v554 = vperm.slane %v552, 0
      %v556 = vadd.f32 %v529, %v554
      %v557 = vadd.f32 %v532, %v554
      %v558 = vadd.f32 %v535, %v554
      %v559 = vadd.f32 %v538, %v554
      %v560 = vadd.f32 %v541, %v554
      %v561 = vadd.f32 %v544, %v554
      %v562 = vadd.f32 %v547, %v554
      %v563 = vadd.f32 %v550, %v554
      %564 = vst [vmem:[#allocation2] sm:$0xff] %v556
      %565 = vst [vmem:[#allocation2 + $0x8] sm:$0xff] %v557
      %566 = vst [vmem:[#allocation2 + $0x10] sm:$0xff] %v558
      %567 = vst [vmem:[#allocation2 + $0x18] sm:$0xff] %v559
      %568 = vst [vmem:[#allocation2 + $0x20] sm:$0xff] %v560
      %569 = vst [vmem:[#allocation2 + $0x28] sm:$0xff] %v561
      %570 = vst [vmem:[#allocation2 + $0x30] sm:$0xff] %v562
      %571 = vst [vmem:[#allocation2 + $0x38] sm:$0xff] %v563
      %v572 = vld [vmem:[%s378] sm:$0xff]
      %v573 = vld [vmem:[%s378 + $0x8] sm:$0xff]
      %v574 = vld [vmem:[%s378 + $0x10] sm:$0xff]
      %v575 = vld [vmem:[%s378 + $0x18] sm:$0xff]
      %v576 = vld [vmem:[%s364] sm:$0xff]
      %v577 = vld [vmem:[%s368] sm:$0xff]
      %p578 = scmp.eq.s32.totalorder %s20, 0
      %s579 = scalar_select %p578, 0, 7
      %s580 = smul.u32 %s579, 8
      %s581 = scalar_lea.vmem [#allocation2], %s580
      %v582 = vld [vmem:[%s581] sm:$0xff]
      %v584 = vsel %vm421, %v576, 0
      %586 = vmatpush.msra.mxu0 0.0
      %587 = vmatpush.msra.mxu0 0.0
      %588 = vmatpush.msra.mxu0 0.0
      %589 = vmatpush.msra.mxu0 0.0
      %590 = vmatpush.msra.mxu0 0.0
      %591 = vmatpush.msra.mxu0 0.0
      %592 = vmatpush.msra.mxu0 0.0
      %593 = vmatpush.msra.mxu0 0.0
      %594 = vmatpush.msra.mxu0 0.0
      %595 = vmatpush.msra.mxu0 0.0
      %596 = vmatpush.msra.mxu0 0.0
      %597 = vmatpush.msra.mxu0 0.0
      %598 = vmatpush.msra.mxu0 %v575
      %599 = vmatpush.msra.mxu0 %v574
      %600 = vmatpush.msra.mxu0 %v573
      %601 = vmatpush.msra.mxu0 %v572
      %602 = vmatmul.f32.gmra.mxu0 %v584
      %v603 = vpop.f32.mrf.mxu0
      %v604 = vadd.f32 0.0, %v603
      %605 = vdwg.mxu0
      %v606 = vadd.f32 %v582, %v604
      %v607 = vxor.u32 %v606, 2147483648
      %v608 = vmul.f32 %v607, 1.442695
      %v609 = vpow.pop %v608
      %v610 = vadd.f32 %v609, 1.0
      %v611 = vrcp.pop %v610
      %v612 = vmul.f32 %v610, %v611
      %v613 = vsub.f32 1.0, %v612
      %v614 = vmul.f32 %v611, %v613
      %v615 = vadd.f32 %v611, %v614
      %vm616 = vweird.f32 %v610
      %vm617 = vweird.f32 %v611
      %vm618 = vmor %vm616, %vm617
      %v619 = vsel %vm618, %v611, %v615
      %v620 = vand.u32 2147483647, %v610
      %vm621 = vcmp.eq.f32.partialorder %v620, 8.507059e+37
      %v622 = vand.u32 %v610, 2147483648
      %v623 = vor.u32 1.1754944e-38, %v622
      %v624 = vsel %vm621, %v623, %v619
      %v625 = vmul.f32 1.0, %v624
      %v626 = vtanh.pop %v606
      %628 = vrot.lane.b32.xlu0 %v577, 32
      %v629 = vpop.permute.xlu0 %628
      %v631 = vmul.f32 %v625, %v629
      %633 = vrot.lane.b32.xlu0 %v626, 64
      %v634 = vpop.permute.xlu0 %633
      %v636 = vmul.f32 %v625, %v634
      %638 = vrot.lane.b32.xlu0 %v636, 32
      %v639 = vpop.permute.xlu0 %638
      %v641 = vadd.f32 %v631, %v639
      %v642 = vtanh.pop %v641
      %644 = vrot.lane.b32.xlu0 %v642, 64
      %v645 = vpop.permute.xlu0 %644
      %v647 = vmul.f32 %v625, %v645
      %649 = vrot.lane.b32.xlu0 %v647, 32
      %v650 = vpop.permute.xlu0 %649
      %s652 = scalar_lea.vmem %s386, %s580
      %653 = vst.msk [vmem:[%s652] sm:$0xff] %vm421, %v650
      %s654 = scalar_select %p578, 1, 6
      %s655 = smul.u32 %s654, 8
      %s656 = scalar_lea.vmem [#allocation2], %s655
      %v657 = vld [vmem:[%s656] sm:$0xff]
      %v658 = vsel %vm421, %v650, 0
      %660 = vmatpush.msra.mxu0 0.0
      %661 = vmatpush.msra.mxu0 0.0
      %662 = vmatpush.msra.mxu0 0.0
      %663 = vmatpush.msra.mxu0 0.0
      %664 = vmatpush.msra.mxu0 0.0
      %665 = vmatpush.msra.mxu0 0.0
      %666 = vmatpush.msra.mxu0 0.0
      %667 = vmatpush.msra.mxu0 0.0
      %668 = vmatpush.msra.mxu0 0.0
      %669 = vmatpush.msra.mxu0 0.0
      %670 = vmatpush.msra.mxu0 0.0
      %671 = vmatpush.msra.mxu0 0.0
      %672 = vmatpush.msra.mxu0 %v575
      %673 = vmatpush.msra.mxu0 %v574
      %674 = vmatpush.msra.mxu0 %v573
      %675 = vmatpush.msra.mxu0 %v572
      %676 = vmatmul.f32.gmra.mxu0 %v658
      %v677 = vpop.f32.mrf.mxu0
      %v678 = vadd.f32 0.0, %v677
      %679 = vdwg.mxu0
      %v680 = vadd.f32 %v657, %v678
      %v681 = vxor.u32 %v680, 2147483648
      %v682 = vmul.f32 %v681, 1.442695
      %v683 = vpow.pop %v682
      %v684 = vadd.f32 %v683, 1.0
      %v685 = vrcp.pop %v684
      %v686 = vmul.f32 %v684, %v685
      %v687 = vsub.f32 1.0, %v686
      %v688 = vmul.f32 %v685, %v687
      %v689 = vadd.f32 %v685, %v688
      %vm690 = vweird.f32 %v684
      %vm691 = vweird.f32 %v685
      %vm692 = vmor %vm690, %vm691
      %v693 = vsel %vm692, %v685, %v689
      %v694 = vand.u32 2147483647, %v684
      %vm695 = vcmp.eq.f32.partialorder %v694, 8.507059e+37
      %v696 = vand.u32 %v684, 2147483648
      %v697 = vor.u32 1.1754944e-38, %v696
      %v698 = vsel %vm695, %v697, %v693
      %v699 = vmul.f32 1.0, %v698
      %v700 = vtanh.pop %v680
      %v701 = vmul.f32 %v699, %v641
      %703 = vrot.lane.b32.xlu0 %v700, 64
      %v704 = vpop.permute.xlu0 %703
      %v706 = vmul.f32 %v699, %v704
      %708 = vrot.lane.b32.xlu0 %v706, 32
      %v709 = vpop.permute.xlu0 %708
      %v711 = vadd.f32 %v701, %v709
      %v712 = vtanh.pop %v711
      %714 = vrot.lane.b32.xlu0 %v712, 64
      %v715 = vpop.permute.xlu0 %714
      %v717 = vmul.f32 %v699, %v715
      %719 = vrot.lane.b32.xlu0 %v717, 32
      %v720 = vpop.permute.xlu0 %719
      %s722 = scalar_lea.vmem %s386, %s655
      %723 = vst.msk [vmem:[%s722] sm:$0xff] %vm421, %v720
      %s724 = scalar_select %p578, 2, 5
      %s725 = smul.u32 %s724, 8
      %s726 = scalar_lea.vmem [#allocation2], %s725
      %v727 = vld [vmem:[%s726] sm:$0xff]
      %v728 = vsel %vm421, %v720, 0
      %730 = vmatpush.msra.mxu0 0.0
      %731 = vmatpush.msra.mxu0 0.0
      %732 = vmatpush.msra.mxu0 0.0
      %733 = vmatpush.msra.mxu0 0.0
      %734 = vmatpush.msra.mxu0 0.0
      %735 = vmatpush.msra.mxu0 0.0
      %736 = vmatpush.msra.mxu0 0.0
      %737 = vmatpush.msra.mxu0 0.0
      %738 = vmatpush.msra.mxu0 0.0
      %739 = vmatpush.msra.mxu0 0.0
      %740 = vmatpush.msra.mxu0 0.0
      %741 = vmatpush.msra.mxu0 0.0
      %742 = vmatpush.msra.mxu0 %v575
      %743 = vmatpush.msra.mxu0 %v574
      %744 = vmatpush.msra.mxu0 %v573
      %745 = vmatpush.msra.mxu0 %v572
      %746 = vmatmul.f32.gmra.mxu0 %v728
      %v747 = vpop.f32.mrf.mxu0
      %v748 = vadd.f32 0.0, %v747
      %749 = vdwg.mxu0
      %v750 = vadd.f32 %v727, %v748
      %v751 = vxor.u32 %v750, 2147483648
      %v752 = vmul.f32 %v751, 1.442695
      %v753 = vpow.pop %v752
      %v754 = vadd.f32 %v753, 1.0
      %v755 = vrcp.pop %v754
      %v756 = vmul.f32 %v754, %v755
      %v757 = vsub.f32 1.0, %v756
      %v758 = vmul.f32 %v755, %v757
      %v759 = vadd.f32 %v755, %v758
      %vm760 = vweird.f32 %v754
      %vm761 = vweird.f32 %v755
      %vm762 = vmor %vm760, %vm761
      %v763 = vsel %vm762, %v755, %v759
      %v764 = vand.u32 2147483647, %v754
      %vm765 = vcmp.eq.f32.partialorder %v764, 8.507059e+37
      %v766 = vand.u32 %v754, 2147483648
      %v767 = vor.u32 1.1754944e-38, %v766
      %v768 = vsel %vm765, %v767, %v763
      %v769 = vmul.f32 1.0, %v768
      %v770 = vtanh.pop %v750
      %v771 = vmul.f32 %v769, %v711
      %773 = vrot.lane.b32.xlu0 %v770, 64
      %v774 = vpop.permute.xlu0 %773
      %v776 = vmul.f32 %v769, %v774
      %778 = vrot.lane.b32.xlu0 %v776, 32
      %v779 = vpop.permute.xlu0 %778
      %v781 = vadd.f32 %v771, %v779
      %v782 = vtanh.pop %v781
      %784 = vrot.lane.b32.xlu0 %v782, 64
      %v785 = vpop.permute.xlu0 %784
      %v787 = vmul.f32 %v769, %v785
      %789 = vrot.lane.b32.xlu0 %v787, 32
      %v790 = vpop.permute.xlu0 %789
      %s792 = scalar_lea.vmem %s386, %s725
      %793 = vst.msk [vmem:[%s792] sm:$0xff] %vm421, %v790
      %s794 = scalar_select %p578, 3, 4
      %s795 = smul.u32 %s794, 8
      %s796 = scalar_lea.vmem [#allocation2], %s795
      %v797 = vld [vmem:[%s796] sm:$0xff]
      %v798 = vsel %vm421, %v790, 0
      %800 = vmatpush.msra.mxu0 0.0
      %801 = vmatpush.msra.mxu0 0.0
      %802 = vmatpush.msra.mxu0 0.0
      %803 = vmatpush.msra.mxu0 0.0
      %804 = vmatpush.msra.mxu0 0.0
      %805 = vmatpush.msra.mxu0 0.0
      %806 = vmatpush.msra.mxu0 0.0
      %807 = vmatpush.msra.mxu0 0.0
      %808 = vmatpush.msra.mxu0 0.0
      %809 = vmatpush.msra.mxu0 0.0
      %810 = vmatpush.msra.mxu0 0.0
      %811 = vmatpush.msra.mxu0 0.0
      %812 = vmatpush.msra.mxu0 %v575
      %813 = vmatpush.msra.mxu0 %v574
      %814 = vmatpush.msra.mxu0 %v573
      %815 = vmatpush.msra.mxu0 %v572
      %816 = vmatmul.f32.gmra.mxu0 %v798
      %v817 = vpop.f32.mrf.mxu0
      %v818 = vadd.f32 0.0, %v817
      %819 = vdwg.mxu0
      %v820 = vadd.f32 %v797, %v818
      %v821 = vxor.u32 %v820, 2147483648
      %v822 = vmul.f32 %v821, 1.442695
      %v823 = vpow.pop %v822
      %v824 = vadd.f32 %v823, 1.0
      %v825 = vrcp.pop %v824
      %v826 = vmul.f32 %v824, %v825
      %v827 = vsub.f32 1.0, %v826
      %v828 = vmul.f32 %v825, %v827
      %v829 = vadd.f32 %v825, %v828
      %vm830 = vweird.f32 %v824
      %vm831 = vweird.f32 %v825
      %vm832 = vmor %vm830, %vm831
      %v833 = vsel %vm832, %v825, %v829
      %v834 = vand.u32 2147483647, %v824
      %vm835 = vcmp.eq.f32.partialorder %v834, 8.507059e+37
      %v836 = vand.u32 %v824, 2147483648
      %v837 = vor.u32 1.1754944e-38, %v836
      %v838 = vsel %vm835, %v837, %v833
      %v839 = vmul.f32 1.0, %v838
      %v840 = vtanh.pop %v820
      %v841 = vmul.f32 %v839, %v781
      %843 = vrot.lane.b32.xlu0 %v840, 64
      %v844 = vpop.permute.xlu0 %843
      %v846 = vmul.f32 %v839, %v844
      %848 = vrot.lane.b32.xlu0 %v846, 32
      %v849 = vpop.permute.xlu0 %848
      %v851 = vadd.f32 %v841, %v849
      %v852 = vtanh.pop %v851
      %854 = vrot.lane.b32.xlu0 %v852, 64
      %v855 = vpop.permute.xlu0 %854
      %v857 = vmul.f32 %v839, %v855
      %859 = vrot.lane.b32.xlu0 %v857, 32
      %v860 = vpop.permute.xlu0 %859
      %s862 = scalar_lea.vmem %s386, %s795
      %863 = vst.msk [vmem:[%s862] sm:$0xff] %vm421, %v860
      %s864 = scalar_select %p578, 4, 3
      %s865 = smul.u32 %s864, 8
      %s866 = scalar_lea.vmem [#allocation2], %s865
      %v867 = vld [vmem:[%s866] sm:$0xff]
      %v868 = vsel %vm421, %v860, 0
      %870 = vmatpush.msra.mxu0 0.0
      %871 = vmatpush.msra.mxu0 0.0
      %872 = vmatpush.msra.mxu0 0.0
      %873 = vmatpush.msra.mxu0 0.0
      %874 = vmatpush.msra.mxu0 0.0
      %875 = vmatpush.msra.mxu0 0.0
      %876 = vmatpush.msra.mxu0 0.0
      %877 = vmatpush.msra.mxu0 0.0
      %878 = vmatpush.msra.mxu0 0.0
      %879 = vmatpush.msra.mxu0 0.0
      %880 = vmatpush.msra.mxu0 0.0
      %881 = vmatpush.msra.mxu0 0.0
      %882 = vmatpush.msra.mxu0 %v575
      %883 = vmatpush.msra.mxu0 %v574
      %884 = vmatpush.msra.mxu0 %v573
      %885 = vmatpush.msra.mxu0 %v572
      %886 = vmatmul.f32.gmra.mxu0 %v868
      %v887 = vpop.f32.mrf.mxu0
      %v888 = vadd.f32 0.0, %v887
      %889 = vdwg.mxu0
      %v890 = vadd.f32 %v867, %v888
      %v891 = vxor.u32 %v890, 2147483648
      %v892 = vmul.f32 %v891, 1.442695
      %v893 = vpow.pop %v892
      %v894 = vadd.f32 %v893, 1.0
      %v895 = vrcp.pop %v894
      %v896 = vmul.f32 %v894, %v895
      %v897 = vsub.f32 1.0, %v896
      %v898 = vmul.f32 %v895, %v897
      %v899 = vadd.f32 %v895, %v898
      %vm900 = vweird.f32 %v894
      %vm901 = vweird.f32 %v895
      %vm902 = vmor %vm900, %vm901
      %v903 = vsel %vm902, %v895, %v899
      %v904 = vand.u32 2147483647, %v894
      %vm905 = vcmp.eq.f32.partialorder %v904, 8.507059e+37
      %v906 = vand.u32 %v894, 2147483648
      %v907 = vor.u32 1.1754944e-38, %v906
      %v908 = vsel %vm905, %v907, %v903
      %v909 = vmul.f32 1.0, %v908
      %v910 = vtanh.pop %v890
      %v911 = vmul.f32 %v909, %v851
      %913 = vrot.lane.b32.xlu0 %v910, 64
      %v914 = vpop.permute.xlu0 %913
      %v916 = vmul.f32 %v909, %v914
      %918 = vrot.lane.b32.xlu0 %v916, 32
      %v919 = vpop.permute.xlu0 %918
      %v921 = vadd.f32 %v911, %v919
      %v922 = vtanh.pop %v921
      %924 = vrot.lane.b32.xlu0 %v922, 64
      %v925 = vpop.permute.xlu0 %924
      %v927 = vmul.f32 %v909, %v925
      %929 = vrot.lane.b32.xlu0 %v927, 32
      %v930 = vpop.permute.xlu0 %929
      %s932 = scalar_lea.vmem %s386, %s865
      %933 = vst.msk [vmem:[%s932] sm:$0xff] %vm421, %v930
      %s934 = scalar_select %p578, 5, 2
      %s935 = smul.u32 %s934, 8
      %s936 = scalar_lea.vmem [#allocation2], %s935
      %v937 = vld [vmem:[%s936] sm:$0xff]
      %v938 = vsel %vm421, %v930, 0
      %940 = vmatpush.msra.mxu0 0.0
      %941 = vmatpush.msra.mxu0 0.0
      %942 = vmatpush.msra.mxu0 0.0
      %943 = vmatpush.msra.mxu0 0.0
      %944 = vmatpush.msra.mxu0 0.0
      %945 = vmatpush.msra.mxu0 0.0
      %946 = vmatpush.msra.mxu0 0.0
      %947 = vmatpush.msra.mxu0 0.0
      %948 = vmatpush.msra.mxu0 0.0
      %949 = vmatpush.msra.mxu0 0.0
      %950 = vmatpush.msra.mxu0 0.0
      %951 = vmatpush.msra.mxu0 0.0
      %952 = vmatpush.msra.mxu0 %v575
      %953 = vmatpush.msra.mxu0 %v574
      %954 = vmatpush.msra.mxu0 %v573
      %955 = vmatpush.msra.mxu0 %v572
      %956 = vmatmul.f32.gmra.mxu0 %v938
      %v957 = vpop.f32.mrf.mxu0
      %v958 = vadd.f32 0.0, %v957
      %959 = vdwg.mxu0
      %v960 = vadd.f32 %v937, %v958
      %v961 = vxor.u32 %v960, 2147483648
      %v962 = vmul.f32 %v961, 1.442695
      %v963 = vpow.pop %v962
      %v964 = vadd.f32 %v963, 1.0
      %v965 = vrcp.pop %v964
      %v966 = vmul.f32 %v964, %v965
      %v967 = vsub.f32 1.0, %v966
      %v968 = vmul.f32 %v965, %v967
      %v969 = vadd.f32 %v965, %v968
      %vm970 = vweird.f32 %v964
      %vm971 = vweird.f32 %v965
      %vm972 = vmor %vm970, %vm971
      %v973 = vsel %vm972, %v965, %v969
      %v974 = vand.u32 2147483647, %v964
      %vm975 = vcmp.eq.f32.partialorder %v974, 8.507059e+37
      %v976 = vand.u32 %v964, 2147483648
      %v977 = vor.u32 1.1754944e-38, %v976
      %v978 = vsel %vm975, %v977, %v973
      %v979 = vmul.f32 1.0, %v978
      %v980 = vtanh.pop %v960
      %v981 = vmul.f32 %v979, %v921
      %983 = vrot.lane.b32.xlu0 %v980, 64
      %v984 = vpop.permute.xlu0 %983
      %v986 = vmul.f32 %v979, %v984
      %988 = vrot.lane.b32.xlu0 %v986, 32
      %v989 = vpop.permute.xlu0 %988
      %v991 = vadd.f32 %v981, %v989
      %v992 = vtanh.pop %v991
      %994 = vrot.lane.b32.xlu0 %v992, 64
      %v995 = vpop.permute.xlu0 %994
      %v997 = vmul.f32 %v979, %v995
      %999 = vrot.lane.b32.xlu0 %v997, 32
      %v1000 = vpop.permute.xlu0 %999
      %s1002 = scalar_lea.vmem %s386, %s935
      %1003 = vst.msk [vmem:[%s1002] sm:$0xff] %vm421, %v1000
      %s1004 = scalar_select %p578, 6, 1
      %s1005 = smul.u32 %s1004, 8
      %s1006 = scalar_lea.vmem [#allocation2], %s1005
      %v1007 = vld [vmem:[%s1006] sm:$0xff]
      %v1008 = vsel %vm421, %v1000, 0
      %1010 = vmatpush.msra.mxu0 0.0
      %1011 = vmatpush.msra.mxu0 0.0
      %1012 = vmatpush.msra.mxu0 0.0
      %1013 = vmatpush.msra.mxu0 0.0
      %1014 = vmatpush.msra.mxu0 0.0
      %1015 = vmatpush.msra.mxu0 0.0
      %1016 = vmatpush.msra.mxu0 0.0
      %1017 = vmatpush.msra.mxu0 0.0
      %1018 = vmatpush.msra.mxu0 0.0
      %1019 = vmatpush.msra.mxu0 0.0
      %1020 = vmatpush.msra.mxu0 0.0
      %1021 = vmatpush.msra.mxu0 0.0
      %1022 = vmatpush.msra.mxu0 %v575
      %1023 = vmatpush.msra.mxu0 %v574
      %1024 = vmatpush.msra.mxu0 %v573
      %1025 = vmatpush.msra.mxu0 %v572
      %1026 = vmatmul.f32.gmra.mxu0 %v1008
      %v1027 = vpop.f32.mrf.mxu0
      %v1028 = vadd.f32 0.0, %v1027
      %1029 = vdwg.mxu0
      %v1030 = vadd.f32 %v1007, %v1028
      %v1031 = vxor.u32 %v1030, 2147483648
      %v1032 = vmul.f32 %v1031, 1.442695
      %v1033 = vpow.pop %v1032
      %v1034 = vadd.f32 %v1033, 1.0
      %v1035 = vrcp.pop %v1034
      %v1036 = vmul.f32 %v1034, %v1035
      %v1037 = vsub.f32 1.0, %v1036
      %v1038 = vmul.f32 %v1035, %v1037
      %v1039 = vadd.f32 %v1035, %v1038
      %vm1040 = vweird.f32 %v1034
      %vm1041 = vweird.f32 %v1035
      %vm1042 = vmor %vm1040, %vm1041
      %v1043 = vsel %vm1042, %v1035, %v1039
      %v1044 = vand.u32 2147483647, %v1034
      %vm1045 = vcmp.eq.f32.partialorder %v1044, 8.507059e+37
      %v1046 = vand.u32 %v1034, 2147483648
      %v1047 = vor.u32 1.1754944e-38, %v1046
      %v1048 = vsel %vm1045, %v1047, %v1043
      %v1049 = vmul.f32 1.0, %v1048
      %v1050 = vtanh.pop %v1030
      %v1051 = vmul.f32 %v1049, %v991
      %1053 = vrot.lane.b32.xlu0 %v1050, 64
      %v1054 = vpop.permute.xlu0 %1053
      %v1056 = vmul.f32 %v1049, %v1054
      %1058 = vrot.lane.b32.xlu0 %v1056, 32
      %v1059 = vpop.permute.xlu0 %1058
      %v1061 = vadd.f32 %v1051, %v1059
      %v1062 = vtanh.pop %v1061
      %1064 = vrot.lane.b32.xlu0 %v1062, 64
      %v1065 = vpop.permute.xlu0 %1064
      %v1067 = vmul.f32 %v1049, %v1065
      %1069 = vrot.lane.b32.xlu0 %v1067, 32
      %v1070 = vpop.permute.xlu0 %1069
      %s1072 = scalar_lea.vmem %s386, %s1005
      %1073 = vst.msk [vmem:[%s1072] sm:$0xff] %vm421, %v1070
      %s1074 = scalar_select %p578, 7, 0
      %s1075 = smul.u32 %s1074, 8
      %s1076 = scalar_lea.vmem [#allocation2], %s1075
      %v1077 = vld [vmem:[%s1076] sm:$0xff]
      %v1078 = vsel %vm421, %v1070, 0
      %1080 = vmatpush.msra.mxu0 0.0
      %1081 = vmatpush.msra.mxu0 0.0
      %1082 = vmatpush.msra.mxu0 0.0
      %1083 = vmatpush.msra.mxu0 0.0
      %1084 = vmatpush.msra.mxu0 0.0
      %1085 = vmatpush.msra.mxu0 0.0
      %1086 = vmatpush.msra.mxu0 0.0
      %1087 = vmatpush.msra.mxu0 0.0
      %1088 = vmatpush.msra.mxu0 0.0
      %1089 = vmatpush.msra.mxu0 0.0
      %1090 = vmatpush.msra.mxu0 0.0
      %1091 = vmatpush.msra.mxu0 0.0
      %1092 = vmatpush.msra.mxu0 %v575
      %1093 = vmatpush.msra.mxu0 %v574
      %1094 = vmatpush.msra.mxu0 %v573
      %1095 = vmatpush.msra.mxu0 %v572
      %1096 = vmatmul.f32.gmra.mxu0 %v1078
      %v1097 = vpop.f32.mrf.mxu0
      %v1098 = vadd.f32 0.0, %v1097
      %1099 = vdwg.mxu0
      %v1100 = vadd.f32 %v1077, %v1098
      %v1101 = vxor.u32 %v1100, 2147483648
      %v1102 = vmul.f32 %v1101, 1.442695
      %v1103 = vpow.pop %v1102
      %v1104 = vadd.f32 %v1103, 1.0
      %v1105 = vrcp.pop %v1104
      %v1106 = vmul.f32 %v1104, %v1105
      %v1107 = vsub.f32 1.0, %v1106
      %v1108 = vmul.f32 %v1105, %v1107
      %v1109 = vadd.f32 %v1105, %v1108
      %vm1110 = vweird.f32 %v1104
      %vm1111 = vweird.f32 %v1105
      %vm1112 = vmor %vm1110, %vm1111
      %v1113 = vsel %vm1112, %v1105, %v1109
      %v1114 = vand.u32 2147483647, %v1104
      %vm1115 = vcmp.eq.f32.partialorder %v1114, 8.507059e+37
      %v1116 = vand.u32 %v1104, 2147483648
      %v1117 = vor.u32 1.1754944e-38, %v1116
      %v1118 = vsel %vm1115, %v1117, %v1113
      %v1119 = vmul.f32 1.0, %v1118
      %v1120 = vtanh.pop %v1100
      %v1121 = vmul.f32 %v1119, %v1061
      %1123 = vrot.lane.b32.xlu0 %v1120, 64
      %v1124 = vpop.permute.xlu0 %1123
      %v1126 = vmul.f32 %v1119, %v1124
      %1128 = vrot.lane.b32.xlu0 %v1126, 32
      %v1129 = vpop.permute.xlu0 %1128
      %v1131 = vadd.f32 %v1121, %v1129
      %v1132 = vtanh.pop %v1131
      %1134 = vrot.lane.b32.xlu0 %v1132, 64
      %v1135 = vpop.permute.xlu0 %1134
      %v1137 = vmul.f32 %v1119, %v1135
      %1139 = vrot.lane.b32.xlu0 %v1137, 32
      %v1140 = vpop.permute.xlu0 %1139
      %s1142 = scalar_lea.vmem %s386, %s1075
      %1143 = vst.msk [vmem:[%s1142] sm:$0xff] %vm421, %v1140
      %1144 = vst.msk [vmem:[%s390] sm:$0xff] %vm421, %v1140
      %1146 = vrot.lane.b32.xlu0 %v1131, 96
      %v1147 = vpop.permute.xlu0 %1146
      %1149 = vst.msk [vmem:[%s394] sm:$0xff] %vm421, %v1147
      %p1150 = scmp.lt.s32.totalorder %s20, 1
      %s1151 = scalar_select %p1150, %s20, 1
      %s1152 = smul.addr %s1151, 8
      %s1153 = smul.addr %s1152, 8
      %s1154 = scalar_lea.vmem %s6, %s1153
      %p1155 = scmp.lt.s32.totalorder %s20, 1
      %s1156 = scalar_select %p1155, %s20, 1
      %s1157 = smul.addr %s1156, 8
      %s1158 = scalar_lea.vmem %s7, %s1157
      %p1159 = scmp.lt.s32.totalorder %s20, 1
      %s1160 = scalar_select %p1159, %s20, 1
      %s1161 = smul.addr %s1160, 8
      %s1162 = scalar_lea.vmem %s8, %s1161
      // Predicated region
      $region45: #{encoder_forward.3} parent=43 // pred_check
        %p1163 = pneg %p189
      $region46: #{encoder_forward.3} parent=43 // pred_check_branch
        %1165 = sbr.rel (%p1163) target = $region48
      $region47: #{encoder_forward.3} parent=43 // pred_region
        _
      $region48: #{encoder_forward.3} parent=43 // pred_fallthru
        _
      // Predicated region
      $region49: #{encoder_forward.3} parent=43 // pred_check
        %p1166 = pneg %p215
      $region50: #{encoder_forward.3} parent=43 // pred_check_branch
        %1168 = sbr.rel (%p1166) target = $region52
      $region51: #{encoder_forward.3} parent=43 // pred_region
        _
      $region52: #{encoder_forward.3} parent=43 // pred_fallthru
        _
      // Predicated region
      $region53: #{encoder_forward.3} parent=43 // pred_check
        %p1169 = pneg %p241
      $region54: #{encoder_forward.3} parent=43 // pred_check_branch
        %1171 = sbr.rel (%p1169) target = $region56
      $region55: #{encoder_forward.3} parent=43 // pred_region
        _
      $region56: #{encoder_forward.3} parent=43 // pred_fallthru
        _
    $region44: #{encoder_forward.3} parent=5 // pred_fallthru
      _
    %p1172 = scmp.le.s32.totalorder 2, %s15
    // Predicated region
    $region57: #{encoder_forward.3} parent=5 // pred_check
      %p1173 = pneg %p1172
    $region58: #{encoder_forward.3} parent=5 // pred_check_branch
      %1175 = sbr.rel (%p1173) target = $region60
    $region59: #{encoder_forward.3} parent=5 // pred_region
      %s1176 = ssub.s32 %s15, 2
      // Predicated region
      $region61: #{encoder_forward.3} parent=59 // pred_check
        %p1177 = pneg %p195
      $region62: #{encoder_forward.3} parent=59 // pred_check_branch
        %1179 = sbr.rel (%p1177) target = $region64
      $region63: #{encoder_forward.3} parent=59 // pred_region
        %p1180 = scmp.lt.s32.totalorder %s21, 1
        %s1181 = scalar_select %p1180, %s21, 1
        %s1182 = smul.addr %s1181, 8
        %s1183 = smul.addr %s1182, 8
        %s1184 = scalar_lea.vmem %s6, %s1183
      $region64: #{encoder_forward.3} parent=59 // pred_fallthru
        _
      // Predicated region
      $region65: #{encoder_forward.3} parent=59 // pred_check
        %p1185 = pneg %p221
      $region66: #{encoder_forward.3} parent=59 // pred_check_branch
        %1187 = sbr.rel (%p1185) target = $region68
      $region67: #{encoder_forward.3} parent=59 // pred_region
        %p1188 = scmp.lt.s32.totalorder %s21, 1
        %s1189 = scalar_select %p1188, %s21, 1
        %s1190 = smul.addr %s1189, 8
        %s1191 = scalar_lea.vmem %s7, %s1190
      $region68: #{encoder_forward.3} parent=59 // pred_fallthru
        _
      // Predicated region
      $region69: #{encoder_forward.3} parent=59 // pred_check
        %p1192 = pneg %p247
      $region70: #{encoder_forward.3} parent=59 // pred_check_branch
        %1194 = sbr.rel (%p1192) target = $region72
      $region71: #{encoder_forward.3} parent=59 // pred_region
        %p1195 = scmp.lt.s32.totalorder %s21, 1
        %s1196 = scalar_select %p1195, %s21, 1
        %s1197 = smul.addr %s1196, 8
        %s1198 = scalar_lea.vmem %s8, %s1197
      $region72: #{encoder_forward.3} parent=59 // pred_fallthru
        _
    $region60: #{encoder_forward.3} parent=5 // pred_fallthru
      _
  $region6: #{encoder_forward.3} parent=0 // loop_footer
    %s19 = sadd.s32 1, %s15
  $region7: #{encoder_forward.3} parent=0 // loop_footer_branch
    %14 = sbr.rel target = $region3
  $region8: #{encoder_forward.3} parent=0 // loop_exit
    _

</llo_original>
